<compile_context>
chip_gen: v6e
topology: v6e:2x2x1
jax: 0.10.0
libtpu: 0.0.40
codegen_flags: <defaults>
</compile_context>

<pallas_src>
import functools

import jax
import jax.numpy as jnp
from jax.experimental import pallas as pl
from jax.experimental.pallas import tpu as pltpu


def _round_up(x, m):
    return ((x + m - 1) // m) * m


# --------------------------- fused GEMM kernel ------------------------------

def _gemm_bias_act_kernel(a_ref, w_ref, b_ref, o_ref, *, apply_relu):
    # bf16 operands for the MXU (cast in-kernel), f32 accumulation.
    a = a_ref[...].astype(jnp.bfloat16)
    w = w_ref[...].astype(jnp.bfloat16)
    acc = jnp.dot(a, w, preferred_element_type=jnp.float32)
    acc = acc + b_ref[...]                              # bias: (1, N) broadcast
    if apply_relu:
        acc = jnp.maximum(acc, 0.0)
    o_ref[...] = acc.astype(o_ref.dtype)


def gemm_bias_act(a, w, bias, *, apply_relu, tile_m=512):
    """Fused (M,K)@(K,N) + bias (+ ReLU).  M is tiled; K and N stay whole."""
    m, k = a.shape
    k2, n = w.shape
    assert k == k2, (k, k2)
    tm = min(tile_m, _round_up(m, 8))
    mp = _round_up(m, tm)
    if mp != m:                                         # pad M to the tile grid
        a = jnp.pad(a, ((0, mp - m), (0, 0)))
    out = pl.pallas_call(
        functools.partial(_gemm_bias_act_kernel, apply_relu=apply_relu),
        out_shape=jax.ShapeDtypeStruct((mp, n), jnp.float32),
        grid_spec=pltpu.PrefetchScalarGridSpec(
            num_scalar_prefetch=0,
            grid=(mp // tm,),
            in_specs=[pl.BlockSpec((tm, k), lambda i: (i, 0)),
                      pl.BlockSpec((k, n), lambda i: (0, 0)),
                      pl.BlockSpec((1, n), lambda i: (0, 0))],
            out_specs=pl.BlockSpec((tm, n), lambda i: (i, 0)),
        ),
        compiler_params=pltpu.CompilerParams(
            dimension_semantics=("parallel",)),
    )(a.astype(jnp.float32), w.astype(jnp.float32),
      bias.reshape(1, n).astype(jnp.float32))
    return out[:m] if mp != m else out


# ----------------------------- conv layer -----------------------------------

def conv4x4_s2_relu(x_nhwc, w_hwio, bias, *, apply_relu=True):
    """Conv2d(kernel=4, stride=2, pad=0) + bias + ReLU, as one fused Pallas GEMM."""
    b, h, w, cin = x_nhwc.shape
    cout = w_hwio.shape[-1]
    ho = (h - 4) // 2 + 1
    wo = (w - 4) // 2 + 1
    # im2col (XLA glue): 16 strided views concatenated along channels in
    # (kh, kw, cin) order, matching the HWIO weight flattening below.
    # TODO(synk): for very large batches, fold patch formation into the kernel
    # to avoid materializing the 16x-expanded patch tensor in HBM.
    taps = []
    for kh in range(4):
        for kw in range(4):
            taps.append(x_nhwc[:, kh:kh + 2 * (ho - 1) + 1:2,
                               kw:kw + 2 * (wo - 1) + 1:2, :])
    patches = jnp.concatenate(taps, axis=-1).reshape(b * ho * wo, 16 * cin)
    wmat = w_hwio.reshape(16 * cin, cout)
    out = gemm_bias_act(patches, wmat, bias, apply_relu=apply_relu)
    return out.reshape(b, ho, wo, cout)


# ------------------------------ forward -------------------------------------

def visual_encoder_forward(observation, params, *, embedding_size=1024):
    """observation: (B, 3, H, W) float32 -> (B, embedding_size)."""
    x = jnp.transpose(observation.astype(jnp.float32), (0, 2, 3, 1))  # NCHW->NHWC
    x = conv4x4_s2_relu(x, params["w1"], params["b1"])
    x = conv4x4_s2_relu(x, params["w2"], params["b2"])
    x = conv4x4_s2_relu(x, params["w3"], params["b3"])
    x = conv4x4_s2_relu(x, params["w4"], params["b4"])
    b = x.shape[0]
    # torch's hidden.reshape(-1, 1024) flattens NCHW order (c, h, w):
    hidden = jnp.transpose(x, (0, 3, 1, 2)).reshape(b, -1)
    if embedding_size != 1024:
        # fc = nn.Linear(1024, embedding_size); no activation afterwards.
        hidden = gemm_bias_act(hidden, params["fcw"], params["fcb"],
                               apply_relu=False)
    # embedding_size == 1024 -> fc = nn.Identity()
    return hidden


# ---------------------------- parameter creation ----------------------------

def init_params(key, embedding_size=1024):
    keys = iter(jax.random.split(key, 16))

    def conv_p(cin, cout):
        fan_in = 16 * cin
        scale = (2.0 / fan_in) ** 0.5
        w = scale * jax.random.normal(next(keys), (4, 4, cin, cout), jnp.float32)
        b = 0.01 * jax.random.normal(next(keys), (cout,), jnp.float32)
        return w, b

    w1, b1 = conv_p(3, 32)
    w2, b2 = conv_p(32, 64)
    w3, b3 = conv_p(64, 128)
    w4, b4 = conv_p(128, 256)
    params = {"w1": w1, "b1": b1, "w2": w2, "b2": b2,
              "w3": w3, "b3": b3, "w4": w4, "b4": b4}
    if embedding_size != 1024:
        scale = (1.0 / 1024.0) ** 0.5
        params["fcw"] = scale * jax.random.normal(
            next(keys), (1024, embedding_size), jnp.float32)
        params["fcb"] = 0.01 * jax.random.normal(
            next(keys), (embedding_size,), jnp.float32)
    return params


# ----------------------------------- main ------------------------------------

if __name__ == "__main__":
    # 64x64x3 input is what the module requires for reshape(-1, 1024) to hold.
    batch = 2
    embedding_size = 1024          # default -> fc = Identity

    key = jax.random.PRNGKey(0)
    pkey, okey = jax.random.split(key)
    params = init_params(pkey, embedding_size)
    obs = jax.random.normal(okey, (batch, 3, 64, 64), jnp.float32)

    fwd = jax.jit(functools.partial(visual_encoder_forward,
                                    embedding_size=embedding_size))
    out = fwd(obs, params)
    jax.block_until_ready(out)

    assert out.shape == (batch, embedding_size), out.shape
    assert bool(jnp.all(jnp.isfinite(out)))
    print("KERNEL_OK")
</pallas_src>

<mosaic_0001>
module attributes {stable_mosaic.version = 11 : i64} {
  func.func @_gemm_bias_act_kernel(%arg0: i32, %arg1: memref<512x48xf32, #tpu.memory_space<vmem>>, %arg2: memref<48x32xf32, #tpu.memory_space<vmem>>, %arg3: memref<1x32xf32, #tpu.memory_space<vmem>>, %arg4: memref<512x32xf32, #tpu.memory_space<vmem>>) attributes {dimension_semantics = [#tpu.dimension_semantics<parallel>], iteration_bounds = array<i64: 4>, scalar_prefetch = 0 : i64, scratch_operands = 0 : i64, tpu.core_type = #tpu.core_type<tc>, window_params = [{transform_indices = @transform_0, window_bounds = array<i64: 512, 48>}, {pipeline_mode = #tpu.pipeline_mode<synchronous>, transform_indices = @transform_1, window_bounds = array<i64: 48, 32>}, {pipeline_mode = #tpu.pipeline_mode<synchronous>, transform_indices = @transform_2, window_bounds = array<i64: 1, 32>}, {transform_indices = @transform_3, window_bounds = array<i64: 512, 32>}]} {
    %c0 = arith.constant 0 : index
    %c0_0 = arith.constant 0 : index
    %0 = vector.load %arg1[%c0, %c0_0] : memref<512x48xf32, #tpu.memory_space<vmem>>, vector<512x48xf32>
    %1 = arith.truncf %0 : vector<512x48xf32> to vector<512x48xbf16>
    %c0_1 = arith.constant 0 : index
    %c0_2 = arith.constant 0 : index
    %2 = vector.load %arg2[%c0_1, %c0_2] : memref<48x32xf32, #tpu.memory_space<vmem>>, vector<48x32xf32>
    %3 = arith.truncf %2 : vector<48x32xf32> to vector<48x32xbf16>
    %cst = arith.constant dense<0.000000e+00> : vector<512x32xf32>
    %4 = tpu.matmul %1, %3, %cst {dimension_numbers = #tpu.dot_dimension_numbers<[1], [0], [0], [1], [0, 0, 1, 1], [], []>} : vector<512x48xbf16>, vector<48x32xbf16>, vector<512x32xf32> -> vector<512x32xf32>
    %c0_3 = arith.constant 0 : index
    %c0_4 = arith.constant 0 : index
    %5 = vector.load %arg3[%c0_3, %c0_4] : memref<1x32xf32, #tpu.memory_space<vmem>>, vector<1x32xf32>
    %6 = vector.broadcast %5 : vector<1x32xf32> to vector<512x32xf32>
    %7 = arith.addf %4, %6 : vector<512x32xf32>
    %cst_5 = arith.constant 0.000000e+00 : f32
    %8 = vector.broadcast %cst_5 : f32 to vector<512x32xf32>
    %9 = arith.maximumf %7, %8 : vector<512x32xf32>
    %c0_6 = arith.constant 0 : index
    %c0_7 = arith.constant 0 : index
    %10 = vector.load %arg4[%c0_6, %c0_7] : memref<512x32xf32, #tpu.memory_space<vmem>>, vector<512x32xf32>
    tpu.vector_store %arg4[%c0_6, %c0_7], %9 {strides = array<i32>} : memref<512x32xf32, #tpu.memory_space<vmem>>, vector<512x32xf32>,
    return
  }
  func.func @transform_0(%arg0: i32) -> (i32, i32) {
    %c0_i32 = arith.constant 0 : i32
    %c0_i32_0 = arith.constant 0 : i32
    return %arg0, %c0_i32 : i32, i32
  }
  func.func @transform_1(%arg0: i32) -> (i32, i32) {
    %c0_i32 = arith.constant 0 : i32
    %c0_i32_0 = arith.constant 0 : i32
    %c0_i32_1 = arith.constant 0 : i32
    return %c0_i32, %c0_i32_0 : i32, i32
  }
  func.func @transform_2(%arg0: i32) -> (i32, i32) {
    %c0_i32 = arith.constant 0 : i32
    %c0_i32_0 = arith.constant 0 : i32
    %c0_i32_1 = arith.constant 0 : i32
    return %c0_i32, %c0_i32_0 : i32, i32
  }
  func.func @transform_3(%arg0: i32) -> (i32, i32) {
    %c0_i32 = arith.constant 0 : i32
    %c0_i32_0 = arith.constant 0 : i32
    return %arg0, %c0_i32 : i32, i32
  }
}

module attributes {stable_mosaic.version = 11 : i64} {
  func.func @_gemm_bias_act_kernel(%arg0: i32, %arg1: memref<392x512xf32, #tpu.memory_space<vmem>>, %arg2: memref<512x64xf32, #tpu.memory_space<vmem>>, %arg3: memref<1x64xf32, #tpu.memory_space<vmem>>, %arg4: memref<392x64xf32, #tpu.memory_space<vmem>>) attributes {dimension_semantics = [#tpu.dimension_semantics<parallel>], iteration_bounds = array<i64: 1>, scalar_prefetch = 0 : i64, scratch_operands = 0 : i64, tpu.core_type = #tpu.core_type<tc>, window_params = [{transform_indices = @transform_0, window_bounds = array<i64: 392, 512>}, {pipeline_mode = #tpu.pipeline_mode<synchronous>, transform_indices = @transform_1, window_bounds = array<i64: 512, 64>}, {pipeline_mode = #tpu.pipeline_mode<synchronous>, transform_indices = @transform_2, window_bounds = array<i64: 1, 64>}, {transform_indices = @transform_3, window_bounds = array<i64: 392, 64>}]} {
    %c0 = arith.constant 0 : index
    %c0_0 = arith.constant 0 : index
    %0 = vector.load %arg1[%c0, %c0_0] : memref<392x512xf32, #tpu.memory_space<vmem>>, vector<392x512xf32>
    %1 = arith.truncf %0 : vector<392x512xf32> to vector<392x512xbf16>
    %c0_1 = arith.constant 0 : index
    %c0_2 = arith.constant 0 : index
    %2 = vector.load %arg2[%c0_1, %c0_2] : memref<512x64xf32, #tpu.memory_space<vmem>>, vector<512x64xf32>
    %3 = arith.truncf %2 : vector<512x64xf32> to vector<512x64xbf16>
    %cst = arith.constant dense<0.000000e+00> : vector<392x64xf32>
    %4 = tpu.matmul %1, %3, %cst {dimension_numbers = #tpu.dot_dimension_numbers<[1], [0], [0], [1], [0, 0, 1, 1], [], []>} : vector<392x512xbf16>, vector<512x64xbf16>, vector<392x64xf32> -> vector<392x64xf32>
    %c0_3 = arith.constant 0 : index
    %c0_4 = arith.constant 0 : index
    %5 = vector.load %arg3[%c0_3, %c0_4] : memref<1x64xf32, #tpu.memory_space<vmem>>, vector<1x64xf32>
    %6 = vector.broadcast %5 : vector<1x64xf32> to vector<392x64xf32>
    %7 = arith.addf %4, %6 : vector<392x64xf32>
    %cst_5 = arith.constant 0.000000e+00 : f32
    %8 = vector.broadcast %cst_5 : f32 to vector<392x64xf32>
    %9 = arith.maximumf %7, %8 : vector<392x64xf32>
    %c0_6 = arith.constant 0 : index
    %c0_7 = arith.constant 0 : index
    %10 = vector.load %arg4[%c0_6, %c0_7] : memref<392x64xf32, #tpu.memory_space<vmem>>, vector<392x64xf32>
    tpu.vector_store %arg4[%c0_6, %c0_7], %9 {strides = array<i32>} : memref<392x64xf32, #tpu.memory_space<vmem>>, vector<392x64xf32>,
    return
  }
  func.func @transform_0(%arg0: i32) -> (i32, i32) {
    %c0_i32 = arith.constant 0 : i32
    %c0_i32_0 = arith.constant 0 : i32
    return %arg0, %c0_i32 : i32, i32
  }
  func.func @transform_1(%arg0: i32) -> (i32, i32) {
    %c0_i32 = arith.constant 0 : i32
    %c0_i32_0 = arith.constant 0 : i32
    %c0_i32_1 = arith.constant 0 : i32
    return %c0_i32, %c0_i32_0 : i32, i32
  }
  func.func @transform_2(%arg0: i32) -> (i32, i32) {
    %c0_i32 = arith.constant 0 : i32
    %c0_i32_0 = arith.constant 0 : i32
    %c0_i32_1 = arith.constant 0 : i32
    return %c0_i32, %c0_i32_0 : i32, i32
  }
  func.func @transform_3(%arg0: i32) -> (i32, i32) {
    %c0_i32 = arith.constant 0 : i32
    %c0_i32_0 = arith.constant 0 : i32
    return %arg0, %c0_i32 : i32, i32
  }
}

module attributes {stable_mosaic.version = 11 : i64} {
  func.func @_gemm_bias_act_kernel(%arg0: i32, %arg1: memref<72x1024xf32, #tpu.memory_space<vmem>>, %arg2: memref<1024x128xf32, #tpu.memory_space<vmem>>, %arg3: memref<1x128xf32, #tpu.memory_space<vmem>>, %arg4: memref<72x128xf32, #tpu.memory_space<vmem>>) attributes {dimension_semantics = [#tpu.dimension_semantics<parallel>], iteration_bounds = array<i64: 1>, scalar_prefetch = 0 : i64, scratch_operands = 0 : i64, tpu.core_type = #tpu.core_type<tc>, window_params = [{transform_indices = @transform_0, window_bounds = array<i64: 72, 1024>}, {pipeline_mode = #tpu.pipeline_mode<synchronous>, transform_indices = @transform_1, window_bounds = array<i64: 1024, 128>}, {pipeline_mode = #tpu.pipeline_mode<synchronous>, transform_indices = @transform_2, window_bounds = array<i64: 1, 128>}, {transform_indices = @transform_3, window_bounds = array<i64: 72, 128>}]} {
    %c0 = arith.constant 0 : index
    %c0_0 = arith.constant 0 : index
    %0 = vector.load %arg1[%c0, %c0_0] : memref<72x1024xf32, #tpu.memory_space<vmem>>, vector<72x1024xf32>
    %1 = arith.truncf %0 : vector<72x1024xf32> to vector<72x1024xbf16>
    %c0_1 = arith.constant 0 : index
    %c0_2 = arith.constant 0 : index
    %2 = vector.load %arg2[%c0_1, %c0_2] : memref<1024x128xf32, #tpu.memory_space<vmem>>, vector<1024x128xf32>
    %3 = arith.truncf %2 : vector<1024x128xf32> to vector<1024x128xbf16>
    %cst = arith.constant dense<0.000000e+00> : vector<72x128xf32>
    %4 = tpu.matmul %1, %3, %cst {dimension_numbers = #tpu.dot_dimension_numbers<[1], [0], [0], [1], [0, 0, 1, 1], [], []>} : vector<72x1024xbf16>, vector<1024x128xbf16>, vector<72x128xf32> -> vector<72x128xf32>
    %c0_3 = arith.constant 0 : index
    %c0_4 = arith.constant 0 : index
    %5 = vector.load %arg3[%c0_3, %c0_4] : memref<1x128xf32, #tpu.memory_space<vmem>>, vector<1x128xf32>
    %6 = vector.broadcast %5 : vector<1x128xf32> to vector<72x128xf32>
    %7 = arith.addf %4, %6 : vector<72x128xf32>
    %cst_5 = arith.constant 0.000000e+00 : f32
    %8 = vector.broadcast %cst_5 : f32 to vector<72x128xf32>
    %9 = arith.maximumf %7, %8 : vector<72x128xf32>
    %c0_6 = arith.constant 0 : index
    %c0_7 = arith.constant 0 : index
    %10 = vector.load %arg4[%c0_6, %c0_7] : memref<72x128xf32, #tpu.memory_space<vmem>>, vector<72x128xf32>
    tpu.vector_store %arg4[%c0_6, %c0_7], %9 {strides = array<i32>} : memref<72x128xf32, #tpu.memory_space<vmem>>, vector<72x128xf32>,
    return
  }
  func.func @transform_0(%arg0: i32) -> (i32, i32) {
    %c0_i32 = arith.constant 0 : i32
    %c0_i32_0 = arith.constant 0 : i32
    return %arg0, %c0_i32 : i32, i32
  }
  func.func @transform_1(%arg0: i32) -> (i32, i32) {
    %c0_i32 = arith.constant 0 : i32
    %c0_i32_0 = arith.constant 0 : i32
    %c0_i32_1 = arith.constant 0 : i32
    return %c0_i32, %c0_i32_0 : i32, i32
  }
  func.func @transform_2(%arg0: i32) -> (i32, i32) {
    %c0_i32 = arith.constant 0 : i32
    %c0_i32_0 = arith.constant 0 : i32
    %c0_i32_1 = arith.constant 0 : i32
    return %c0_i32, %c0_i32_0 : i32, i32
  }
  func.func @transform_3(%arg0: i32) -> (i32, i32) {
    %c0_i32 = arith.constant 0 : i32
    %c0_i32_0 = arith.constant 0 : i32
    return %arg0, %c0_i32 : i32, i32
  }
}

module attributes {stable_mosaic.version = 11 : i64} {
  func.func @_gemm_bias_act_kernel(%arg0: i32, %arg1: memref<8x2048xf32, #tpu.memory_space<vmem>>, %arg2: memref<2048x256xf32, #tpu.memory_space<vmem>>, %arg3: memref<1x256xf32, #tpu.memory_space<vmem>>, %arg4: memref<8x256xf32, #tpu.memory_space<vmem>>) attributes {dimension_semantics = [#tpu.dimension_semantics<parallel>], iteration_bounds = array<i64: 1>, scalar_prefetch = 0 : i64, scratch_operands = 0 : i64, tpu.core_type = #tpu.core_type<tc>, window_params = [{transform_indices = @transform_0, window_bounds = array<i64: 8, 2048>}, {pipeline_mode = #tpu.pipeline_mode<synchronous>, transform_indices = @transform_1, window_bounds = array<i64: 2048, 256>}, {pipeline_mode = #tpu.pipeline_mode<synchronous>, transform_indices = @transform_2, window_bounds = array<i64: 1, 256>}, {transform_indices = @transform_3, window_bounds = array<i64: 8, 256>}]} {
    %c0 = arith.constant 0 : index
    %c0_0 = arith.constant 0 : index
    %0 = vector.load %arg1[%c0, %c0_0] : memref<8x2048xf32, #tpu.memory_space<vmem>>, vector<8x2048xf32>
    %1 = arith.truncf %0 : vector<8x2048xf32> to vector<8x2048xbf16>
    %c0_1 = arith.constant 0 : index
    %c0_2 = arith.constant 0 : index
    %2 = vector.load %arg2[%c0_1, %c0_2] : memref<2048x256xf32, #tpu.memory_space<vmem>>, vector<2048x256xf32>
    %3 = arith.truncf %2 : vector<2048x256xf32> to vector<2048x256xbf16>
    %cst = arith.constant dense<0.000000e+00> : vector<8x256xf32>
    %4 = tpu.matmul %1, %3, %cst {dimension_numbers = #tpu.dot_dimension_numbers<[1], [0], [0], [1], [0, 0, 1, 1], [], []>} : vector<8x2048xbf16>, vector<2048x256xbf16>, vector<8x256xf32> -> vector<8x256xf32>
    %c0_3 = arith.constant 0 : index
    %c0_4 = arith.constant 0 : index
    %5 = vector.load %arg3[%c0_3, %c0_4] : memref<1x256xf32, #tpu.memory_space<vmem>>, vector<1x256xf32>
    %6 = vector.broadcast %5 : vector<1x256xf32> to vector<8x256xf32>
    %7 = arith.addf %4, %6 : vector<8x256xf32>
    %cst_5 = arith.constant 0.000000e+00 : f32
    %8 = vector.broadcast %cst_5 : f32 to vector<8x256xf32>
    %9 = arith.maximumf %7, %8 : vector<8x256xf32>
    %c0_6 = arith.constant 0 : index
    %c0_7 = arith.constant 0 : index
    %10 = vector.load %arg4[%c0_6, %c0_7] : memref<8x256xf32, #tpu.memory_space<vmem>>, vector<8x256xf32>
    tpu.vector_store %arg4[%c0_6, %c0_7], %9 {strides = array<i32>} : memref<8x256xf32, #tpu.memory_space<vmem>>, vector<8x256xf32>,
    return
  }
  func.func @transform_0(%arg0: i32) -> (i32, i32) {
    %c0_i32 = arith.constant 0 : i32
    %c0_i32_0 = arith.constant 0 : i32
    return %arg0, %c0_i32 : i32, i32
  }
  func.func @transform_1(%arg0: i32) -> (i32, i32) {
    %c0_i32 = arith.constant 0 : i32
    %c0_i32_0 = arith.constant 0 : i32
    %c0_i32_1 = arith.constant 0 : i32
    return %c0_i32, %c0_i32_0 : i32, i32
  }
  func.func @transform_2(%arg0: i32) -> (i32, i32) {
    %c0_i32 = arith.constant 0 : i32
    %c0_i32_0 = arith.constant 0 : i32
    %c0_i32_1 = arith.constant 0 : i32
    return %c0_i32, %c0_i32_0 : i32, i32
  }
  func.func @transform_3(%arg0: i32) -> (i32, i32) {
    %c0_i32 = arith.constant 0 : i32
    %c0_i32_0 = arith.constant 0 : i32
    return %arg0, %c0_i32 : i32, i32
  }
}

</mosaic_0001>

<llo_original>
// kernel: visual_encoder_forward.4
$region0: #{visual_encoder_forward.4}
  #allocation0 [shape = 'u32[]', space=smem, size = 0x4, offset = 0x4, fixed_abs, tag = 'smem constant byte address 0x4 - core index']
  #allocation1 [shape = 'u32[144,128]{1,0:T(1,128)}', space=vmem, size = 0x12000, scoped, tag = 'internal scratch']
  %s0 = inlined_call_operand.vmem [shape: f32[2048,48], index: 0, kind: input, shape index: {}]
  %s1 = inlined_call_operand.vmem [shape: f32[48,32], index: 1, kind: input, shape index: {}]
  %s2 = inlined_call_operand.vmem [shape: f32[1,32], index: 2, kind: input, shape index: {}]
  %s3 = inlined_call_operand.vmem [shape: f32[2048,32], index: 3, kind: output, shape index: {}]
  %s4 = sld [smem:[#allocation0]]
  $region45: #{visual_encoder_forward.4} parent=0
    _
  %s6 = ssub.s32 1, %s4
  %s7 = scalar_select 0, %s6, %s4
  loop: start=0, step=1, limit=6
  $region2: #{visual_encoder_forward.4} parent=0 // loop_pre_header
    _
  $region3: #{visual_encoder_forward.4} parent=0 // loop_header
    %s9 = sphi 0, %s13
    %p10 = scmp.ge.s32.totalorder %s9, 6
    %s19 = sphi 0, %s21
    %s22 = sphi 0, %s19
    %s23 = sphi 0, %s22
    %s39 = sphi 0, %s23
    %s43 = sphi 0, %s43
    %s45 = sphi 0, %s43
    %s46 = sphi 0, %s45
    %s60 = sphi 0, %s46
    %s64 = sphi 0, %s64
    %s66 = sphi 0, %s64
    %s67 = sphi 0, %s66
    %s81 = sphi 0, %s67
    %s87 = sphi 0, %s89
    %s90 = sphi 0, %s87
    %s91 = sphi 0, %s90
    %s107 = sphi 0, %s91
  $region4: #{visual_encoder_forward.4} parent=0 // loop_header_branch
    %12 = sbr.rel (%p10) target = $region8
  $region5: #{visual_encoder_forward.4} parent=0 // loop_body
    %s14 = ssub.s32 %s9, 1
    %s15 = ssub.s32 %s9, 2
    %s16 = sadd.s32 %s9, 1
    %s17 = ssub.s32 %s9, %s16
    %p18 = scmp.eq.s32.totalorder %s17, 0
    %s20 = sadd.s32 %s19, 1
    %s21 = scalar_select %p18, %s19, %s20
    %p24 = pneg %p18
    %p25 = scmp.eq.s32.totalorder %s9, 3
    %p26 = por %p24, %p25
    %p27 = scmp.ne.s32.totalorder %s19, %s22
    %p28 = scmp.eq.s32.totalorder %s9, 0
    %p29 = por %p27, %p28
    %p30 = scmp.ne.s32.totalorder %s19, %s22
    %p31 = scmp.eq.s32.totalorder %s14, 3
    %p32 = por %p30, %p31
    %p33 = scmp.ne.s32.totalorder %s22, %s23
    %p34 = scmp.eq.s32.totalorder %s14, 0
    %p35 = por %p33, %p34
    %p36 = scmp.ne.s32.totalorder %s22, %s23
    %p37 = scmp.eq.s32.totalorder %s15, 3
    %p38 = por %p36, %p37
    %p40 = scmp.ne.s32.totalorder %s23, %s39
    %p41 = scmp.eq.s32.totalorder %s15, 0
    %p42 = por %p40, %p41
    %s44 = sadd.s32 %s43, 1
    %p47 = scmp.eq.s32.totalorder %s9, 3
    %p48 = scmp.ne.s32.totalorder %s43, %s45
    %p49 = scmp.eq.s32.totalorder %s9, 0
    %p50 = por %p48, %p49
    %p51 = scmp.ne.s32.totalorder %s43, %s45
    %p52 = scmp.eq.s32.totalorder %s14, 3
    %p53 = por %p51, %p52
    %p54 = scmp.ne.s32.totalorder %s45, %s46
    %p55 = scmp.eq.s32.totalorder %s14, 0
    %p56 = por %p54, %p55
    %p57 = scmp.ne.s32.totalorder %s45, %s46
    %p58 = scmp.eq.s32.totalorder %s15, 3
    %p59 = por %p57, %p58
    %p61 = scmp.ne.s32.totalorder %s46, %s60
    %p62 = scmp.eq.s32.totalorder %s15, 0
    %p63 = por %p61, %p62
    %s65 = sadd.s32 %s64, 1
    %p68 = scmp.eq.s32.totalorder %s9, 3
    %p69 = scmp.ne.s32.totalorder %s64, %s66
    %p70 = scmp.eq.s32.totalorder %s9, 0
    %p71 = por %p69, %p70
    %p72 = scmp.ne.s32.totalorder %s64, %s66
    %p73 = scmp.eq.s32.totalorder %s14, 3
    %p74 = por %p72, %p73
    %p75 = scmp.ne.s32.totalorder %s66, %s67
    %p76 = scmp.eq.s32.totalorder %s14, 0
    %p77 = por %p75, %p76
    %p78 = scmp.ne.s32.totalorder %s66, %s67
    %p79 = scmp.eq.s32.totalorder %s15, 3
    %p80 = por %p78, %p79
    %p82 = scmp.ne.s32.totalorder %s67, %s81
    %p83 = scmp.eq.s32.totalorder %s15, 0
    %p84 = por %p82, %p83
    %s85 = ssub.s32 %s9, %s16
    %p86 = scmp.eq.s32.totalorder %s85, 0
    %s88 = sadd.s32 %s87, 1
    %s89 = scalar_select %p86, %s87, %s88
    %p92 = pneg %p86
    %p93 = scmp.eq.s32.totalorder %s9, 3
    %p94 = por %p92, %p93
    %p95 = scmp.ne.s32.totalorder %s87, %s90
    %p96 = scmp.eq.s32.totalorder %s9, 0
    %p97 = por %p95, %p96
    %p98 = scmp.ne.s32.totalorder %s87, %s90
    %p99 = scmp.eq.s32.totalorder %s14, 3
    %p100 = por %p98, %p99
    %p101 = scmp.ne.s32.totalorder %s90, %s91
    %p102 = scmp.eq.s32.totalorder %s14, 0
    %p103 = por %p101, %p102
    %p104 = scmp.ne.s32.totalorder %s90, %s91
    %p105 = scmp.eq.s32.totalorder %s15, 3
    %p106 = por %p104, %p105
    %p108 = scmp.ne.s32.totalorder %s91, %s107
    %p109 = scmp.eq.s32.totalorder %s15, 0
    %p110 = por %p108, %p109
    %p111 = scmp.le.s32.totalorder 1, %s9
    %p112 = scmp.lt.s32.totalorder %s9, 5
    %p113 = pnand %p111, %p112
    %p114 = pneg %p113
    // Predicated region
    $region9: #{visual_encoder_forward.4} parent=5 // pred_check
      _
    $region10: #{visual_encoder_forward.4} parent=5 // pred_check_branch
      %116 = sbr.rel (%p113) target = $region12
    $region11: #{visual_encoder_forward.4} parent=5 // pred_region
      %s117 = ssub.s32 %s9, 1
      // Predicated region
      $region13: #{visual_encoder_forward.4} parent=11 // pred_check
        %p118 = pneg %p56
      $region14: #{visual_encoder_forward.4} parent=11 // pred_check_branch
        %120 = sbr.rel (%p118) target = $region16
      $region15: #{visual_encoder_forward.4} parent=11 // pred_region
        _
      $region16: #{visual_encoder_forward.4} parent=11 // pred_fallthru
        _
      // Predicated region
      $region17: #{visual_encoder_forward.4} parent=11 // pred_check
        %p121 = pneg %p77
      $region18: #{visual_encoder_forward.4} parent=11 // pred_check_branch
        %123 = sbr.rel (%p121) target = $region20
      $region19: #{visual_encoder_forward.4} parent=11 // pred_region
        _
      $region20: #{visual_encoder_forward.4} parent=11 // pred_fallthru
        _
    $region12: #{visual_encoder_forward.4} parent=5 // pred_fallthru
      _
    %p124 = scmp.lt.s32.totalorder %s9, 4
    // Predicated region
    $region21: #{visual_encoder_forward.4} parent=5 // pred_check
      %p125 = pneg %p124
    $region22: #{visual_encoder_forward.4} parent=5 // pred_check_branch
      %127 = sbr.rel (%p125) target = $region24
    $region23: #{visual_encoder_forward.4} parent=5 // pred_region
      // Predicated region
      $region25: #{visual_encoder_forward.4} parent=23 // pred_check
        %p128 = pneg %p29
      $region26: #{visual_encoder_forward.4} parent=23 // pred_check_branch
        %130 = sbr.rel (%p128) target = $region28
      $region27: #{visual_encoder_forward.4} parent=23 // pred_region
        %s131 = smul.u32 64, %s9
        %p132 = scmp.lt.s32.totalorder %s131, 255
        %s133 = scalar_select %p132, %s131, 255
        %s134 = smul.addr %s133, 8
        %s135 = scalar_lea.vmem %s0, %s134
        %s136 = smul.u32 64, %s9
      $region28: #{visual_encoder_forward.4} parent=23 // pred_fallthru
        _
    $region24: #{visual_encoder_forward.4} parent=5 // pred_fallthru
      _
    %p137 = scmp.le.s32.totalorder 1, %s9
    %p138 = scmp.lt.s32.totalorder %s9, 5
    %p139 = pnand %p137, %p138
    %p140 = pneg %p139
    // Predicated region
    $region29: #{visual_encoder_forward.4} parent=5 // pred_check
      _
    $region30: #{visual_encoder_forward.4} parent=5 // pred_check_branch
      %142 = sbr.rel (%p139) target = $region32
    $region31: #{visual_encoder_forward.4} parent=5 // pred_region
      %s143 = ssub.s32 %s9, 1
      %s144 = smul.u32 64, %s14
      %p145 = scmp.lt.s32.totalorder %s144, 255
      %s146 = scalar_select %p145, %s144, 255
      %s147 = smul.addr %s146, 8
      %s148 = scalar_lea.vmem %s0, %s147
      %p149 = pneg %p35
      %p150 = pneg %p32
      %p151 = pneg %p56
      %p152 = pneg %p53
      %p153 = pneg %p77
      %p154 = pneg %p74
      %p155 = pneg %p103
      %p156 = pneg %p100
      %s157 = smul.u32 64, %s14
      %p158 = scmp.lt.s32.totalorder %s157, 255
      %s159 = scalar_select %p158, %s157, 255
      %s160 = smul.addr %s159, 8
      %s161 = scalar_lea.vmem %s3, %s160
      %s162 = smul.u32 64, %s14
      %p163 = scmp.lt.s32.totalorder %s162, 255
      %s164 = scalar_select %p163, %s162, 255
      %s165 = smul.addr %s164, 8
      %s166 = scalar_lea.vmem %s0, %s165
      %s167 = smul.u32 64, %s14
      %s168 = smul.u32 64, %s14
      %p169 = scmp.lt.s32.totalorder %s168, 255
      %s170 = scalar_select %p169, %s168, 255
      %s171 = smul.addr %s170, 8
      %s172 = scalar_lea.vmem %s3, %s171
      %s173 = smul.u32 64, %s14
      %v175 = vld [vmem:[%s166] sm:$0xff]
      %v176 = vld [vmem:[%s166 + $0x8] sm:$0xff]
      %v177 = vld [vmem:[%s166 + $0x10] sm:$0xff]
      %v178 = vld [vmem:[%s166 + $0x18] sm:$0xff]
      %v179 = vld [vmem:[%s166 + $0x20] sm:$0xff]
      %v180 = vld [vmem:[%s166 + $0x28] sm:$0xff]
      %v181 = vld [vmem:[%s166 + $0x30] sm:$0xff]
      %v182 = vld [vmem:[%s166 + $0x38] sm:$0xff]
      %v183 = vld [vmem:[%s166 + $0x40] sm:$0xff]
      %v184 = vld [vmem:[%s166 + $0x48] sm:$0xff]
      %v185 = vld [vmem:[%s166 + $0x50] sm:$0xff]
      %v186 = vld [vmem:[%s166 + $0x58] sm:$0xff]
      %v187 = vld [vmem:[%s166 + $0x60] sm:$0xff]
      %v188 = vld [vmem:[%s166 + $0x68] sm:$0xff]
      %v189 = vld [vmem:[%s166 + $0x70] sm:$0xff]
      %v190 = vld [vmem:[%s166 + $0x78] sm:$0xff]
      %v191 = vld [vmem:[%s166 + $0x80] sm:$0xff]
      %v192 = vld [vmem:[%s166 + $0x88] sm:$0xff]
      %v193 = vld [vmem:[%s166 + $0x90] sm:$0xff]
      %v194 = vld [vmem:[%s166 + $0x98] sm:$0xff]
      %v195 = vld [vmem:[%s166 + $0xa0] sm:$0xff]
      %v196 = vld [vmem:[%s166 + $0xa8] sm:$0xff]
      %v197 = vld [vmem:[%s166 + $0xb0] sm:$0xff]
      %v198 = vld [vmem:[%s166 + $0xb8] sm:$0xff]
      %v199 = vld [vmem:[%s166 + $0xc0] sm:$0xff]
      %v200 = vld [vmem:[%s166 + $0xc8] sm:$0xff]
      %v201 = vld [vmem:[%s166 + $0xd0] sm:$0xff]
      %v202 = vld [vmem:[%s166 + $0xd8] sm:$0xff]
      %v203 = vld [vmem:[%s166 + $0xe0] sm:$0xff]
      %v204 = vld [vmem:[%s166 + $0xe8] sm:$0xff]
      %v205 = vld [vmem:[%s166 + $0xf0] sm:$0xff]
      %v206 = vld [vmem:[%s166 + $0xf8] sm:$0xff]
      %v207 = vld [vmem:[%s166 + $0x100] sm:$0xff]
      %v208 = vld [vmem:[%s166 + $0x108] sm:$0xff]
      %v209 = vld [vmem:[%s166 + $0x110] sm:$0xff]
      %v210 = vld [vmem:[%s166 + $0x118] sm:$0xff]
      %v211 = vld [vmem:[%s166 + $0x120] sm:$0xff]
      %v212 = vld [vmem:[%s166 + $0x128] sm:$0xff]
      %v213 = vld [vmem:[%s166 + $0x130] sm:$0xff]
      %v214 = vld [vmem:[%s166 + $0x138] sm:$0xff]
      %v215 = vld [vmem:[%s166 + $0x140] sm:$0xff]
      %v216 = vld [vmem:[%s166 + $0x148] sm:$0xff]
      %v217 = vld [vmem:[%s166 + $0x150] sm:$0xff]
      %v218 = vld [vmem:[%s166 + $0x158] sm:$0xff]
      %v219 = vld [vmem:[%s166 + $0x160] sm:$0xff]
      %v220 = vld [vmem:[%s166 + $0x168] sm:$0xff]
      %v221 = vld [vmem:[%s166 + $0x170] sm:$0xff]
      %v222 = vld [vmem:[%s166 + $0x178] sm:$0xff]
      %v223 = vld [vmem:[%s166 + $0x180] sm:$0xff]
      %v224 = vld [vmem:[%s166 + $0x188] sm:$0xff]
      %v225 = vld [vmem:[%s166 + $0x190] sm:$0xff]
      %v226 = vld [vmem:[%s166 + $0x198] sm:$0xff]
      %v227 = vld [vmem:[%s166 + $0x1a0] sm:$0xff]
      %v228 = vld [vmem:[%s166 + $0x1a8] sm:$0xff]
      %v229 = vld [vmem:[%s166 + $0x1b0] sm:$0xff]
      %v230 = vld [vmem:[%s166 + $0x1b8] sm:$0xff]
      %v231 = vld [vmem:[%s166 + $0x1c0] sm:$0xff]
      %v232 = vld [vmem:[%s166 + $0x1c8] sm:$0xff]
      %v233 = vld [vmem:[%s166 + $0x1d0] sm:$0xff]
      %v234 = vld [vmem:[%s166 + $0x1d8] sm:$0xff]
      %v235 = vld [vmem:[%s166 + $0x1e0] sm:$0xff]
      %v236 = vld [vmem:[%s166 + $0x1e8] sm:$0xff]
      %v237 = vld [vmem:[%s166 + $0x1f0] sm:$0xff]
      %v238 = vld [vmem:[%s166 + $0x1f8] sm:$0xff]
      %v239 = vpack.c.bf16 %v176, %v175
      %v240 = vpack.c.bf16 %v178, %v177
      %v241 = vpack.c.bf16 %v180, %v179
      %v242 = vpack.c.bf16 %v182, %v181
      %v243 = vpack.c.bf16 %v184, %v183
      %v244 = vpack.c.bf16 %v186, %v185
      %v245 = vpack.c.bf16 %v188, %v187
      %v246 = vpack.c.bf16 %v190, %v189
      %v247 = vpack.c.bf16 %v192, %v191
      %v248 = vpack.c.bf16 %v194, %v193
      %v249 = vpack.c.bf16 %v196, %v195
      %v250 = vpack.c.bf16 %v198, %v197
      %v251 = vpack.c.bf16 %v200, %v199
      %v252 = vpack.c.bf16 %v202, %v201
      %v253 = vpack.c.bf16 %v204, %v203
      %v254 = vpack.c.bf16 %v206, %v205
      %v255 = vpack.c.bf16 %v208, %v207
      %v256 = vpack.c.bf16 %v210, %v209
      %v257 = vpack.c.bf16 %v212, %v211
      %v258 = vpack.c.bf16 %v214, %v213
      %v259 = vpack.c.bf16 %v216, %v215
      %v260 = vpack.c.bf16 %v218, %v217
      %v261 = vpack.c.bf16 %v220, %v219
      %v262 = vpack.c.bf16 %v222, %v221
      %v263 = vpack.c.bf16 %v224, %v223
      %v264 = vpack.c.bf16 %v226, %v225
      %v265 = vpack.c.bf16 %v228, %v227
      %v266 = vpack.c.bf16 %v230, %v229
      %v267 = vpack.c.bf16 %v232, %v231
      %v268 = vpack.c.bf16 %v234, %v233
      %v269 = vpack.c.bf16 %v236, %v235
      %v270 = vpack.c.bf16 %v238, %v237
      %v271 = vld [vmem:[%s1] sm:$0xff]
      %v272 = vld [vmem:[%s1 + $0x8] sm:$0xff]
      %v273 = vld [vmem:[%s1 + $0x10] sm:$0xff]
      %v274 = vld [vmem:[%s1 + $0x18] sm:$0xff]
      %v275 = vld [vmem:[%s1 + $0x20] sm:$0xff]
      %v276 = vld [vmem:[%s1 + $0x28] sm:$0xff]
      %v277 = vpack.c.bf16 %v272, %v271
      %v278 = vpack.c.bf16 %v274, %v273
      %v279 = vpack.c.bf16 %v276, %v275
      %v280 = vld [vmem:[%s2] sm:$0x1]
      %v282 = vlaneseq
      %v283 = vshrl.u32 %v282, 7
      %v284 = vsub.s32 0, %v283
      %v285 = vrot.slane %v280, %v284
      %vm287 = vcmask 392192
      %v289 = vsel %vm287, %v239, 0
      %v292 = vsel %vm287, %v240, 0
      %v295 = vsel %vm287, %v241, 0
      %v298 = vsel %vm287, %v242, 0
      %v301 = vsel %vm287, %v243, 0
      %v304 = vsel %vm287, %v244, 0
      %v307 = vsel %vm287, %v245, 0
      %v310 = vsel %vm287, %v246, 0
      %v313 = vsel %vm287, %v247, 0
      %v316 = vsel %vm287, %v248, 0
      %v319 = vsel %vm287, %v249, 0
      %v322 = vsel %vm287, %v250, 0
      %v325 = vsel %vm287, %v251, 0
      %v328 = vsel %vm287, %v252, 0
      %v331 = vsel %vm287, %v253, 0
      %v334 = vsel %vm287, %v254, 0
      %v337 = vsel %vm287, %v255, 0
      %v340 = vsel %vm287, %v256, 0
      %v343 = vsel %vm287, %v257, 0
      %v346 = vsel %vm287, %v258, 0
      %v349 = vsel %vm287, %v259, 0
      %v352 = vsel %vm287, %v260, 0
      %v355 = vsel %vm287, %v261, 0
      %v358 = vsel %vm287, %v262, 0
      %v361 = vsel %vm287, %v263, 0
      %v364 = vsel %vm287, %v264, 0
      %v367 = vsel %vm287, %v265, 0
      %v370 = vsel %vm287, %v266, 0
      %v373 = vsel %vm287, %v267, 0
      %v376 = vsel %vm287, %v268, 0
      %v379 = vsel %vm287, %v269, 0
      %v382 = vsel %vm287, %v270, 0
      %384 = vmatprep.subr.bf16.mxu0 0
      %385 = vmatpush1.bf16.msra.mxu0 0
      %386 = vmatprep.subr.bf16.mxu0 0
      %387 = vmatpush1.bf16.msra.mxu0 0
      %388 = vmatprep.subr.bf16.mxu0 0
      %389 = vmatpush1.bf16.msra.mxu0 0
      %390 = vmatprep.subr.bf16.mxu0 0
      %391 = vmatpush1.bf16.msra.mxu0 0
      %392 = vmatprep.subr.bf16.mxu0 0
      %393 = vmatpush1.bf16.msra.mxu0 0
      %394 = vmatprep.subr.bf16.mxu0 0
      %395 = vmatpush1.bf16.msra.mxu0 %v279
      %396 = vmatprep.subr.bf16.mxu0 0
      %397 = vmatpush1.bf16.msra.mxu0 %v278
      %398 = vmatprep.subr.bf16.mxu0 0
      %399 = vmatpush1.bf16.msra.mxu0 %v277
      %400 = vmatprep.subr.bf16.mxu0 0
      %401 = vmatpush2.bf16.msra.mxu0 0
      %402 = vmatprep.subr.bf16.mxu0 0
      %403 = vmatpush2.bf16.msra.mxu0 0
      %404 = vmatprep.subr.bf16.mxu0 0
      %405 = vmatpush2.bf16.msra.mxu0 0
      %406 = vmatprep.subr.bf16.mxu0 0
      %407 = vmatpush2.bf16.msra.mxu0 0
      %408 = vmatprep.subr.bf16.mxu0 0
      %409 = vmatpush2.bf16.msra.mxu0 0
      %410 = vmatprep.subr.bf16.mxu0 0
      %411 = vmatpush2.bf16.msra.mxu0 0
      %412 = vmatprep.subr.bf16.mxu0 0
      %413 = vmatpush2.bf16.msra.mxu0 0
      %414 = vmatprep.subr.bf16.mxu0 0
      %415 = vmatpush2.bf16.msra.mxu0 0
      %416 = vmatprep.mubr.bf16.mxu0 0
      %417 = vmatmul.mubr.bf16.gmra.mxu0 %v289
      %v418 = vpop.f32.mrf.mxu0
      %v419 = vadd.f32 %v285, %v418
      %v420 = vpop.f32.mrf.mxu0
      %v421 = vpop.f32.mrf.mxu0
      %v422 = vadd.f32 %v285, %v421
      %v423 = vpop.f32.mrf.mxu0
      %424 = vmatprep.mubr.bf16.mxu0 0
      %425 = vmatmul.mubr.bf16.gmra.mxu0 %v292
      %v426 = vpop.f32.mrf.mxu0
      %v427 = vadd.f32 %v285, %v426
      %v428 = vpop.f32.mrf.mxu0
      %v429 = vpop.f32.mrf.mxu0
      %v430 = vadd.f32 %v285, %v429
      %v431 = vpop.f32.mrf.mxu0
      %432 = vmatprep.mubr.bf16.mxu0 0
      %433 = vmatmul.mubr.bf16.gmra.mxu0 %v295
      %v434 = vpop.f32.mrf.mxu0
      %v435 = vadd.f32 %v285, %v434
      %v436 = vpop.f32.mrf.mxu0
      %v437 = vpop.f32.mrf.mxu0
      %v438 = vadd.f32 %v285, %v437
      %v439 = vpop.f32.mrf.mxu0
      %440 = vmatprep.mubr.bf16.mxu0 0
      %441 = vmatmul.mubr.bf16.gmra.mxu0 %v298
      %v442 = vpop.f32.mrf.mxu0
      %v443 = vadd.f32 %v285, %v442
      %v444 = vpop.f32.mrf.mxu0
      %v445 = vpop.f32.mrf.mxu0
      %v446 = vadd.f32 %v285, %v445
      %v447 = vpop.f32.mrf.mxu0
      %448 = vmatprep.mubr.bf16.mxu0 0
      %449 = vmatmul.mubr.bf16.gmra.mxu0 %v301
      %v450 = vpop.f32.mrf.mxu0
      %v451 = vadd.f32 %v285, %v450
      %v452 = vpop.f32.mrf.mxu0
      %v453 = vpop.f32.mrf.mxu0
      %v454 = vadd.f32 %v285, %v453
      %v455 = vpop.f32.mrf.mxu0
      %456 = vmatprep.mubr.bf16.mxu0 0
      %457 = vmatmul.mubr.bf16.gmra.mxu0 %v304
      %v458 = vpop.f32.mrf.mxu0
      %v459 = vadd.f32 %v285, %v458
      %v460 = vpop.f32.mrf.mxu0
      %v461 = vpop.f32.mrf.mxu0
      %v462 = vadd.f32 %v285, %v461
      %v463 = vpop.f32.mrf.mxu0
      %464 = vmatprep.mubr.bf16.mxu0 0
      %465 = vmatmul.mubr.bf16.gmra.mxu0 %v307
      %v466 = vpop.f32.mrf.mxu0
      %v467 = vadd.f32 %v285, %v466
      %v468 = vpop.f32.mrf.mxu0
      %v469 = vpop.f32.mrf.mxu0
      %v470 = vadd.f32 %v285, %v469
      %v471 = vpop.f32.mrf.mxu0
      %472 = vmatprep.mubr.bf16.mxu0 0
      %473 = vmatmul.mubr.bf16.gmra.mxu0 %v310
      %v474 = vpop.f32.mrf.mxu0
      %v475 = vadd.f32 %v285, %v474
      %v476 = vpop.f32.mrf.mxu0
      %v477 = vpop.f32.mrf.mxu0
      %v478 = vadd.f32 %v285, %v477
      %v479 = vpop.f32.mrf.mxu0
      %480 = vmatprep.mubr.bf16.mxu0 0
      %481 = vmatmul.mubr.bf16.gmra.mxu0 %v313
      %v482 = vpop.f32.mrf.mxu0
      %v483 = vadd.f32 %v285, %v482
      %v484 = vpop.f32.mrf.mxu0
      %v485 = vpop.f32.mrf.mxu0
      %v486 = vadd.f32 %v285, %v485
      %v487 = vpop.f32.mrf.mxu0
      %488 = vmatprep.mubr.bf16.mxu0 0
      %489 = vmatmul.mubr.bf16.gmra.mxu0 %v316
      %v490 = vpop.f32.mrf.mxu0
      %v491 = vadd.f32 %v285, %v490
      %v492 = vpop.f32.mrf.mxu0
      %v493 = vpop.f32.mrf.mxu0
      %v494 = vadd.f32 %v285, %v493
      %v495 = vpop.f32.mrf.mxu0
      %496 = vmatprep.mubr.bf16.mxu0 0
      %497 = vmatmul.mubr.bf16.gmra.mxu0 %v319
      %v498 = vpop.f32.mrf.mxu0
      %v499 = vadd.f32 %v285, %v498
      %v500 = vpop.f32.mrf.mxu0
      %v501 = vpop.f32.mrf.mxu0
      %v502 = vadd.f32 %v285, %v501
      %v503 = vpop.f32.mrf.mxu0
      %504 = vmatprep.mubr.bf16.mxu0 0
      %505 = vmatmul.mubr.bf16.gmra.mxu0 %v322
      %v506 = vpop.f32.mrf.mxu0
      %v507 = vadd.f32 %v285, %v506
      %v508 = vpop.f32.mrf.mxu0
      %v509 = vpop.f32.mrf.mxu0
      %v510 = vadd.f32 %v285, %v509
      %v511 = vpop.f32.mrf.mxu0
      %512 = vmatprep.mubr.bf16.mxu0 0
      %513 = vmatmul.mubr.bf16.gmra.mxu0 %v325
      %v514 = vpop.f32.mrf.mxu0
      %v515 = vadd.f32 %v285, %v514
      %v516 = vpop.f32.mrf.mxu0
      %v517 = vpop.f32.mrf.mxu0
      %v518 = vadd.f32 %v285, %v517
      %v519 = vpop.f32.mrf.mxu0
      %520 = vmatprep.mubr.bf16.mxu0 0
      %521 = vmatmul.mubr.bf16.gmra.mxu0 %v328
      %v522 = vpop.f32.mrf.mxu0
      %v523 = vadd.f32 %v285, %v522
      %v524 = vpop.f32.mrf.mxu0
      %v525 = vpop.f32.mrf.mxu0
      %v526 = vadd.f32 %v285, %v525
      %v527 = vpop.f32.mrf.mxu0
      %528 = vmatprep.mubr.bf16.mxu0 0
      %529 = vmatmul.mubr.bf16.gmra.mxu0 %v331
      %v530 = vpop.f32.mrf.mxu0
      %v531 = vadd.f32 %v285, %v530
      %v532 = vpop.f32.mrf.mxu0
      %v533 = vpop.f32.mrf.mxu0
      %v534 = vadd.f32 %v285, %v533
      %v535 = vpop.f32.mrf.mxu0
      %536 = vmatprep.mubr.bf16.mxu0 0
      %537 = vmatmul.mubr.bf16.gmra.mxu0 %v334
      %v538 = vpop.f32.mrf.mxu0
      %v539 = vadd.f32 %v285, %v538
      %v540 = vpop.f32.mrf.mxu0
      %v541 = vpop.f32.mrf.mxu0
      %v542 = vadd.f32 %v285, %v541
      %v543 = vpop.f32.mrf.mxu0
      %544 = vmatprep.mubr.bf16.mxu0 0
      %545 = vmatmul.mubr.bf16.gmra.mxu0 %v337
      %v546 = vpop.f32.mrf.mxu0
      %v547 = vadd.f32 %v285, %v546
      %v548 = vpop.f32.mrf.mxu0
      %v549 = vpop.f32.mrf.mxu0
      %v550 = vadd.f32 %v285, %v549
      %v551 = vpop.f32.mrf.mxu0
      %552 = vmatprep.mubr.bf16.mxu0 0
      %553 = vmatmul.mubr.bf16.gmra.mxu0 %v340
      %v554 = vpop.f32.mrf.mxu0
      %v555 = vadd.f32 %v285, %v554
      %v556 = vpop.f32.mrf.mxu0
      %v557 = vpop.f32.mrf.mxu0
      %v558 = vadd.f32 %v285, %v557
      %v559 = vpop.f32.mrf.mxu0
      %560 = vmatprep.mubr.bf16.mxu0 0
      %561 = vmatmul.mubr.bf16.gmra.mxu0 %v343
      %v562 = vpop.f32.mrf.mxu0
      %v563 = vadd.f32 %v285, %v562
      %v564 = vpop.f32.mrf.mxu0
      %v565 = vpop.f32.mrf.mxu0
      %v566 = vadd.f32 %v285, %v565
      %v567 = vpop.f32.mrf.mxu0
      %568 = vmatprep.mubr.bf16.mxu0 0
      %569 = vmatmul.mubr.bf16.gmra.mxu0 %v346
      %v570 = vpop.f32.mrf.mxu0
      %v571 = vadd.f32 %v285, %v570
      %v572 = vpop.f32.mrf.mxu0
      %v573 = vpop.f32.mrf.mxu0
      %v574 = vadd.f32 %v285, %v573
      %v575 = vpop.f32.mrf.mxu0
      %576 = vmatprep.mubr.bf16.mxu0 0
      %577 = vmatmul.mubr.bf16.gmra.mxu0 %v349
      %v578 = vpop.f32.mrf.mxu0
      %v579 = vadd.f32 %v285, %v578
      %v580 = vpop.f32.mrf.mxu0
      %v581 = vpop.f32.mrf.mxu0
      %v582 = vadd.f32 %v285, %v581
      %v583 = vpop.f32.mrf.mxu0
      %584 = vmatprep.mubr.bf16.mxu0 0
      %585 = vmatmul.mubr.bf16.gmra.mxu0 %v352
      %v586 = vpop.f32.mrf.mxu0
      %v587 = vadd.f32 %v285, %v586
      %v588 = vpop.f32.mrf.mxu0
      %v589 = vpop.f32.mrf.mxu0
      %v590 = vadd.f32 %v285, %v589
      %v591 = vpop.f32.mrf.mxu0
      %592 = vmatprep.mubr.bf16.mxu0 0
      %593 = vmatmul.mubr.bf16.gmra.mxu0 %v355
      %v594 = vpop.f32.mrf.mxu0
      %v595 = vadd.f32 %v285, %v594
      %v596 = vpop.f32.mrf.mxu0
      %v597 = vpop.f32.mrf.mxu0
      %v598 = vadd.f32 %v285, %v597
      %v599 = vpop.f32.mrf.mxu0
      %600 = vmatprep.mubr.bf16.mxu0 0
      %601 = vmatmul.mubr.bf16.gmra.mxu0 %v358
      %v602 = vpop.f32.mrf.mxu0
      %v603 = vadd.f32 %v285, %v602
      %v604 = vpop.f32.mrf.mxu0
      %v605 = vpop.f32.mrf.mxu0
      %v606 = vadd.f32 %v285, %v605
      %v607 = vpop.f32.mrf.mxu0
      %608 = vmatprep.mubr.bf16.mxu0 0
      %609 = vmatmul.mubr.bf16.gmra.mxu0 %v361
      %v610 = vpop.f32.mrf.mxu0
      %v611 = vadd.f32 %v285, %v610
      %v612 = vpop.f32.mrf.mxu0
      %v613 = vpop.f32.mrf.mxu0
      %v614 = vadd.f32 %v285, %v613
      %v615 = vpop.f32.mrf.mxu0
      %616 = vmatprep.mubr.bf16.mxu0 0
      %617 = vmatmul.mubr.bf16.gmra.mxu0 %v364
      %v618 = vpop.f32.mrf.mxu0
      %v619 = vadd.f32 %v285, %v618
      %v620 = vpop.f32.mrf.mxu0
      %v621 = vpop.f32.mrf.mxu0
      %v622 = vadd.f32 %v285, %v621
      %v623 = vpop.f32.mrf.mxu0
      %624 = vmatprep.mubr.bf16.mxu0 0
      %625 = vmatmul.mubr.bf16.gmra.mxu0 %v367
      %v626 = vpop.f32.mrf.mxu0
      %v627 = vadd.f32 %v285, %v626
      %v628 = vpop.f32.mrf.mxu0
      %v629 = vpop.f32.mrf.mxu0
      %v630 = vadd.f32 %v285, %v629
      %v631 = vpop.f32.mrf.mxu0
      %632 = vmatprep.mubr.bf16.mxu0 0
      %633 = vmatmul.mubr.bf16.gmra.mxu0 %v370
      %v634 = vpop.f32.mrf.mxu0
      %v635 = vadd.f32 %v285, %v634
      %v636 = vpop.f32.mrf.mxu0
      %v637 = vpop.f32.mrf.mxu0
      %v638 = vadd.f32 %v285, %v637
      %v639 = vpop.f32.mrf.mxu0
      %640 = vmatprep.mubr.bf16.mxu0 0
      %641 = vmatmul.mubr.bf16.gmra.mxu0 %v373
      %v642 = vpop.f32.mrf.mxu0
      %v643 = vadd.f32 %v285, %v642
      %v644 = vpop.f32.mrf.mxu0
      %v645 = vpop.f32.mrf.mxu0
      %v646 = vadd.f32 %v285, %v645
      %v647 = vpop.f32.mrf.mxu0
      %648 = vmatprep.mubr.bf16.mxu0 0
      %649 = vmatmul.mubr.bf16.gmra.mxu0 %v376
      %v650 = vpop.f32.mrf.mxu0
      %v651 = vadd.f32 %v285, %v650
      %v652 = vpop.f32.mrf.mxu0
      %v653 = vpop.f32.mrf.mxu0
      %v654 = vadd.f32 %v285, %v653
      %v655 = vpop.f32.mrf.mxu0
      %656 = vmatprep.mubr.bf16.mxu0 0
      %657 = vmatmul.mubr.bf16.gmra.mxu0 %v379
      %v658 = vpop.f32.mrf.mxu0
      %v659 = vadd.f32 %v285, %v658
      %v660 = vpop.f32.mrf.mxu0
      %v661 = vpop.f32.mrf.mxu0
      %v662 = vadd.f32 %v285, %v661
      %v663 = vpop.f32.mrf.mxu0
      %664 = vmatprep.mubr.bf16.mxu0 0
      %665 = vmatmul.mubr.bf16.gmra.mxu0 %v382
      %v666 = vpop.f32.mrf.mxu0
      %v667 = vadd.f32 %v285, %v666
      %v668 = vpop.f32.mrf.mxu0
      %v669 = vpop.f32.mrf.mxu0
      %v670 = vadd.f32 %v285, %v669
      %v671 = vpop.f32.mrf.mxu0
      %672 = vdwg.mxu0
      %v673 = vmax.f32 %v419, 0.0
      %v674 = vmax.f32 %v422, 0.0
      %v675 = vmax.f32 %v427, 0.0
      %v676 = vmax.f32 %v430, 0.0
      %v677 = vmax.f32 %v435, 0.0
      %v678 = vmax.f32 %v438, 0.0
      %v679 = vmax.f32 %v443, 0.0
      %v680 = vmax.f32 %v446, 0.0
      %v681 = vmax.f32 %v451, 0.0
      %v682 = vmax.f32 %v454, 0.0
      %v683 = vmax.f32 %v459, 0.0
      %v684 = vmax.f32 %v462, 0.0
      %v685 = vmax.f32 %v467, 0.0
      %v686 = vmax.f32 %v470, 0.0
      %v687 = vmax.f32 %v475, 0.0
      %v688 = vmax.f32 %v478, 0.0
      %v689 = vmax.f32 %v483, 0.0
      %v690 = vmax.f32 %v486, 0.0
      %v691 = vmax.f32 %v491, 0.0
      %v692 = vmax.f32 %v494, 0.0
      %v693 = vmax.f32 %v499, 0.0
      %v694 = vmax.f32 %v502, 0.0
      %v695 = vmax.f32 %v507, 0.0
      %v696 = vmax.f32 %v510, 0.0
      %v697 = vmax.f32 %v515, 0.0
      %v698 = vmax.f32 %v518, 0.0
      %v699 = vmax.f32 %v523, 0.0
      %v700 = vmax.f32 %v526, 0.0
      %v701 = vmax.f32 %v531, 0.0
      %v702 = vmax.f32 %v534, 0.0
      %v703 = vmax.f32 %v539, 0.0
      %v704 = vmax.f32 %v542, 0.0
      %v705 = vmax.f32 %v547, 0.0
      %v706 = vmax.f32 %v550, 0.0
      %v707 = vmax.f32 %v555, 0.0
      %v708 = vmax.f32 %v558, 0.0
      %v709 = vmax.f32 %v563, 0.0
      %v710 = vmax.f32 %v566, 0.0
      %v711 = vmax.f32 %v571, 0.0
      %v712 = vmax.f32 %v574, 0.0
      %v713 = vmax.f32 %v579, 0.0
      %v714 = vmax.f32 %v582, 0.0
      %v715 = vmax.f32 %v587, 0.0
      %v716 = vmax.f32 %v590, 0.0
      %v717 = vmax.f32 %v595, 0.0
      %v718 = vmax.f32 %v598, 0.0
      %v719 = vmax.f32 %v603, 0.0
      %v720 = vmax.f32 %v606, 0.0
      %v721 = vmax.f32 %v611, 0.0
      %v722 = vmax.f32 %v614, 0.0
      %v723 = vmax.f32 %v619, 0.0
      %v724 = vmax.f32 %v622, 0.0
      %v725 = vmax.f32 %v627, 0.0
      %v726 = vmax.f32 %v630, 0.0
      %v727 = vmax.f32 %v635, 0.0
      %v728 = vmax.f32 %v638, 0.0
      %v729 = vmax.f32 %v643, 0.0
      %v730 = vmax.f32 %v646, 0.0
      %v731 = vmax.f32 %v651, 0.0
      %v732 = vmax.f32 %v654, 0.0
      %v733 = vmax.f32 %v659, 0.0
      %v734 = vmax.f32 %v662, 0.0
      %v735 = vmax.f32 %v667, 0.0
      %v736 = vmax.f32 %v670, 0.0
      %vm737 = vcmask 261120
      %738 = vst.msk [vmem:[%s172] sm:$0xff] %vm737, %v673
      %739 = vst.msk [vmem:[%s172 + $0x8] sm:$0xff] %vm737, %v674
      %740 = vst.msk [vmem:[%s172 + $0x10] sm:$0xff] %vm737, %v675
      %741 = vst.msk [vmem:[%s172 + $0x18] sm:$0xff] %vm737, %v676
      %742 = vst.msk [vmem:[%s172 + $0x20] sm:$0xff] %vm737, %v677
      %743 = vst.msk [vmem:[%s172 + $0x28] sm:$0xff] %vm737, %v678
      %744 = vst.msk [vmem:[%s172 + $0x30] sm:$0xff] %vm737, %v679
      %745 = vst.msk [vmem:[%s172 + $0x38] sm:$0xff] %vm737, %v680
      %746 = vst.msk [vmem:[%s172 + $0x40] sm:$0xff] %vm737, %v681
      %747 = vst.msk [vmem:[%s172 + $0x48] sm:$0xff] %vm737, %v682
      %748 = vst.msk [vmem:[%s172 + $0x50] sm:$0xff] %vm737, %v683
      %749 = vst.msk [vmem:[%s172 + $0x58] sm:$0xff] %vm737, %v684
      %750 = vst.msk [vmem:[%s172 + $0x60] sm:$0xff] %vm737, %v685
      %751 = vst.msk [vmem:[%s172 + $0x68] sm:$0xff] %vm737, %v686
      %752 = vst.msk [vmem:[%s172 + $0x70] sm:$0xff] %vm737, %v687
      %753 = vst.msk [vmem:[%s172 + $0x78] sm:$0xff] %vm737, %v688
      %754 = vst.msk [vmem:[%s172 + $0x80] sm:$0xff] %vm737, %v689
      %755 = vst.msk [vmem:[%s172 + $0x88] sm:$0xff] %vm737, %v690
      %756 = vst.msk [vmem:[%s172 + $0x90] sm:$0xff] %vm737, %v691
      %757 = vst.msk [vmem:[%s172 + $0x98] sm:$0xff] %vm737, %v692
      %758 = vst.msk [vmem:[%s172 + $0xa0] sm:$0xff] %vm737, %v693
      %759 = vst.msk [vmem:[%s172 + $0xa8] sm:$0xff] %vm737, %v694
      %760 = vst.msk [vmem:[%s172 + $0xb0] sm:$0xff] %vm737, %v695
      %761 = vst.msk [vmem:[%s172 + $0xb8] sm:$0xff] %vm737, %v696
      %762 = vst.msk [vmem:[%s172 + $0xc0] sm:$0xff] %vm737, %v697
      %763 = vst.msk [vmem:[%s172 + $0xc8] sm:$0xff] %vm737, %v698
      %764 = vst.msk [vmem:[%s172 + $0xd0] sm:$0xff] %vm737, %v699
      %765 = vst.msk [vmem:[%s172 + $0xd8] sm:$0xff] %vm737, %v700
      %766 = vst.msk [vmem:[%s172 + $0xe0] sm:$0xff] %vm737, %v701
      %767 = vst.msk [vmem:[%s172 + $0xe8] sm:$0xff] %vm737, %v702
      %768 = vst.msk [vmem:[%s172 + $0xf0] sm:$0xff] %vm737, %v703
      %769 = vst.msk [vmem:[%s172 + $0xf8] sm:$0xff] %vm737, %v704
      %770 = vst.msk [vmem:[%s172 + $0x100] sm:$0xff] %vm737, %v705
      %771 = vst.msk [vmem:[%s172 + $0x108] sm:$0xff] %vm737, %v706
      %772 = vst.msk [vmem:[%s172 + $0x110] sm:$0xff] %vm737, %v707
      %773 = vst.msk [vmem:[%s172 + $0x118] sm:$0xff] %vm737, %v708
      %774 = vst.msk [vmem:[%s172 + $0x120] sm:$0xff] %vm737, %v709
      %775 = vst.msk [vmem:[%s172 + $0x128] sm:$0xff] %vm737, %v710
      %776 = vst.msk [vmem:[%s172 + $0x130] sm:$0xff] %vm737, %v711
      %777 = vst.msk [vmem:[%s172 + $0x138] sm:$0xff] %vm737, %v712
      %778 = vst.msk [vmem:[%s172 + $0x140] sm:$0xff] %vm737, %v713
      %779 = vst.msk [vmem:[%s172 + $0x148] sm:$0xff] %vm737, %v714
      %780 = vst.msk [vmem:[%s172 + $0x150] sm:$0xff] %vm737, %v715
      %781 = vst.msk [vmem:[%s172 + $0x158] sm:$0xff] %vm737, %v716
      %782 = vst.msk [vmem:[%s172 + $0x160] sm:$0xff] %vm737, %v717
      %783 = vst.msk [vmem:[%s172 + $0x168] sm:$0xff] %vm737, %v718
      %784 = vst.msk [vmem:[%s172 + $0x170] sm:$0xff] %vm737, %v719
      %785 = vst.msk [vmem:[%s172 + $0x178] sm:$0xff] %vm737, %v720
      %786 = vst.msk [vmem:[%s172 + $0x180] sm:$0xff] %vm737, %v721
      %787 = vst.msk [vmem:[%s172 + $0x188] sm:$0xff] %vm737, %v722
      %788 = vst.msk [vmem:[%s172 + $0x190] sm:$0xff] %vm737, %v723
      %789 = vst.msk [vmem:[%s172 + $0x198] sm:$0xff] %vm737, %v724
      %790 = vst.msk [vmem:[%s172 + $0x1a0] sm:$0xff] %vm737, %v725
      %791 = vst.msk [vmem:[%s172 + $0x1a8] sm:$0xff] %vm737, %v726
      %792 = vst.msk [vmem:[%s172 + $0x1b0] sm:$0xff] %vm737, %v727
      %793 = vst.msk [vmem:[%s172 + $0x1b8] sm:$0xff] %vm737, %v728
      %794 = vst.msk [vmem:[%s172 + $0x1c0] sm:$0xff] %vm737, %v729
      %795 = vst.msk [vmem:[%s172 + $0x1c8] sm:$0xff] %vm737, %v730
      %796 = vst.msk [vmem:[%s172 + $0x1d0] sm:$0xff] %vm737, %v731
      %797 = vst.msk [vmem:[%s172 + $0x1d8] sm:$0xff] %vm737, %v732
      %798 = vst.msk [vmem:[%s172 + $0x1e0] sm:$0xff] %vm737, %v733
      %799 = vst.msk [vmem:[%s172 + $0x1e8] sm:$0xff] %vm737, %v734
      %800 = vst.msk [vmem:[%s172 + $0x1f0] sm:$0xff] %vm737, %v735
      %801 = vst.msk [vmem:[%s172 + $0x1f8] sm:$0xff] %vm737, %v736
      %s802 = smul.u32 64, %s14
      %p803 = scmp.lt.s32.totalorder %s802, 255
      %s804 = scalar_select %p803, %s802, 255
      %s805 = smul.addr %s804, 8
      %s806 = scalar_lea.vmem %s3, %s805
      // Predicated region
      $region33: #{visual_encoder_forward.4} parent=31 // pred_check
        %p807 = pneg %p100
      $region34: #{visual_encoder_forward.4} parent=31 // pred_check_branch
        %809 = sbr.rel (%p807) target = $region36
      $region35: #{visual_encoder_forward.4} parent=31 // pred_region
        %s810 = smul.u32 64, %s14
      $region36: #{visual_encoder_forward.4} parent=31 // pred_fallthru
        _
    $region32: #{visual_encoder_forward.4} parent=5 // pred_fallthru
      _
    %p811 = scmp.le.s32.totalorder 2, %s9
    // Predicated region
    $region37: #{visual_encoder_forward.4} parent=5 // pred_check
      %p812 = pneg %p811
    $region38: #{visual_encoder_forward.4} parent=5 // pred_check_branch
      %814 = sbr.rel (%p812) target = $region40
    $region39: #{visual_encoder_forward.4} parent=5 // pred_region
      %s815 = ssub.s32 %s9, 2
      // Predicated region
      $region41: #{visual_encoder_forward.4} parent=39 // pred_check
        %p816 = pneg %p106
      $region42: #{visual_encoder_forward.4} parent=39 // pred_check_branch
        %818 = sbr.rel (%p816) target = $region44
      $region43: #{visual_encoder_forward.4} parent=39 // pred_region
        %s819 = smul.u32 64, %s15
        %p820 = scmp.lt.s32.totalorder %s819, 255
        %s821 = scalar_select %p820, %s819, 255
        %s822 = smul.addr %s821, 8
        %s823 = scalar_lea.vmem %s3, %s822
      $region44: #{visual_encoder_forward.4} parent=39 // pred_fallthru
        _
    $region40: #{visual_encoder_forward.4} parent=5 // pred_fallthru
      _
  $region6: #{visual_encoder_forward.4} parent=0 // loop_footer
    %s13 = sadd.s32 1, %s9
  $region7: #{visual_encoder_forward.4} parent=0 // loop_footer_branch
    %8 = sbr.rel target = $region3
  $region8: #{visual_encoder_forward.4} parent=0 // loop_exit
    _

// kernel: visual_encoder_forward.5
$region0: #{visual_encoder_forward.5}
  #allocation0 [shape = 'u32[]', space=smem, size = 0x4, offset = 0x4, fixed_abs, tag = 'smem constant byte address 0x4 - core index']
  #allocation1 [shape = 'u32[144,128]{1,0:T(1,128)}', space=vmem, size = 0x12000, scoped, tag = 'internal scratch']
  %s0 = inlined_call_operand.vmem [shape: f32[392,512], index: 0, kind: input, shape index: {}]
  %s1 = inlined_call_operand.vmem [shape: f32[512,64], index: 1, kind: input, shape index: {}]
  %s2 = inlined_call_operand.vmem [shape: f32[1,64], index: 2, kind: input, shape index: {}]
  %s3 = inlined_call_operand.vmem [shape: f32[392,64], index: 3, kind: output, shape index: {}]
  %s4 = sld [smem:[#allocation0]]
  $region22: #{visual_encoder_forward.5} parent=0
    _
  %s6 = ssub.s32 1, %s4
  %s7 = scalar_select 0, %s6, %s4
  // Predicated region
  $region2: #{visual_encoder_forward.5} parent=0 // pred_check
    _
  $region3: #{visual_encoder_forward.5} parent=0 // pred_check_branch
    %9 = sbr.rel (0) target = $region5
  $region4: #{visual_encoder_forward.5} parent=0 // pred_region
    _
  $region5: #{visual_encoder_forward.5} parent=0 // pred_fallthru
    _
  // Predicated region
  $region6: #{visual_encoder_forward.5} parent=0 // pred_check
    _
  $region7: #{visual_encoder_forward.5} parent=0 // pred_check_branch
    %11 = sbr.rel (0) target = $region9
  $region8: #{visual_encoder_forward.5} parent=0 // pred_region
    _
  $region9: #{visual_encoder_forward.5} parent=0 // pred_fallthru
    _
  // Predicated region
  $region10: #{visual_encoder_forward.5} parent=0 // pred_check
    _
  $region11: #{visual_encoder_forward.5} parent=0 // pred_check_branch
    %13 = sbr.rel (0) target = $region13
  $region12: #{visual_encoder_forward.5} parent=0 // pred_region
    _
  $region13: #{visual_encoder_forward.5} parent=0 // pred_fallthru
    _
  %v15 = vld [vmem:[%s0] sm:$0xff]
  %v16 = vld [vmem:[%s0 + $0x8] sm:$0xff]
  %v17 = vld [vmem:[%s0 + $0x10] sm:$0xff]
  %v18 = vld [vmem:[%s0 + $0x18] sm:$0xff]
  %v19 = vld [vmem:[%s0 + $0x20] sm:$0xff]
  %v20 = vld [vmem:[%s0 + $0x28] sm:$0xff]
  %v21 = vld [vmem:[%s0 + $0x30] sm:$0xff]
  %v22 = vld [vmem:[%s0 + $0x38] sm:$0xff]
  %v23 = vld [vmem:[%s0 + $0x40] sm:$0xff]
  %v24 = vld [vmem:[%s0 + $0x48] sm:$0xff]
  %v25 = vld [vmem:[%s0 + $0x50] sm:$0xff]
  %v26 = vld [vmem:[%s0 + $0x58] sm:$0xff]
  %v27 = vld [vmem:[%s0 + $0x60] sm:$0xff]
  %v28 = vld [vmem:[%s0 + $0x68] sm:$0xff]
  %v29 = vld [vmem:[%s0 + $0x70] sm:$0xff]
  %v30 = vld [vmem:[%s0 + $0x78] sm:$0xff]
  %v31 = vld [vmem:[%s0 + $0x80] sm:$0xff]
  %v32 = vld [vmem:[%s0 + $0x88] sm:$0xff]
  %v33 = vld [vmem:[%s0 + $0x90] sm:$0xff]
  %v34 = vld [vmem:[%s0 + $0x98] sm:$0xff]
  %v35 = vld [vmem:[%s0 + $0xa0] sm:$0xff]
  %v36 = vld [vmem:[%s0 + $0xa8] sm:$0xff]
  %v37 = vld [vmem:[%s0 + $0xb0] sm:$0xff]
  %v38 = vld [vmem:[%s0 + $0xb8] sm:$0xff]
  %v39 = vld [vmem:[%s0 + $0xc0] sm:$0xff]
  %v40 = vld [vmem:[%s0 + $0xc8] sm:$0xff]
  %v41 = vld [vmem:[%s0 + $0xd0] sm:$0xff]
  %v42 = vld [vmem:[%s0 + $0xd8] sm:$0xff]
  %v43 = vld [vmem:[%s0 + $0xe0] sm:$0xff]
  %v44 = vld [vmem:[%s0 + $0xe8] sm:$0xff]
  %v45 = vld [vmem:[%s0 + $0xf0] sm:$0xff]
  %v46 = vld [vmem:[%s0 + $0xf8] sm:$0xff]
  %v47 = vld [vmem:[%s0 + $0x100] sm:$0xff]
  %v48 = vld [vmem:[%s0 + $0x108] sm:$0xff]
  %v49 = vld [vmem:[%s0 + $0x110] sm:$0xff]
  %v50 = vld [vmem:[%s0 + $0x118] sm:$0xff]
  %v51 = vld [vmem:[%s0 + $0x120] sm:$0xff]
  %v52 = vld [vmem:[%s0 + $0x128] sm:$0xff]
  %v53 = vld [vmem:[%s0 + $0x130] sm:$0xff]
  %v54 = vld [vmem:[%s0 + $0x138] sm:$0xff]
  %v55 = vld [vmem:[%s0 + $0x140] sm:$0xff]
  %v56 = vld [vmem:[%s0 + $0x148] sm:$0xff]
  %v57 = vld [vmem:[%s0 + $0x150] sm:$0xff]
  %v58 = vld [vmem:[%s0 + $0x158] sm:$0xff]
  %v59 = vld [vmem:[%s0 + $0x160] sm:$0xff]
  %v60 = vld [vmem:[%s0 + $0x168] sm:$0xff]
  %v61 = vld [vmem:[%s0 + $0x170] sm:$0xff]
  %v62 = vld [vmem:[%s0 + $0x178] sm:$0xff]
  %v63 = vld [vmem:[%s0 + $0x180] sm:$0xff]
  %v64 = vld [vmem:[%s0 + $0x188] sm:$0xff]
  %v65 = vld [vmem:[%s0 + $0x190] sm:$0xff]
  %v66 = vld [vmem:[%s0 + $0x198] sm:$0xff]
  %v67 = vld [vmem:[%s0 + $0x1a0] sm:$0xff]
  %v68 = vld [vmem:[%s0 + $0x1a8] sm:$0xff]
  %v69 = vld [vmem:[%s0 + $0x1b0] sm:$0xff]
  %v70 = vld [vmem:[%s0 + $0x1b8] sm:$0xff]
  %v71 = vld [vmem:[%s0 + $0x1c0] sm:$0xff]
  %v72 = vld [vmem:[%s0 + $0x1c8] sm:$0xff]
  %v73 = vld [vmem:[%s0 + $0x1d0] sm:$0xff]
  %v74 = vld [vmem:[%s0 + $0x1d8] sm:$0xff]
  %v75 = vld [vmem:[%s0 + $0x1e0] sm:$0xff]
  %v76 = vld [vmem:[%s0 + $0x1e8] sm:$0xff]
  %v77 = vld [vmem:[%s0 + $0x1f0] sm:$0xff]
  %v78 = vld [vmem:[%s0 + $0x1f8] sm:$0xff]
  %v79 = vld [vmem:[%s0 + $0x200] sm:$0xff]
  %v80 = vld [vmem:[%s0 + $0x208] sm:$0xff]
  %v81 = vld [vmem:[%s0 + $0x210] sm:$0xff]
  %v82 = vld [vmem:[%s0 + $0x218] sm:$0xff]
  %v83 = vld [vmem:[%s0 + $0x220] sm:$0xff]
  %v84 = vld [vmem:[%s0 + $0x228] sm:$0xff]
  %v85 = vld [vmem:[%s0 + $0x230] sm:$0xff]
  %v86 = vld [vmem:[%s0 + $0x238] sm:$0xff]
  %v87 = vld [vmem:[%s0 + $0x240] sm:$0xff]
  %v88 = vld [vmem:[%s0 + $0x248] sm:$0xff]
  %v89 = vld [vmem:[%s0 + $0x250] sm:$0xff]
  %v90 = vld [vmem:[%s0 + $0x258] sm:$0xff]
  %v91 = vld [vmem:[%s0 + $0x260] sm:$0xff]
  %v92 = vld [vmem:[%s0 + $0x268] sm:$0xff]
  %v93 = vld [vmem:[%s0 + $0x270] sm:$0xff]
  %v94 = vld [vmem:[%s0 + $0x278] sm:$0xff]
  %v95 = vld [vmem:[%s0 + $0x280] sm:$0xff]
  %v96 = vld [vmem:[%s0 + $0x288] sm:$0xff]
  %v97 = vld [vmem:[%s0 + $0x290] sm:$0xff]
  %v98 = vld [vmem:[%s0 + $0x298] sm:$0xff]
  %v99 = vld [vmem:[%s0 + $0x2a0] sm:$0xff]
  %v100 = vld [vmem:[%s0 + $0x2a8] sm:$0xff]
  %v101 = vld [vmem:[%s0 + $0x2b0] sm:$0xff]
  %v102 = vld [vmem:[%s0 + $0x2b8] sm:$0xff]
  %v103 = vld [vmem:[%s0 + $0x2c0] sm:$0xff]
  %v104 = vld [vmem:[%s0 + $0x2c8] sm:$0xff]
  %v105 = vld [vmem:[%s0 + $0x2d0] sm:$0xff]
  %v106 = vld [vmem:[%s0 + $0x2d8] sm:$0xff]
  %v107 = vld [vmem:[%s0 + $0x2e0] sm:$0xff]
  %v108 = vld [vmem:[%s0 + $0x2e8] sm:$0xff]
  %v109 = vld [vmem:[%s0 + $0x2f0] sm:$0xff]
  %v110 = vld [vmem:[%s0 + $0x2f8] sm:$0xff]
  %v111 = vld [vmem:[%s0 + $0x300] sm:$0xff]
  %v112 = vld [vmem:[%s0 + $0x308] sm:$0xff]
  %v113 = vld [vmem:[%s0 + $0x310] sm:$0xff]
  %v114 = vld [vmem:[%s0 + $0x318] sm:$0xff]
  %v115 = vld [vmem:[%s0 + $0x320] sm:$0xff]
  %v116 = vld [vmem:[%s0 + $0x328] sm:$0xff]
  %v117 = vld [vmem:[%s0 + $0x330] sm:$0xff]
  %v118 = vld [vmem:[%s0 + $0x338] sm:$0xff]
  %v119 = vld [vmem:[%s0 + $0x340] sm:$0xff]
  %v120 = vld [vmem:[%s0 + $0x348] sm:$0xff]
  %v121 = vld [vmem:[%s0 + $0x350] sm:$0xff]
  %v122 = vld [vmem:[%s0 + $0x358] sm:$0xff]
  %v123 = vld [vmem:[%s0 + $0x360] sm:$0xff]
  %v124 = vld [vmem:[%s0 + $0x368] sm:$0xff]
  %v125 = vld [vmem:[%s0 + $0x370] sm:$0xff]
  %v126 = vld [vmem:[%s0 + $0x378] sm:$0xff]
  %v127 = vld [vmem:[%s0 + $0x380] sm:$0xff]
  %v128 = vld [vmem:[%s0 + $0x388] sm:$0xff]
  %v129 = vld [vmem:[%s0 + $0x390] sm:$0xff]
  %v130 = vld [vmem:[%s0 + $0x398] sm:$0xff]
  %v131 = vld [vmem:[%s0 + $0x3a0] sm:$0xff]
  %v132 = vld [vmem:[%s0 + $0x3a8] sm:$0xff]
  %v133 = vld [vmem:[%s0 + $0x3b0] sm:$0xff]
  %v134 = vld [vmem:[%s0 + $0x3b8] sm:$0xff]
  %v135 = vld [vmem:[%s0 + $0x3c0] sm:$0xff]
  %v136 = vld [vmem:[%s0 + $0x3c8] sm:$0xff]
  %v137 = vld [vmem:[%s0 + $0x3d0] sm:$0xff]
  %v138 = vld [vmem:[%s0 + $0x3d8] sm:$0xff]
  %v139 = vld [vmem:[%s0 + $0x3e0] sm:$0xff]
  %v140 = vld [vmem:[%s0 + $0x3e8] sm:$0xff]
  %v141 = vld [vmem:[%s0 + $0x3f0] sm:$0xff]
  %v142 = vld [vmem:[%s0 + $0x3f8] sm:$0xff]
  %v143 = vld [vmem:[%s0 + $0x400] sm:$0xff]
  %v144 = vld [vmem:[%s0 + $0x408] sm:$0xff]
  %v145 = vld [vmem:[%s0 + $0x410] sm:$0xff]
  %v146 = vld [vmem:[%s0 + $0x418] sm:$0xff]
  %v147 = vld [vmem:[%s0 + $0x420] sm:$0xff]
  %v148 = vld [vmem:[%s0 + $0x428] sm:$0xff]
  %v149 = vld [vmem:[%s0 + $0x430] sm:$0xff]
  %v150 = vld [vmem:[%s0 + $0x438] sm:$0xff]
  %v151 = vld [vmem:[%s0 + $0x440] sm:$0xff]
  %v152 = vld [vmem:[%s0 + $0x448] sm:$0xff]
  %v153 = vld [vmem:[%s0 + $0x450] sm:$0xff]
  %v154 = vld [vmem:[%s0 + $0x458] sm:$0xff]
  %v155 = vld [vmem:[%s0 + $0x460] sm:$0xff]
  %v156 = vld [vmem:[%s0 + $0x468] sm:$0xff]
  %v157 = vld [vmem:[%s0 + $0x470] sm:$0xff]
  %v158 = vld [vmem:[%s0 + $0x478] sm:$0xff]
  %v159 = vld [vmem:[%s0 + $0x480] sm:$0xff]
  %v160 = vld [vmem:[%s0 + $0x488] sm:$0xff]
  %v161 = vld [vmem:[%s0 + $0x490] sm:$0xff]
  %v162 = vld [vmem:[%s0 + $0x498] sm:$0xff]
  %v163 = vld [vmem:[%s0 + $0x4a0] sm:$0xff]
  %v164 = vld [vmem:[%s0 + $0x4a8] sm:$0xff]
  %v165 = vld [vmem:[%s0 + $0x4b0] sm:$0xff]
  %v166 = vld [vmem:[%s0 + $0x4b8] sm:$0xff]
  %v167 = vld [vmem:[%s0 + $0x4c0] sm:$0xff]
  %v168 = vld [vmem:[%s0 + $0x4c8] sm:$0xff]
  %v169 = vld [vmem:[%s0 + $0x4d0] sm:$0xff]
  %v170 = vld [vmem:[%s0 + $0x4d8] sm:$0xff]
  %v171 = vld [vmem:[%s0 + $0x4e0] sm:$0xff]
  %v172 = vld [vmem:[%s0 + $0x4e8] sm:$0xff]
  %v173 = vld [vmem:[%s0 + $0x4f0] sm:$0xff]
  %v174 = vld [vmem:[%s0 + $0x4f8] sm:$0xff]
  %v175 = vld [vmem:[%s0 + $0x500] sm:$0xff]
  %v176 = vld [vmem:[%s0 + $0x508] sm:$0xff]
  %v177 = vld [vmem:[%s0 + $0x510] sm:$0xff]
  %v178 = vld [vmem:[%s0 + $0x518] sm:$0xff]
  %v179 = vld [vmem:[%s0 + $0x520] sm:$0xff]
  %v180 = vld [vmem:[%s0 + $0x528] sm:$0xff]
  %v181 = vld [vmem:[%s0 + $0x530] sm:$0xff]
  %v182 = vld [vmem:[%s0 + $0x538] sm:$0xff]
  %v183 = vld [vmem:[%s0 + $0x540] sm:$0xff]
  %v184 = vld [vmem:[%s0 + $0x548] sm:$0xff]
  %v185 = vld [vmem:[%s0 + $0x550] sm:$0xff]
  %v186 = vld [vmem:[%s0 + $0x558] sm:$0xff]
  %v187 = vld [vmem:[%s0 + $0x560] sm:$0xff]
  %v188 = vld [vmem:[%s0 + $0x568] sm:$0xff]
  %v189 = vld [vmem:[%s0 + $0x570] sm:$0xff]
  %v190 = vld [vmem:[%s0 + $0x578] sm:$0xff]
  %v191 = vld [vmem:[%s0 + $0x580] sm:$0xff]
  %v192 = vld [vmem:[%s0 + $0x588] sm:$0xff]
  %v193 = vld [vmem:[%s0 + $0x590] sm:$0xff]
  %v194 = vld [vmem:[%s0 + $0x598] sm:$0xff]
  %v195 = vld [vmem:[%s0 + $0x5a0] sm:$0xff]
  %v196 = vld [vmem:[%s0 + $0x5a8] sm:$0xff]
  %v197 = vld [vmem:[%s0 + $0x5b0] sm:$0xff]
  %v198 = vld [vmem:[%s0 + $0x5b8] sm:$0xff]
  %v199 = vld [vmem:[%s0 + $0x5c0] sm:$0xff]
  %v200 = vld [vmem:[%s0 + $0x5c8] sm:$0xff]
  %v201 = vld [vmem:[%s0 + $0x5d0] sm:$0xff]
  %v202 = vld [vmem:[%s0 + $0x5d8] sm:$0xff]
  %v203 = vld [vmem:[%s0 + $0x5e0] sm:$0xff]
  %v204 = vld [vmem:[%s0 + $0x5e8] sm:$0xff]
  %v205 = vld [vmem:[%s0 + $0x5f0] sm:$0xff]
  %v206 = vld [vmem:[%s0 + $0x5f8] sm:$0xff]
  %v207 = vld [vmem:[%s0 + $0x600] sm:$0xff]
  %v208 = vld [vmem:[%s0 + $0x608] sm:$0xff]
  %v209 = vld [vmem:[%s0 + $0x610] sm:$0xff]
  %v210 = vld [vmem:[%s0 + $0x618] sm:$0xff]
  %v211 = vpack.c.bf16 %v19, %v15
  %v212 = vpack.c.bf16 %v20, %v16
  %v213 = vpack.c.bf16 %v21, %v17
  %v214 = vpack.c.bf16 %v22, %v18
  %v215 = vpack.c.bf16 %v27, %v23
  %v216 = vpack.c.bf16 %v28, %v24
  %v217 = vpack.c.bf16 %v29, %v25
  %v218 = vpack.c.bf16 %v30, %v26
  %v219 = vpack.c.bf16 %v35, %v31
  %v220 = vpack.c.bf16 %v36, %v32
  %v221 = vpack.c.bf16 %v37, %v33
  %v222 = vpack.c.bf16 %v38, %v34
  %v223 = vpack.c.bf16 %v43, %v39
  %v224 = vpack.c.bf16 %v44, %v40
  %v225 = vpack.c.bf16 %v45, %v41
  %v226 = vpack.c.bf16 %v46, %v42
  %v227 = vpack.c.bf16 %v51, %v47
  %v228 = vpack.c.bf16 %v52, %v48
  %v229 = vpack.c.bf16 %v53, %v49
  %v230 = vpack.c.bf16 %v54, %v50
  %v231 = vpack.c.bf16 %v59, %v55
  %v232 = vpack.c.bf16 %v60, %v56
  %v233 = vpack.c.bf16 %v61, %v57
  %v234 = vpack.c.bf16 %v62, %v58
  %v235 = vpack.c.bf16 %v67, %v63
  %v236 = vpack.c.bf16 %v68, %v64
  %v237 = vpack.c.bf16 %v69, %v65
  %v238 = vpack.c.bf16 %v70, %v66
  %v239 = vpack.c.bf16 %v75, %v71
  %v240 = vpack.c.bf16 %v76, %v72
  %v241 = vpack.c.bf16 %v77, %v73
  %v242 = vpack.c.bf16 %v78, %v74
  %v243 = vpack.c.bf16 %v83, %v79
  %v244 = vpack.c.bf16 %v84, %v80
  %v245 = vpack.c.bf16 %v85, %v81
  %v246 = vpack.c.bf16 %v86, %v82
  %v247 = vpack.c.bf16 %v91, %v87
  %v248 = vpack.c.bf16 %v92, %v88
  %v249 = vpack.c.bf16 %v93, %v89
  %v250 = vpack.c.bf16 %v94, %v90
  %v251 = vpack.c.bf16 %v99, %v95
  %v252 = vpack.c.bf16 %v100, %v96
  %v253 = vpack.c.bf16 %v101, %v97
  %v254 = vpack.c.bf16 %v102, %v98
  %v255 = vpack.c.bf16 %v107, %v103
  %v256 = vpack.c.bf16 %v108, %v104
  %v257 = vpack.c.bf16 %v109, %v105
  %v258 = vpack.c.bf16 %v110, %v106
  %v259 = vpack.c.bf16 %v115, %v111
  %v260 = vpack.c.bf16 %v116, %v112
  %v261 = vpack.c.bf16 %v117, %v113
  %v262 = vpack.c.bf16 %v118, %v114
  %v263 = vpack.c.bf16 %v123, %v119
  %v264 = vpack.c.bf16 %v124, %v120
  %v265 = vpack.c.bf16 %v125, %v121
  %v266 = vpack.c.bf16 %v126, %v122
  %v267 = vpack.c.bf16 %v131, %v127
  %v268 = vpack.c.bf16 %v132, %v128
  %v269 = vpack.c.bf16 %v133, %v129
  %v270 = vpack.c.bf16 %v134, %v130
  %v271 = vpack.c.bf16 %v139, %v135
  %v272 = vpack.c.bf16 %v140, %v136
  %v273 = vpack.c.bf16 %v141, %v137
  %v274 = vpack.c.bf16 %v142, %v138
  %v275 = vpack.c.bf16 %v147, %v143
  %v276 = vpack.c.bf16 %v148, %v144
  %v277 = vpack.c.bf16 %v149, %v145
  %v278 = vpack.c.bf16 %v150, %v146
  %v279 = vpack.c.bf16 %v155, %v151
  %v280 = vpack.c.bf16 %v156, %v152
  %v281 = vpack.c.bf16 %v157, %v153
  %v282 = vpack.c.bf16 %v158, %v154
  %v283 = vpack.c.bf16 %v163, %v159
  %v284 = vpack.c.bf16 %v164, %v160
  %v285 = vpack.c.bf16 %v165, %v161
  %v286 = vpack.c.bf16 %v166, %v162
  %v287 = vpack.c.bf16 %v171, %v167
  %v288 = vpack.c.bf16 %v172, %v168
  %v289 = vpack.c.bf16 %v173, %v169
  %v290 = vpack.c.bf16 %v174, %v170
  %v291 = vpack.c.bf16 %v179, %v175
  %v292 = vpack.c.bf16 %v180, %v176
  %v293 = vpack.c.bf16 %v181, %v177
  %v294 = vpack.c.bf16 %v182, %v178
  %v295 = vpack.c.bf16 %v187, %v183
  %v296 = vpack.c.bf16 %v188, %v184
  %v297 = vpack.c.bf16 %v189, %v185
  %v298 = vpack.c.bf16 %v190, %v186
  %v299 = vpack.c.bf16 %v195, %v191
  %v300 = vpack.c.bf16 %v196, %v192
  %v301 = vpack.c.bf16 %v197, %v193
  %v302 = vpack.c.bf16 %v198, %v194
  %v303 = vpack.c.bf16 %v203, %v199
  %v304 = vpack.c.bf16 %v204, %v200
  %v305 = vpack.c.bf16 %v205, %v201
  %v306 = vpack.c.bf16 %v206, %v202
  %v307 = vpack.c.bf16 %v207, %v207
  %v308 = vpack.c.bf16 %v208, %v208
  %v309 = vpack.c.bf16 %v209, %v209
  %v310 = vpack.c.bf16 %v210, %v210
  %v311 = vld [vmem:[%s1] sm:$0xff]
  %v312 = vld [vmem:[%s1 + $0x8] sm:$0xff]
  %v313 = vld [vmem:[%s1 + $0x10] sm:$0xff]
  %v314 = vld [vmem:[%s1 + $0x18] sm:$0xff]
  %v315 = vld [vmem:[%s1 + $0x20] sm:$0xff]
  %v316 = vld [vmem:[%s1 + $0x28] sm:$0xff]
  %v317 = vld [vmem:[%s1 + $0x30] sm:$0xff]
  %v318 = vld [vmem:[%s1 + $0x38] sm:$0xff]
  %v319 = vld [vmem:[%s1 + $0x40] sm:$0xff]
  %v320 = vld [vmem:[%s1 + $0x48] sm:$0xff]
  %v321 = vld [vmem:[%s1 + $0x50] sm:$0xff]
  %v322 = vld [vmem:[%s1 + $0x58] sm:$0xff]
  %v323 = vld [vmem:[%s1 + $0x60] sm:$0xff]
  %v324 = vld [vmem:[%s1 + $0x68] sm:$0xff]
  %v325 = vld [vmem:[%s1 + $0x70] sm:$0xff]
  %v326 = vld [vmem:[%s1 + $0x78] sm:$0xff]
  %v327 = vld [vmem:[%s1 + $0x80] sm:$0xff]
  %v328 = vld [vmem:[%s1 + $0x88] sm:$0xff]
  %v329 = vld [vmem:[%s1 + $0x90] sm:$0xff]
  %v330 = vld [vmem:[%s1 + $0x98] sm:$0xff]
  %v331 = vld [vmem:[%s1 + $0xa0] sm:$0xff]
  %v332 = vld [vmem:[%s1 + $0xa8] sm:$0xff]
  %v333 = vld [vmem:[%s1 + $0xb0] sm:$0xff]
  %v334 = vld [vmem:[%s1 + $0xb8] sm:$0xff]
  %v335 = vld [vmem:[%s1 + $0xc0] sm:$0xff]
  %v336 = vld [vmem:[%s1 + $0xc8] sm:$0xff]
  %v337 = vld [vmem:[%s1 + $0xd0] sm:$0xff]
  %v338 = vld [vmem:[%s1 + $0xd8] sm:$0xff]
  %v339 = vld [vmem:[%s1 + $0xe0] sm:$0xff]
  %v340 = vld [vmem:[%s1 + $0xe8] sm:$0xff]
  %v341 = vld [vmem:[%s1 + $0xf0] sm:$0xff]
  %v342 = vld [vmem:[%s1 + $0xf8] sm:$0xff]
  %v343 = vld [vmem:[%s1 + $0x100] sm:$0xff]
  %v344 = vld [vmem:[%s1 + $0x108] sm:$0xff]
  %v345 = vld [vmem:[%s1 + $0x110] sm:$0xff]
  %v346 = vld [vmem:[%s1 + $0x118] sm:$0xff]
  %v347 = vld [vmem:[%s1 + $0x120] sm:$0xff]
  %v348 = vld [vmem:[%s1 + $0x128] sm:$0xff]
  %v349 = vld [vmem:[%s1 + $0x130] sm:$0xff]
  %v350 = vld [vmem:[%s1 + $0x138] sm:$0xff]
  %v351 = vld [vmem:[%s1 + $0x140] sm:$0xff]
  %v352 = vld [vmem:[%s1 + $0x148] sm:$0xff]
  %v353 = vld [vmem:[%s1 + $0x150] sm:$0xff]
  %v354 = vld [vmem:[%s1 + $0x158] sm:$0xff]
  %v355 = vld [vmem:[%s1 + $0x160] sm:$0xff]
  %v356 = vld [vmem:[%s1 + $0x168] sm:$0xff]
  %v357 = vld [vmem:[%s1 + $0x170] sm:$0xff]
  %v358 = vld [vmem:[%s1 + $0x178] sm:$0xff]
  %v359 = vld [vmem:[%s1 + $0x180] sm:$0xff]
  %v360 = vld [vmem:[%s1 + $0x188] sm:$0xff]
  %v361 = vld [vmem:[%s1 + $0x190] sm:$0xff]
  %v362 = vld [vmem:[%s1 + $0x198] sm:$0xff]
  %v363 = vld [vmem:[%s1 + $0x1a0] sm:$0xff]
  %v364 = vld [vmem:[%s1 + $0x1a8] sm:$0xff]
  %v365 = vld [vmem:[%s1 + $0x1b0] sm:$0xff]
  %v366 = vld [vmem:[%s1 + $0x1b8] sm:$0xff]
  %v367 = vld [vmem:[%s1 + $0x1c0] sm:$0xff]
  %v368 = vld [vmem:[%s1 + $0x1c8] sm:$0xff]
  %v369 = vld [vmem:[%s1 + $0x1d0] sm:$0xff]
  %v370 = vld [vmem:[%s1 + $0x1d8] sm:$0xff]
  %v371 = vld [vmem:[%s1 + $0x1e0] sm:$0xff]
  %v372 = vld [vmem:[%s1 + $0x1e8] sm:$0xff]
  %v373 = vld [vmem:[%s1 + $0x1f0] sm:$0xff]
  %v374 = vld [vmem:[%s1 + $0x1f8] sm:$0xff]
  %v375 = vpack.c.bf16 %v312, %v311
  %v376 = vpack.c.bf16 %v314, %v313
  %v377 = vpack.c.bf16 %v316, %v315
  %v378 = vpack.c.bf16 %v318, %v317
  %v379 = vpack.c.bf16 %v320, %v319
  %v380 = vpack.c.bf16 %v322, %v321
  %v381 = vpack.c.bf16 %v324, %v323
  %v382 = vpack.c.bf16 %v326, %v325
  %v383 = vpack.c.bf16 %v328, %v327
  %v384 = vpack.c.bf16 %v330, %v329
  %v385 = vpack.c.bf16 %v332, %v331
  %v386 = vpack.c.bf16 %v334, %v333
  %v387 = vpack.c.bf16 %v336, %v335
  %v388 = vpack.c.bf16 %v338, %v337
  %v389 = vpack.c.bf16 %v340, %v339
  %v390 = vpack.c.bf16 %v342, %v341
  %v391 = vpack.c.bf16 %v344, %v343
  %v392 = vpack.c.bf16 %v346, %v345
  %v393 = vpack.c.bf16 %v348, %v347
  %v394 = vpack.c.bf16 %v350, %v349
  %v395 = vpack.c.bf16 %v352, %v351
  %v396 = vpack.c.bf16 %v354, %v353
  %v397 = vpack.c.bf16 %v356, %v355
  %v398 = vpack.c.bf16 %v358, %v357
  %v399 = vpack.c.bf16 %v360, %v359
  %v400 = vpack.c.bf16 %v362, %v361
  %v401 = vpack.c.bf16 %v364, %v363
  %v402 = vpack.c.bf16 %v366, %v365
  %v403 = vpack.c.bf16 %v368, %v367
  %v404 = vpack.c.bf16 %v370, %v369
  %v405 = vpack.c.bf16 %v372, %v371
  %v406 = vpack.c.bf16 %v374, %v373
  %v407 = vld [vmem:[%s2] sm:$0x1]
  %v409 = vlaneseq
  %v410 = vshrl.u32 %v409, 7
  %v411 = vsub.s32 0, %v410
  %v412 = vrot.slane %v407, %v411
  %414 = vmatprep.subr.bf16.mxu0 0
  %415 = vmatpush1.bf16.msra.mxu0 %v382
  %416 = vmatprep.subr.bf16.mxu0 0
  %417 = vmatpush1.bf16.msra.mxu0 %v381
  %418 = vmatprep.subr.bf16.mxu0 0
  %419 = vmatpush1.bf16.msra.mxu0 %v380
  %420 = vmatprep.subr.bf16.mxu0 0
  %421 = vmatpush1.bf16.msra.mxu0 %v379
  %422 = vmatprep.subr.bf16.mxu0 0
  %423 = vmatpush1.bf16.msra.mxu0 %v378
  %424 = vmatprep.subr.bf16.mxu0 0
  %425 = vmatpush1.bf16.msra.mxu0 %v377
  %426 = vmatprep.subr.bf16.mxu0 0
  %427 = vmatpush1.bf16.msra.mxu0 %v376
  %428 = vmatprep.subr.bf16.mxu0 0
  %429 = vmatpush1.bf16.msra.mxu0 %v375
  %430 = vmatprep.subr.bf16.mxu0 0
  %431 = vmatpush2.bf16.msra.mxu0 %v390
  %432 = vmatprep.subr.bf16.mxu0 0
  %433 = vmatpush2.bf16.msra.mxu0 %v389
  %434 = vmatprep.subr.bf16.mxu0 0
  %435 = vmatpush2.bf16.msra.mxu0 %v388
  %436 = vmatprep.subr.bf16.mxu0 0
  %437 = vmatpush2.bf16.msra.mxu0 %v387
  %438 = vmatprep.subr.bf16.mxu0 0
  %439 = vmatpush2.bf16.msra.mxu0 %v386
  %440 = vmatprep.subr.bf16.mxu0 0
  %441 = vmatpush2.bf16.msra.mxu0 %v385
  %442 = vmatprep.subr.bf16.mxu0 0
  %443 = vmatpush2.bf16.msra.mxu0 %v384
  %444 = vmatprep.subr.bf16.mxu0 0
  %445 = vmatpush2.bf16.msra.mxu0 %v383
  %446 = vmatprep.mubr.bf16.mxu0 %v212
  %447 = vmatmul.mubr.bf16.gmra.mxu0 %v211
  %v448 = vpop.f32.mrf.mxu0
  %v449 = vadd.f32 %v412, %v448
  %v450 = vpop.f32.mrf.mxu0
  %v451 = vpop.f32.mrf.mxu0
  %v452 = vadd.f32 %v412, %v451
  %v453 = vpop.f32.mrf.mxu0
  %454 = vmatprep.mubr.bf16.mxu0 %v216
  %455 = vmatmul.mubr.bf16.gmra.mxu0 %v215
  %v456 = vpop.f32.mrf.mxu0
  %v457 = vadd.f32 %v412, %v456
  %v458 = vpop.f32.mrf.mxu0
  %v459 = vpop.f32.mrf.mxu0
  %v460 = vadd.f32 %v412, %v459
  %v461 = vpop.f32.mrf.mxu0
  %462 = vmatprep.mubr.bf16.mxu0 %v220
  %463 = vmatmul.mubr.bf16.gmra.mxu0 %v219
  %v464 = vpop.f32.mrf.mxu0
  %v465 = vadd.f32 %v412, %v464
  %v466 = vpop.f32.mrf.mxu0
  %v467 = vpop.f32.mrf.mxu0
  %v468 = vadd.f32 %v412, %v467
  %v469 = vpop.f32.mrf.mxu0
  %470 = vmatprep.mubr.bf16.mxu0 %v224
  %471 = vmatmul.mubr.bf16.gmra.mxu0 %v223
  %v472 = vpop.f32.mrf.mxu0
  %v473 = vadd.f32 %v412, %v472
  %v474 = vpop.f32.mrf.mxu0
  %v475 = vpop.f32.mrf.mxu0
  %v476 = vadd.f32 %v412, %v475
  %v477 = vpop.f32.mrf.mxu0
  %478 = vmatprep.mubr.bf16.mxu0 %v228
  %479 = vmatmul.mubr.bf16.gmra.mxu0 %v227
  %v480 = vpop.f32.mrf.mxu0
  %v481 = vadd.f32 %v412, %v480
  %v482 = vpop.f32.mrf.mxu0
  %v483 = vpop.f32.mrf.mxu0
  %v484 = vadd.f32 %v412, %v483
  %v485 = vpop.f32.mrf.mxu0
  %486 = vmatprep.mubr.bf16.mxu0 %v232
  %487 = vmatmul.mubr.bf16.gmra.mxu0 %v231
  %v488 = vpop.f32.mrf.mxu0
  %v489 = vadd.f32 %v412, %v488
  %v490 = vpop.f32.mrf.mxu0
  %v491 = vpop.f32.mrf.mxu0
  %v492 = vadd.f32 %v412, %v491
  %v493 = vpop.f32.mrf.mxu0
  %494 = vmatprep.mubr.bf16.mxu0 %v236
  %495 = vmatmul.mubr.bf16.gmra.mxu0 %v235
  %v496 = vpop.f32.mrf.mxu0
  %v497 = vadd.f32 %v412, %v496
  %v498 = vpop.f32.mrf.mxu0
  %v499 = vpop.f32.mrf.mxu0
  %v500 = vadd.f32 %v412, %v499
  %v501 = vpop.f32.mrf.mxu0
  %502 = vmatprep.mubr.bf16.mxu0 %v240
  %503 = vmatmul.mubr.bf16.gmra.mxu0 %v239
  %v504 = vpop.f32.mrf.mxu0
  %v505 = vadd.f32 %v412, %v504
  %v506 = vpop.f32.mrf.mxu0
  %v507 = vpop.f32.mrf.mxu0
  %v508 = vadd.f32 %v412, %v507
  %v509 = vpop.f32.mrf.mxu0
  %510 = vmatprep.mubr.bf16.mxu0 %v244
  %511 = vmatmul.mubr.bf16.gmra.mxu0 %v243
  %v512 = vpop.f32.mrf.mxu0
  %v513 = vadd.f32 %v412, %v512
  %v514 = vpop.f32.mrf.mxu0
  %v515 = vpop.f32.mrf.mxu0
  %v516 = vadd.f32 %v412, %v515
  %v517 = vpop.f32.mrf.mxu0
  %518 = vmatprep.mubr.bf16.mxu0 %v248
  %519 = vmatmul.mubr.bf16.gmra.mxu0 %v247
  %v520 = vpop.f32.mrf.mxu0
  %v521 = vadd.f32 %v412, %v520
  %v522 = vpop.f32.mrf.mxu0
  %v523 = vpop.f32.mrf.mxu0
  %v524 = vadd.f32 %v412, %v523
  %v525 = vpop.f32.mrf.mxu0
  %526 = vmatprep.mubr.bf16.mxu0 %v252
  %527 = vmatmul.mubr.bf16.gmra.mxu0 %v251
  %v528 = vpop.f32.mrf.mxu0
  %v529 = vadd.f32 %v412, %v528
  %v530 = vpop.f32.mrf.mxu0
  %v531 = vpop.f32.mrf.mxu0
  %v532 = vadd.f32 %v412, %v531
  %v533 = vpop.f32.mrf.mxu0
  %534 = vmatprep.mubr.bf16.mxu0 %v256
  %535 = vmatmul.mubr.bf16.gmra.mxu0 %v255
  %v536 = vpop.f32.mrf.mxu0
  %v537 = vadd.f32 %v412, %v536
  %v538 = vpop.f32.mrf.mxu0
  %v539 = vpop.f32.mrf.mxu0
  %v540 = vadd.f32 %v412, %v539
  %v541 = vpop.f32.mrf.mxu0
  %542 = vmatprep.mubr.bf16.mxu0 %v260
  %543 = vmatmul.mubr.bf16.gmra.mxu0 %v259
  %v544 = vpop.f32.mrf.mxu0
  %v545 = vadd.f32 %v412, %v544
  %v546 = vpop.f32.mrf.mxu0
  %v547 = vpop.f32.mrf.mxu0
  %v548 = vadd.f32 %v412, %v547
  %v549 = vpop.f32.mrf.mxu0
  %550 = vmatprep.mubr.bf16.mxu0 %v264
  %551 = vmatmul.mubr.bf16.gmra.mxu0 %v263
  %v552 = vpop.f32.mrf.mxu0
  %v553 = vadd.f32 %v412, %v552
  %v554 = vpop.f32.mrf.mxu0
  %v555 = vpop.f32.mrf.mxu0
  %v556 = vadd.f32 %v412, %v555
  %v557 = vpop.f32.mrf.mxu0
  %558 = vmatprep.mubr.bf16.mxu0 %v268
  %559 = vmatmul.mubr.bf16.gmra.mxu0 %v267
  %v560 = vpop.f32.mrf.mxu0
  %v561 = vadd.f32 %v412, %v560
  %v562 = vpop.f32.mrf.mxu0
  %v563 = vpop.f32.mrf.mxu0
  %v564 = vadd.f32 %v412, %v563
  %v565 = vpop.f32.mrf.mxu0
  %566 = vmatprep.mubr.bf16.mxu0 %v272
  %567 = vmatmul.mubr.bf16.gmra.mxu0 %v271
  %v568 = vpop.f32.mrf.mxu0
  %v569 = vadd.f32 %v412, %v568
  %v570 = vpop.f32.mrf.mxu0
  %v571 = vpop.f32.mrf.mxu0
  %v572 = vadd.f32 %v412, %v571
  %v573 = vpop.f32.mrf.mxu0
  %574 = vmatprep.mubr.bf16.mxu0 %v276
  %575 = vmatmul.mubr.bf16.gmra.mxu0 %v275
  %v576 = vpop.f32.mrf.mxu0
  %v577 = vadd.f32 %v412, %v576
  %v578 = vpop.f32.mrf.mxu0
  %v579 = vpop.f32.mrf.mxu0
  %v580 = vadd.f32 %v412, %v579
  %v581 = vpop.f32.mrf.mxu0
  %582 = vmatprep.mubr.bf16.mxu0 %v280
  %583 = vmatmul.mubr.bf16.gmra.mxu0 %v279
  %v584 = vpop.f32.mrf.mxu0
  %v585 = vadd.f32 %v412, %v584
  %v586 = vpop.f32.mrf.mxu0
  %v587 = vpop.f32.mrf.mxu0
  %v588 = vadd.f32 %v412, %v587
  %v589 = vpop.f32.mrf.mxu0
  %590 = vmatprep.mubr.bf16.mxu0 %v284
  %591 = vmatmul.mubr.bf16.gmra.mxu0 %v283
  %v592 = vpop.f32.mrf.mxu0
  %v593 = vadd.f32 %v412, %v592
  %v594 = vpop.f32.mrf.mxu0
  %v595 = vpop.f32.mrf.mxu0
  %v596 = vadd.f32 %v412, %v595
  %v597 = vpop.f32.mrf.mxu0
  %598 = vmatprep.mubr.bf16.mxu0 %v288
  %599 = vmatmul.mubr.bf16.gmra.mxu0 %v287
  %v600 = vpop.f32.mrf.mxu0
  %v601 = vadd.f32 %v412, %v600
  %v602 = vpop.f32.mrf.mxu0
  %v603 = vpop.f32.mrf.mxu0
  %v604 = vadd.f32 %v412, %v603
  %v605 = vpop.f32.mrf.mxu0
  %606 = vmatprep.mubr.bf16.mxu0 %v292
  %607 = vmatmul.mubr.bf16.gmra.mxu0 %v291
  %v608 = vpop.f32.mrf.mxu0
  %v609 = vadd.f32 %v412, %v608
  %v610 = vpop.f32.mrf.mxu0
  %v611 = vpop.f32.mrf.mxu0
  %v612 = vadd.f32 %v412, %v611
  %v613 = vpop.f32.mrf.mxu0
  %614 = vmatprep.mubr.bf16.mxu0 %v296
  %615 = vmatmul.mubr.bf16.gmra.mxu0 %v295
  %v616 = vpop.f32.mrf.mxu0
  %v617 = vadd.f32 %v412, %v616
  %v618 = vpop.f32.mrf.mxu0
  %v619 = vpop.f32.mrf.mxu0
  %v620 = vadd.f32 %v412, %v619
  %v621 = vpop.f32.mrf.mxu0
  %622 = vmatprep.mubr.bf16.mxu0 %v300
  %623 = vmatmul.mubr.bf16.gmra.mxu0 %v299
  %v624 = vpop.f32.mrf.mxu0
  %v625 = vadd.f32 %v412, %v624
  %v626 = vpop.f32.mrf.mxu0
  %v627 = vpop.f32.mrf.mxu0
  %v628 = vadd.f32 %v412, %v627
  %v629 = vpop.f32.mrf.mxu0
  %630 = vmatprep.mubr.bf16.mxu0 %v304
  %631 = vmatmul.mubr.bf16.gmra.mxu0 %v303
  %v632 = vpop.f32.mrf.mxu0
  %v633 = vadd.f32 %v412, %v632
  %v634 = vpop.f32.mrf.mxu0
  %v635 = vpop.f32.mrf.mxu0
  %v636 = vadd.f32 %v412, %v635
  %v637 = vpop.f32.mrf.mxu0
  %638 = vmatprep.mubr.bf16.mxu0 %v308
  %639 = vmatmul.mubr.bf16.gmra.mxu0 %v307
  %v640 = vpop.f32.mrf.mxu0
  %v641 = vadd.f32 %v412, %v640
  %v642 = vpop.f32.mrf.mxu0
  %v643 = vpop.f32.mrf.mxu0
  %v644 = vpop.f32.mrf.mxu0
  %645 = vdwg.mxu0
  %646 = vmatprep.subr.bf16.mxu0 0
  %647 = vmatpush1.bf16.msra.mxu0 %v398
  %648 = vmatprep.subr.bf16.mxu0 0
  %649 = vmatpush1.bf16.msra.mxu0 %v397
  %650 = vmatprep.subr.bf16.mxu0 0
  %651 = vmatpush1.bf16.msra.mxu0 %v396
  %652 = vmatprep.subr.bf16.mxu0 0
  %653 = vmatpush1.bf16.msra.mxu0 %v395
  %654 = vmatprep.subr.bf16.mxu0 0
  %655 = vmatpush1.bf16.msra.mxu0 %v394
  %656 = vmatprep.subr.bf16.mxu0 0
  %657 = vmatpush1.bf16.msra.mxu0 %v393
  %658 = vmatprep.subr.bf16.mxu0 0
  %659 = vmatpush1.bf16.msra.mxu0 %v392
  %660 = vmatprep.subr.bf16.mxu0 0
  %661 = vmatpush1.bf16.msra.mxu0 %v391
  %662 = vmatprep.subr.bf16.mxu0 0
  %663 = vmatpush2.bf16.msra.mxu0 %v406
  %664 = vmatprep.subr.bf16.mxu0 0
  %665 = vmatpush2.bf16.msra.mxu0 %v405
  %666 = vmatprep.subr.bf16.mxu0 0
  %667 = vmatpush2.bf16.msra.mxu0 %v404
  %668 = vmatprep.subr.bf16.mxu0 0
  %669 = vmatpush2.bf16.msra.mxu0 %v403
  %670 = vmatprep.subr.bf16.mxu0 0
  %671 = vmatpush2.bf16.msra.mxu0 %v402
  %672 = vmatprep.subr.bf16.mxu0 0
  %673 = vmatpush2.bf16.msra.mxu0 %v401
  %674 = vmatprep.subr.bf16.mxu0 0
  %675 = vmatpush2.bf16.msra.mxu0 %v400
  %676 = vmatprep.subr.bf16.mxu0 0
  %677 = vmatpush2.bf16.msra.mxu0 %v399
  %678 = vmatprep.mubr.bf16.mxu0 %v214
  %679 = vmatmul.mubr.bf16.gmra.mxu0 %v213
  %v680 = vpop.f32.mrf.mxu0
  %v681 = vadd.f32 %v449, %v680
  %v682 = vpop.f32.mrf.mxu0
  %v683 = vpop.f32.mrf.mxu0
  %v684 = vadd.f32 %v452, %v683
  %v685 = vpop.f32.mrf.mxu0
  %686 = vmatprep.mubr.bf16.mxu0 %v218
  %687 = vmatmul.mubr.bf16.gmra.mxu0 %v217
  %v688 = vpop.f32.mrf.mxu0
  %v689 = vadd.f32 %v457, %v688
  %v690 = vpop.f32.mrf.mxu0
  %v691 = vpop.f32.mrf.mxu0
  %v692 = vadd.f32 %v460, %v691
  %v693 = vpop.f32.mrf.mxu0
  %694 = vmatprep.mubr.bf16.mxu0 %v222
  %695 = vmatmul.mubr.bf16.gmra.mxu0 %v221
  %v696 = vpop.f32.mrf.mxu0
  %v697 = vadd.f32 %v465, %v696
  %v698 = vpop.f32.mrf.mxu0
  %v699 = vpop.f32.mrf.mxu0
  %v700 = vadd.f32 %v468, %v699
  %v701 = vpop.f32.mrf.mxu0
  %702 = vmatprep.mubr.bf16.mxu0 %v226
  %703 = vmatmul.mubr.bf16.gmra.mxu0 %v225
  %v704 = vpop.f32.mrf.mxu0
  %v705 = vadd.f32 %v473, %v704
  %v706 = vpop.f32.mrf.mxu0
  %v707 = vpop.f32.mrf.mxu0
  %v708 = vadd.f32 %v476, %v707
  %v709 = vpop.f32.mrf.mxu0
  %710 = vmatprep.mubr.bf16.mxu0 %v230
  %711 = vmatmul.mubr.bf16.gmra.mxu0 %v229
  %v712 = vpop.f32.mrf.mxu0
  %v713 = vadd.f32 %v481, %v712
  %v714 = vpop.f32.mrf.mxu0
  %v715 = vpop.f32.mrf.mxu0
  %v716 = vadd.f32 %v484, %v715
  %v717 = vpop.f32.mrf.mxu0
  %718 = vmatprep.mubr.bf16.mxu0 %v234
  %719 = vmatmul.mubr.bf16.gmra.mxu0 %v233
  %v720 = vpop.f32.mrf.mxu0
  %v721 = vadd.f32 %v489, %v720
  %v722 = vpop.f32.mrf.mxu0
  %v723 = vpop.f32.mrf.mxu0
  %v724 = vadd.f32 %v492, %v723
  %v725 = vpop.f32.mrf.mxu0
  %726 = vmatprep.mubr.bf16.mxu0 %v238
  %727 = vmatmul.mubr.bf16.gmra.mxu0 %v237
  %v728 = vpop.f32.mrf.mxu0
  %v729 = vadd.f32 %v497, %v728
  %v730 = vpop.f32.mrf.mxu0
  %v731 = vpop.f32.mrf.mxu0
  %v732 = vadd.f32 %v500, %v731
  %v733 = vpop.f32.mrf.mxu0
  %734 = vmatprep.mubr.bf16.mxu0 %v242
  %735 = vmatmul.mubr.bf16.gmra.mxu0 %v241
  %v736 = vpop.f32.mrf.mxu0
  %v737 = vadd.f32 %v505, %v736
  %v738 = vpop.f32.mrf.mxu0
  %v739 = vpop.f32.mrf.mxu0
  %v740 = vadd.f32 %v508, %v739
  %v741 = vpop.f32.mrf.mxu0
  %742 = vmatprep.mubr.bf16.mxu0 %v246
  %743 = vmatmul.mubr.bf16.gmra.mxu0 %v245
  %v744 = vpop.f32.mrf.mxu0
  %v745 = vadd.f32 %v513, %v744
  %v746 = vpop.f32.mrf.mxu0
  %v747 = vpop.f32.mrf.mxu0
  %v748 = vadd.f32 %v516, %v747
  %v749 = vpop.f32.mrf.mxu0
  %750 = vmatprep.mubr.bf16.mxu0 %v250
  %751 = vmatmul.mubr.bf16.gmra.mxu0 %v249
  %v752 = vpop.f32.mrf.mxu0
  %v753 = vadd.f32 %v521, %v752
  %v754 = vpop.f32.mrf.mxu0
  %v755 = vpop.f32.mrf.mxu0
  %v756 = vadd.f32 %v524, %v755
  %v757 = vpop.f32.mrf.mxu0
  %758 = vmatprep.mubr.bf16.mxu0 %v254
  %759 = vmatmul.mubr.bf16.gmra.mxu0 %v253
  %v760 = vpop.f32.mrf.mxu0
  %v761 = vadd.f32 %v529, %v760
  %v762 = vpop.f32.mrf.mxu0
  %v763 = vpop.f32.mrf.mxu0
  %v764 = vadd.f32 %v532, %v763
  %v765 = vpop.f32.mrf.mxu0
  %766 = vmatprep.mubr.bf16.mxu0 %v258
  %767 = vmatmul.mubr.bf16.gmra.mxu0 %v257
  %v768 = vpop.f32.mrf.mxu0
  %v769 = vadd.f32 %v537, %v768
  %v770 = vpop.f32.mrf.mxu0
  %v771 = vpop.f32.mrf.mxu0
  %v772 = vadd.f32 %v540, %v771
  %v773 = vpop.f32.mrf.mxu0
  %774 = vmatprep.mubr.bf16.mxu0 %v262
  %775 = vmatmul.mubr.bf16.gmra.mxu0 %v261
  %v776 = vpop.f32.mrf.mxu0
  %v777 = vadd.f32 %v545, %v776
  %v778 = vpop.f32.mrf.mxu0
  %v779 = vpop.f32.mrf.mxu0
  %v780 = vadd.f32 %v548, %v779
  %v781 = vpop.f32.mrf.mxu0
  %782 = vmatprep.mubr.bf16.mxu0 %v266
  %783 = vmatmul.mubr.bf16.gmra.mxu0 %v265
  %v784 = vpop.f32.mrf.mxu0
  %v785 = vadd.f32 %v553, %v784
  %v786 = vpop.f32.mrf.mxu0
  %v787 = vpop.f32.mrf.mxu0
  %v788 = vadd.f32 %v556, %v787
  %v789 = vpop.f32.mrf.mxu0
  %790 = vmatprep.mubr.bf16.mxu0 %v270
  %791 = vmatmul.mubr.bf16.gmra.mxu0 %v269
  %v792 = vpop.f32.mrf.mxu0
  %v793 = vadd.f32 %v561, %v792
  %v794 = vpop.f32.mrf.mxu0
  %v795 = vpop.f32.mrf.mxu0
  %v796 = vadd.f32 %v564, %v795
  %v797 = vpop.f32.mrf.mxu0
  %798 = vmatprep.mubr.bf16.mxu0 %v274
  %799 = vmatmul.mubr.bf16.gmra.mxu0 %v273
  %v800 = vpop.f32.mrf.mxu0
  %v801 = vadd.f32 %v569, %v800
  %v802 = vpop.f32.mrf.mxu0
  %v803 = vpop.f32.mrf.mxu0
  %v804 = vadd.f32 %v572, %v803
  %v805 = vpop.f32.mrf.mxu0
  %806 = vmatprep.mubr.bf16.mxu0 %v278
  %807 = vmatmul.mubr.bf16.gmra.mxu0 %v277
  %v808 = vpop.f32.mrf.mxu0
  %v809 = vadd.f32 %v577, %v808
  %v810 = vpop.f32.mrf.mxu0
  %v811 = vpop.f32.mrf.mxu0
  %v812 = vadd.f32 %v580, %v811
  %v813 = vpop.f32.mrf.mxu0
  %814 = vmatprep.mubr.bf16.mxu0 %v282
  %815 = vmatmul.mubr.bf16.gmra.mxu0 %v281
  %v816 = vpop.f32.mrf.mxu0
  %v817 = vadd.f32 %v585, %v816
  %v818 = vpop.f32.mrf.mxu0
  %v819 = vpop.f32.mrf.mxu0
  %v820 = vadd.f32 %v588, %v819
  %v821 = vpop.f32.mrf.mxu0
  %822 = vmatprep.mubr.bf16.mxu0 %v286
  %823 = vmatmul.mubr.bf16.gmra.mxu0 %v285
  %v824 = vpop.f32.mrf.mxu0
  %v825 = vadd.f32 %v593, %v824
  %v826 = vpop.f32.mrf.mxu0
  %v827 = vpop.f32.mrf.mxu0
  %v828 = vadd.f32 %v596, %v827
  %v829 = vpop.f32.mrf.mxu0
  %830 = vmatprep.mubr.bf16.mxu0 %v290
  %831 = vmatmul.mubr.bf16.gmra.mxu0 %v289
  %v832 = vpop.f32.mrf.mxu0
  %v833 = vadd.f32 %v601, %v832
  %v834 = vpop.f32.mrf.mxu0
  %v835 = vpop.f32.mrf.mxu0
  %v836 = vadd.f32 %v604, %v835
  %v837 = vpop.f32.mrf.mxu0
  %838 = vmatprep.mubr.bf16.mxu0 %v294
  %839 = vmatmul.mubr.bf16.gmra.mxu0 %v293
  %v840 = vpop.f32.mrf.mxu0
  %v841 = vadd.f32 %v609, %v840
  %v842 = vpop.f32.mrf.mxu0
  %v843 = vpop.f32.mrf.mxu0
  %v844 = vadd.f32 %v612, %v843
  %v845 = vpop.f32.mrf.mxu0
  %846 = vmatprep.mubr.bf16.mxu0 %v298
  %847 = vmatmul.mubr.bf16.gmra.mxu0 %v297
  %v848 = vpop.f32.mrf.mxu0
  %v849 = vadd.f32 %v617, %v848
  %v850 = vpop.f32.mrf.mxu0
  %v851 = vpop.f32.mrf.mxu0
  %v852 = vadd.f32 %v620, %v851
  %v853 = vpop.f32.mrf.mxu0
  %854 = vmatprep.mubr.bf16.mxu0 %v302
  %855 = vmatmul.mubr.bf16.gmra.mxu0 %v301
  %v856 = vpop.f32.mrf.mxu0
  %v857 = vadd.f32 %v625, %v856
  %v858 = vpop.f32.mrf.mxu0
  %v859 = vpop.f32.mrf.mxu0
  %v860 = vadd.f32 %v628, %v859
  %v861 = vpop.f32.mrf.mxu0
  %862 = vmatprep.mubr.bf16.mxu0 %v306
  %863 = vmatmul.mubr.bf16.gmra.mxu0 %v305
  %v864 = vpop.f32.mrf.mxu0
  %v865 = vadd.f32 %v633, %v864
  %v866 = vpop.f32.mrf.mxu0
  %v867 = vpop.f32.mrf.mxu0
  %v868 = vadd.f32 %v636, %v867
  %v869 = vpop.f32.mrf.mxu0
  %870 = vmatprep.mubr.bf16.mxu0 %v310
  %871 = vmatmul.mubr.bf16.gmra.mxu0 %v309
  %v872 = vpop.f32.mrf.mxu0
  %v873 = vadd.f32 %v641, %v872
  %v874 = vpop.f32.mrf.mxu0
  %v875 = vpop.f32.mrf.mxu0
  %v876 = vpop.f32.mrf.mxu0
  %877 = vdwg.mxu0
  %v878 = vmax.f32 %v681, 0.0
  %v879 = vmax.f32 %v684, 0.0
  %v880 = vmax.f32 %v689, 0.0
  %v881 = vmax.f32 %v692, 0.0
  %v882 = vmax.f32 %v697, 0.0
  %v883 = vmax.f32 %v700, 0.0
  %v884 = vmax.f32 %v705, 0.0
  %v885 = vmax.f32 %v708, 0.0
  %v886 = vmax.f32 %v713, 0.0
  %v887 = vmax.f32 %v716, 0.0
  %v888 = vmax.f32 %v721, 0.0
  %v889 = vmax.f32 %v724, 0.0
  %v890 = vmax.f32 %v729, 0.0
  %v891 = vmax.f32 %v732, 0.0
  %v892 = vmax.f32 %v737, 0.0
  %v893 = vmax.f32 %v740, 0.0
  %v894 = vmax.f32 %v745, 0.0
  %v895 = vmax.f32 %v748, 0.0
  %v896 = vmax.f32 %v753, 0.0
  %v897 = vmax.f32 %v756, 0.0
  %v898 = vmax.f32 %v761, 0.0
  %v899 = vmax.f32 %v764, 0.0
  %v900 = vmax.f32 %v769, 0.0
  %v901 = vmax.f32 %v772, 0.0
  %v902 = vmax.f32 %v777, 0.0
  %v903 = vmax.f32 %v780, 0.0
  %v904 = vmax.f32 %v785, 0.0
  %v905 = vmax.f32 %v788, 0.0
  %v906 = vmax.f32 %v793, 0.0
  %v907 = vmax.f32 %v796, 0.0
  %v908 = vmax.f32 %v801, 0.0
  %v909 = vmax.f32 %v804, 0.0
  %v910 = vmax.f32 %v809, 0.0
  %v911 = vmax.f32 %v812, 0.0
  %v912 = vmax.f32 %v817, 0.0
  %v913 = vmax.f32 %v820, 0.0
  %v914 = vmax.f32 %v825, 0.0
  %v915 = vmax.f32 %v828, 0.0
  %v916 = vmax.f32 %v833, 0.0
  %v917 = vmax.f32 %v836, 0.0
  %v918 = vmax.f32 %v841, 0.0
  %v919 = vmax.f32 %v844, 0.0
  %v920 = vmax.f32 %v849, 0.0
  %v921 = vmax.f32 %v852, 0.0
  %v922 = vmax.f32 %v857, 0.0
  %v923 = vmax.f32 %v860, 0.0
  %v924 = vmax.f32 %v865, 0.0
  %v925 = vmax.f32 %v868, 0.0
  %v926 = vmax.f32 %v873, 0.0
  %vm927 = vcmask 523264
  %928 = vst.msk [vmem:[%s3] sm:$0xff] %vm927, %v878
  %929 = vst.msk [vmem:[%s3 + $0x8] sm:$0xff] %vm927, %v879
  %930 = vst.msk [vmem:[%s3 + $0x10] sm:$0xff] %vm927, %v880
  %931 = vst.msk [vmem:[%s3 + $0x18] sm:$0xff] %vm927, %v881
  %932 = vst.msk [vmem:[%s3 + $0x20] sm:$0xff] %vm927, %v882
  %933 = vst.msk [vmem:[%s3 + $0x28] sm:$0xff] %vm927, %v883
  %934 = vst.msk [vmem:[%s3 + $0x30] sm:$0xff] %vm927, %v884
  %935 = vst.msk [vmem:[%s3 + $0x38] sm:$0xff] %vm927, %v885
  %936 = vst.msk [vmem:[%s3 + $0x40] sm:$0xff] %vm927, %v886
  %937 = vst.msk [vmem:[%s3 + $0x48] sm:$0xff] %vm927, %v887
  %938 = vst.msk [vmem:[%s3 + $0x50] sm:$0xff] %vm927, %v888
  %939 = vst.msk [vmem:[%s3 + $0x58] sm:$0xff] %vm927, %v889
  %940 = vst.msk [vmem:[%s3 + $0x60] sm:$0xff] %vm927, %v890
  %941 = vst.msk [vmem:[%s3 + $0x68] sm:$0xff] %vm927, %v891
  %942 = vst.msk [vmem:[%s3 + $0x70] sm:$0xff] %vm927, %v892
  %943 = vst.msk [vmem:[%s3 + $0x78] sm:$0xff] %vm927, %v893
  %944 = vst.msk [vmem:[%s3 + $0x80] sm:$0xff] %vm927, %v894
  %945 = vst.msk [vmem:[%s3 + $0x88] sm:$0xff] %vm927, %v895
  %946 = vst.msk [vmem:[%s3 + $0x90] sm:$0xff] %vm927, %v896
  %947 = vst.msk [vmem:[%s3 + $0x98] sm:$0xff] %vm927, %v897
  %948 = vst.msk [vmem:[%s3 + $0xa0] sm:$0xff] %vm927, %v898
  %949 = vst.msk [vmem:[%s3 + $0xa8] sm:$0xff] %vm927, %v899
  %950 = vst.msk [vmem:[%s3 + $0xb0] sm:$0xff] %vm927, %v900
  %951 = vst.msk [vmem:[%s3 + $0xb8] sm:$0xff] %vm927, %v901
  %952 = vst.msk [vmem:[%s3 + $0xc0] sm:$0xff] %vm927, %v902
  %953 = vst.msk [vmem:[%s3 + $0xc8] sm:$0xff] %vm927, %v903
  %954 = vst.msk [vmem:[%s3 + $0xd0] sm:$0xff] %vm927, %v904
  %955 = vst.msk [vmem:[%s3 + $0xd8] sm:$0xff] %vm927, %v905
  %956 = vst.msk [vmem:[%s3 + $0xe0] sm:$0xff] %vm927, %v906
  %957 = vst.msk [vmem:[%s3 + $0xe8] sm:$0xff] %vm927, %v907
  %958 = vst.msk [vmem:[%s3 + $0xf0] sm:$0xff] %vm927, %v908
  %959 = vst.msk [vmem:[%s3 + $0xf8] sm:$0xff] %vm927, %v909
  %960 = vst.msk [vmem:[%s3 + $0x100] sm:$0xff] %vm927, %v910
  %961 = vst.msk [vmem:[%s3 + $0x108] sm:$0xff] %vm927, %v911
  %962 = vst.msk [vmem:[%s3 + $0x110] sm:$0xff] %vm927, %v912
  %963 = vst.msk [vmem:[%s3 + $0x118] sm:$0xff] %vm927, %v913
  %964 = vst.msk [vmem:[%s3 + $0x120] sm:$0xff] %vm927, %v914
  %965 = vst.msk [vmem:[%s3 + $0x128] sm:$0xff] %vm927, %v915
  %966 = vst.msk [vmem:[%s3 + $0x130] sm:$0xff] %vm927, %v916
  %967 = vst.msk [vmem:[%s3 + $0x138] sm:$0xff] %vm927, %v917
  %968 = vst.msk [vmem:[%s3 + $0x140] sm:$0xff] %vm927, %v918
  %969 = vst.msk [vmem:[%s3 + $0x148] sm:$0xff] %vm927, %v919
  %970 = vst.msk [vmem:[%s3 + $0x150] sm:$0xff] %vm927, %v920
  %971 = vst.msk [vmem:[%s3 + $0x158] sm:$0xff] %vm927, %v921
  %972 = vst.msk [vmem:[%s3 + $0x160] sm:$0xff] %vm927, %v922
  %973 = vst.msk [vmem:[%s3 + $0x168] sm:$0xff] %vm927, %v923
  %974 = vst.msk [vmem:[%s3 + $0x170] sm:$0xff] %vm927, %v924
  %975 = vst.msk [vmem:[%s3 + $0x178] sm:$0xff] %vm927, %v925
  %976 = vst.msk [vmem:[%s3 + $0x180] sm:$0xff] %vm927, %v926
  // Predicated region
  $region14: #{visual_encoder_forward.5} parent=0 // pred_check
    _
  $region15: #{visual_encoder_forward.5} parent=0 // pred_check_branch
    %978 = sbr.rel (0) target = $region17
  $region16: #{visual_encoder_forward.5} parent=0 // pred_region
    _
  $region17: #{visual_encoder_forward.5} parent=0 // pred_fallthru
    _
  // Predicated region
  $region18: #{visual_encoder_forward.5} parent=0 // pred_check
    _
  $region19: #{visual_encoder_forward.5} parent=0 // pred_check_branch
    %980 = sbr.rel (0) target = $region21
  $region20: #{visual_encoder_forward.5} parent=0 // pred_region
    _
  $region21: #{visual_encoder_forward.5} parent=0 // pred_fallthru
    _

// kernel: visual_encoder_forward.6
$region0: #{visual_encoder_forward.6}
  #allocation0 [shape = 'u32[]', space=smem, size = 0x4, offset = 0x4, fixed_abs, tag = 'smem constant byte address 0x4 - core index']
  #allocation1 [shape = 'u32[144,128]{1,0:T(1,128)}', space=vmem, size = 0x12000, scoped, tag = 'internal scratch']
  %s0 = inlined_call_operand.vmem [shape: f32[72,1024], index: 0, kind: input, shape index: {}]
  %s1 = inlined_call_operand.vmem [shape: f32[1024,128], index: 1, kind: input, shape index: {}]
  %s2 = inlined_call_operand.vmem [shape: f32[1,128], index: 2, kind: input, shape index: {}]
  %s3 = inlined_call_operand.vmem [shape: f32[72,128], index: 3, kind: output, shape index: {}]
  %s4 = sld [smem:[#allocation0]]
  $region22: #{visual_encoder_forward.6} parent=0
    _
  %s6 = ssub.s32 1, %s4
  %s7 = scalar_select 0, %s6, %s4
  // Predicated region
  $region2: #{visual_encoder_forward.6} parent=0 // pred_check
    _
  $region3: #{visual_encoder_forward.6} parent=0 // pred_check_branch
    %9 = sbr.rel (0) target = $region5
  $region4: #{visual_encoder_forward.6} parent=0 // pred_region
    _
  $region5: #{visual_encoder_forward.6} parent=0 // pred_fallthru
    _
  // Predicated region
  $region6: #{visual_encoder_forward.6} parent=0 // pred_check
    _
  $region7: #{visual_encoder_forward.6} parent=0 // pred_check_branch
    %11 = sbr.rel (0) target = $region9
  $region8: #{visual_encoder_forward.6} parent=0 // pred_region
    _
  $region9: #{visual_encoder_forward.6} parent=0 // pred_fallthru
    _
  // Predicated region
  $region10: #{visual_encoder_forward.6} parent=0 // pred_check
    _
  $region11: #{visual_encoder_forward.6} parent=0 // pred_check_branch
    %13 = sbr.rel (0) target = $region13
  $region12: #{visual_encoder_forward.6} parent=0 // pred_region
    _
  $region13: #{visual_encoder_forward.6} parent=0 // pred_fallthru
    _
  %v15 = vld [vmem:[%s0] sm:$0xff]
  %v16 = vld [vmem:[%s0 + $0x8] sm:$0xff]
  %v17 = vld [vmem:[%s0 + $0x10] sm:$0xff]
  %v18 = vld [vmem:[%s0 + $0x18] sm:$0xff]
  %v19 = vld [vmem:[%s0 + $0x20] sm:$0xff]
  %v20 = vld [vmem:[%s0 + $0x28] sm:$0xff]
  %v21 = vld [vmem:[%s0 + $0x30] sm:$0xff]
  %v22 = vld [vmem:[%s0 + $0x38] sm:$0xff]
  %v23 = vld [vmem:[%s0 + $0x40] sm:$0xff]
  %v24 = vld [vmem:[%s0 + $0x48] sm:$0xff]
  %v25 = vld [vmem:[%s0 + $0x50] sm:$0xff]
  %v26 = vld [vmem:[%s0 + $0x58] sm:$0xff]
  %v27 = vld [vmem:[%s0 + $0x60] sm:$0xff]
  %v28 = vld [vmem:[%s0 + $0x68] sm:$0xff]
  %v29 = vld [vmem:[%s0 + $0x70] sm:$0xff]
  %v30 = vld [vmem:[%s0 + $0x78] sm:$0xff]
  %v31 = vld [vmem:[%s0 + $0x80] sm:$0xff]
  %v32 = vld [vmem:[%s0 + $0x88] sm:$0xff]
  %v33 = vld [vmem:[%s0 + $0x90] sm:$0xff]
  %v34 = vld [vmem:[%s0 + $0x98] sm:$0xff]
  %v35 = vld [vmem:[%s0 + $0xa0] sm:$0xff]
  %v36 = vld [vmem:[%s0 + $0xa8] sm:$0xff]
  %v37 = vld [vmem:[%s0 + $0xb0] sm:$0xff]
  %v38 = vld [vmem:[%s0 + $0xb8] sm:$0xff]
  %v39 = vld [vmem:[%s0 + $0xc0] sm:$0xff]
  %v40 = vld [vmem:[%s0 + $0xc8] sm:$0xff]
  %v41 = vld [vmem:[%s0 + $0xd0] sm:$0xff]
  %v42 = vld [vmem:[%s0 + $0xd8] sm:$0xff]
  %v43 = vld [vmem:[%s0 + $0xe0] sm:$0xff]
  %v44 = vld [vmem:[%s0 + $0xe8] sm:$0xff]
  %v45 = vld [vmem:[%s0 + $0xf0] sm:$0xff]
  %v46 = vld [vmem:[%s0 + $0xf8] sm:$0xff]
  %v47 = vld [vmem:[%s0 + $0x100] sm:$0xff]
  %v48 = vld [vmem:[%s0 + $0x108] sm:$0xff]
  %v49 = vld [vmem:[%s0 + $0x110] sm:$0xff]
  %v50 = vld [vmem:[%s0 + $0x118] sm:$0xff]
  %v51 = vld [vmem:[%s0 + $0x120] sm:$0xff]
  %v52 = vld [vmem:[%s0 + $0x128] sm:$0xff]
  %v53 = vld [vmem:[%s0 + $0x130] sm:$0xff]
  %v54 = vld [vmem:[%s0 + $0x138] sm:$0xff]
  %v55 = vld [vmem:[%s0 + $0x140] sm:$0xff]
  %v56 = vld [vmem:[%s0 + $0x148] sm:$0xff]
  %v57 = vld [vmem:[%s0 + $0x150] sm:$0xff]
  %v58 = vld [vmem:[%s0 + $0x158] sm:$0xff]
  %v59 = vld [vmem:[%s0 + $0x160] sm:$0xff]
  %v60 = vld [vmem:[%s0 + $0x168] sm:$0xff]
  %v61 = vld [vmem:[%s0 + $0x170] sm:$0xff]
  %v62 = vld [vmem:[%s0 + $0x178] sm:$0xff]
  %v63 = vld [vmem:[%s0 + $0x180] sm:$0xff]
  %v64 = vld [vmem:[%s0 + $0x188] sm:$0xff]
  %v65 = vld [vmem:[%s0 + $0x190] sm:$0xff]
  %v66 = vld [vmem:[%s0 + $0x198] sm:$0xff]
  %v67 = vld [vmem:[%s0 + $0x1a0] sm:$0xff]
  %v68 = vld [vmem:[%s0 + $0x1a8] sm:$0xff]
  %v69 = vld [vmem:[%s0 + $0x1b0] sm:$0xff]
  %v70 = vld [vmem:[%s0 + $0x1b8] sm:$0xff]
  %v71 = vld [vmem:[%s0 + $0x1c0] sm:$0xff]
  %v72 = vld [vmem:[%s0 + $0x1c8] sm:$0xff]
  %v73 = vld [vmem:[%s0 + $0x1d0] sm:$0xff]
  %v74 = vld [vmem:[%s0 + $0x1d8] sm:$0xff]
  %v75 = vld [vmem:[%s0 + $0x1e0] sm:$0xff]
  %v76 = vld [vmem:[%s0 + $0x1e8] sm:$0xff]
  %v77 = vld [vmem:[%s0 + $0x1f0] sm:$0xff]
  %v78 = vld [vmem:[%s0 + $0x1f8] sm:$0xff]
  %v79 = vld [vmem:[%s0 + $0x200] sm:$0xff]
  %v80 = vld [vmem:[%s0 + $0x208] sm:$0xff]
  %v81 = vld [vmem:[%s0 + $0x210] sm:$0xff]
  %v82 = vld [vmem:[%s0 + $0x218] sm:$0xff]
  %v83 = vld [vmem:[%s0 + $0x220] sm:$0xff]
  %v84 = vld [vmem:[%s0 + $0x228] sm:$0xff]
  %v85 = vld [vmem:[%s0 + $0x230] sm:$0xff]
  %v86 = vld [vmem:[%s0 + $0x238] sm:$0xff]
  %v87 = vpack.c.bf16 %v23, %v15
  %v88 = vpack.c.bf16 %v24, %v16
  %v89 = vpack.c.bf16 %v25, %v17
  %v90 = vpack.c.bf16 %v26, %v18
  %v91 = vpack.c.bf16 %v27, %v19
  %v92 = vpack.c.bf16 %v28, %v20
  %v93 = vpack.c.bf16 %v29, %v21
  %v94 = vpack.c.bf16 %v30, %v22
  %v95 = vpack.c.bf16 %v39, %v31
  %v96 = vpack.c.bf16 %v40, %v32
  %v97 = vpack.c.bf16 %v41, %v33
  %v98 = vpack.c.bf16 %v42, %v34
  %v99 = vpack.c.bf16 %v43, %v35
  %v100 = vpack.c.bf16 %v44, %v36
  %v101 = vpack.c.bf16 %v45, %v37
  %v102 = vpack.c.bf16 %v46, %v38
  %v103 = vpack.c.bf16 %v55, %v47
  %v104 = vpack.c.bf16 %v56, %v48
  %v105 = vpack.c.bf16 %v57, %v49
  %v106 = vpack.c.bf16 %v58, %v50
  %v107 = vpack.c.bf16 %v59, %v51
  %v108 = vpack.c.bf16 %v60, %v52
  %v109 = vpack.c.bf16 %v61, %v53
  %v110 = vpack.c.bf16 %v62, %v54
  %v111 = vpack.c.bf16 %v71, %v63
  %v112 = vpack.c.bf16 %v72, %v64
  %v113 = vpack.c.bf16 %v73, %v65
  %v114 = vpack.c.bf16 %v74, %v66
  %v115 = vpack.c.bf16 %v75, %v67
  %v116 = vpack.c.bf16 %v76, %v68
  %v117 = vpack.c.bf16 %v77, %v69
  %v118 = vpack.c.bf16 %v78, %v70
  %v119 = vpack.c.bf16 %v79, %v79
  %v120 = vpack.c.bf16 %v80, %v80
  %v121 = vpack.c.bf16 %v81, %v81
  %v122 = vpack.c.bf16 %v82, %v82
  %v123 = vpack.c.bf16 %v83, %v83
  %v124 = vpack.c.bf16 %v84, %v84
  %v125 = vpack.c.bf16 %v85, %v85
  %v126 = vpack.c.bf16 %v86, %v86
  %v127 = vld [vmem:[%s1] sm:$0xff]
  %v128 = vld [vmem:[%s1 + $0x8] sm:$0xff]
  %v129 = vld [vmem:[%s1 + $0x10] sm:$0xff]
  %v130 = vld [vmem:[%s1 + $0x18] sm:$0xff]
  %v131 = vld [vmem:[%s1 + $0x20] sm:$0xff]
  %v132 = vld [vmem:[%s1 + $0x28] sm:$0xff]
  %v133 = vld [vmem:[%s1 + $0x30] sm:$0xff]
  %v134 = vld [vmem:[%s1 + $0x38] sm:$0xff]
  %v135 = vld [vmem:[%s1 + $0x40] sm:$0xff]
  %v136 = vld [vmem:[%s1 + $0x48] sm:$0xff]
  %v137 = vld [vmem:[%s1 + $0x50] sm:$0xff]
  %v138 = vld [vmem:[%s1 + $0x58] sm:$0xff]
  %v139 = vld [vmem:[%s1 + $0x60] sm:$0xff]
  %v140 = vld [vmem:[%s1 + $0x68] sm:$0xff]
  %v141 = vld [vmem:[%s1 + $0x70] sm:$0xff]
  %v142 = vld [vmem:[%s1 + $0x78] sm:$0xff]
  %v143 = vld [vmem:[%s1 + $0x80] sm:$0xff]
  %v144 = vld [vmem:[%s1 + $0x88] sm:$0xff]
  %v145 = vld [vmem:[%s1 + $0x90] sm:$0xff]
  %v146 = vld [vmem:[%s1 + $0x98] sm:$0xff]
  %v147 = vld [vmem:[%s1 + $0xa0] sm:$0xff]
  %v148 = vld [vmem:[%s1 + $0xa8] sm:$0xff]
  %v149 = vld [vmem:[%s1 + $0xb0] sm:$0xff]
  %v150 = vld [vmem:[%s1 + $0xb8] sm:$0xff]
  %v151 = vld [vmem:[%s1 + $0xc0] sm:$0xff]
  %v152 = vld [vmem:[%s1 + $0xc8] sm:$0xff]
  %v153 = vld [vmem:[%s1 + $0xd0] sm:$0xff]
  %v154 = vld [vmem:[%s1 + $0xd8] sm:$0xff]
  %v155 = vld [vmem:[%s1 + $0xe0] sm:$0xff]
  %v156 = vld [vmem:[%s1 + $0xe8] sm:$0xff]
  %v157 = vld [vmem:[%s1 + $0xf0] sm:$0xff]
  %v158 = vld [vmem:[%s1 + $0xf8] sm:$0xff]
  %v159 = vld [vmem:[%s1 + $0x100] sm:$0xff]
  %v160 = vld [vmem:[%s1 + $0x108] sm:$0xff]
  %v161 = vld [vmem:[%s1 + $0x110] sm:$0xff]
  %v162 = vld [vmem:[%s1 + $0x118] sm:$0xff]
  %v163 = vld [vmem:[%s1 + $0x120] sm:$0xff]
  %v164 = vld [vmem:[%s1 + $0x128] sm:$0xff]
  %v165 = vld [vmem:[%s1 + $0x130] sm:$0xff]
  %v166 = vld [vmem:[%s1 + $0x138] sm:$0xff]
  %v167 = vld [vmem:[%s1 + $0x140] sm:$0xff]
  %v168 = vld [vmem:[%s1 + $0x148] sm:$0xff]
  %v169 = vld [vmem:[%s1 + $0x150] sm:$0xff]
  %v170 = vld [vmem:[%s1 + $0x158] sm:$0xff]
  %v171 = vld [vmem:[%s1 + $0x160] sm:$0xff]
  %v172 = vld [vmem:[%s1 + $0x168] sm:$0xff]
  %v173 = vld [vmem:[%s1 + $0x170] sm:$0xff]
  %v174 = vld [vmem:[%s1 + $0x178] sm:$0xff]
  %v175 = vld [vmem:[%s1 + $0x180] sm:$0xff]
  %v176 = vld [vmem:[%s1 + $0x188] sm:$0xff]
  %v177 = vld [vmem:[%s1 + $0x190] sm:$0xff]
  %v178 = vld [vmem:[%s1 + $0x198] sm:$0xff]
  %v179 = vld [vmem:[%s1 + $0x1a0] sm:$0xff]
  %v180 = vld [vmem:[%s1 + $0x1a8] sm:$0xff]
  %v181 = vld [vmem:[%s1 + $0x1b0] sm:$0xff]
  %v182 = vld [vmem:[%s1 + $0x1b8] sm:$0xff]
  %v183 = vld [vmem:[%s1 + $0x1c0] sm:$0xff]
  %v184 = vld [vmem:[%s1 + $0x1c8] sm:$0xff]
  %v185 = vld [vmem:[%s1 + $0x1d0] sm:$0xff]
  %v186 = vld [vmem:[%s1 + $0x1d8] sm:$0xff]
  %v187 = vld [vmem:[%s1 + $0x1e0] sm:$0xff]
  %v188 = vld [vmem:[%s1 + $0x1e8] sm:$0xff]
  %v189 = vld [vmem:[%s1 + $0x1f0] sm:$0xff]
  %v190 = vld [vmem:[%s1 + $0x1f8] sm:$0xff]
  %v191 = vld [vmem:[%s1 + $0x200] sm:$0xff]
  %v192 = vld [vmem:[%s1 + $0x208] sm:$0xff]
  %v193 = vld [vmem:[%s1 + $0x210] sm:$0xff]
  %v194 = vld [vmem:[%s1 + $0x218] sm:$0xff]
  %v195 = vld [vmem:[%s1 + $0x220] sm:$0xff]
  %v196 = vld [vmem:[%s1 + $0x228] sm:$0xff]
  %v197 = vld [vmem:[%s1 + $0x230] sm:$0xff]
  %v198 = vld [vmem:[%s1 + $0x238] sm:$0xff]
  %v199 = vld [vmem:[%s1 + $0x240] sm:$0xff]
  %v200 = vld [vmem:[%s1 + $0x248] sm:$0xff]
  %v201 = vld [vmem:[%s1 + $0x250] sm:$0xff]
  %v202 = vld [vmem:[%s1 + $0x258] sm:$0xff]
  %v203 = vld [vmem:[%s1 + $0x260] sm:$0xff]
  %v204 = vld [vmem:[%s1 + $0x268] sm:$0xff]
  %v205 = vld [vmem:[%s1 + $0x270] sm:$0xff]
  %v206 = vld [vmem:[%s1 + $0x278] sm:$0xff]
  %v207 = vld [vmem:[%s1 + $0x280] sm:$0xff]
  %v208 = vld [vmem:[%s1 + $0x288] sm:$0xff]
  %v209 = vld [vmem:[%s1 + $0x290] sm:$0xff]
  %v210 = vld [vmem:[%s1 + $0x298] sm:$0xff]
  %v211 = vld [vmem:[%s1 + $0x2a0] sm:$0xff]
  %v212 = vld [vmem:[%s1 + $0x2a8] sm:$0xff]
  %v213 = vld [vmem:[%s1 + $0x2b0] sm:$0xff]
  %v214 = vld [vmem:[%s1 + $0x2b8] sm:$0xff]
  %v215 = vld [vmem:[%s1 + $0x2c0] sm:$0xff]
  %v216 = vld [vmem:[%s1 + $0x2c8] sm:$0xff]
  %v217 = vld [vmem:[%s1 + $0x2d0] sm:$0xff]
  %v218 = vld [vmem:[%s1 + $0x2d8] sm:$0xff]
  %v219 = vld [vmem:[%s1 + $0x2e0] sm:$0xff]
  %v220 = vld [vmem:[%s1 + $0x2e8] sm:$0xff]
  %v221 = vld [vmem:[%s1 + $0x2f0] sm:$0xff]
  %v222 = vld [vmem:[%s1 + $0x2f8] sm:$0xff]
  %v223 = vld [vmem:[%s1 + $0x300] sm:$0xff]
  %v224 = vld [vmem:[%s1 + $0x308] sm:$0xff]
  %v225 = vld [vmem:[%s1 + $0x310] sm:$0xff]
  %v226 = vld [vmem:[%s1 + $0x318] sm:$0xff]
  %v227 = vld [vmem:[%s1 + $0x320] sm:$0xff]
  %v228 = vld [vmem:[%s1 + $0x328] sm:$0xff]
  %v229 = vld [vmem:[%s1 + $0x330] sm:$0xff]
  %v230 = vld [vmem:[%s1 + $0x338] sm:$0xff]
  %v231 = vld [vmem:[%s1 + $0x340] sm:$0xff]
  %v232 = vld [vmem:[%s1 + $0x348] sm:$0xff]
  %v233 = vld [vmem:[%s1 + $0x350] sm:$0xff]
  %v234 = vld [vmem:[%s1 + $0x358] sm:$0xff]
  %v235 = vld [vmem:[%s1 + $0x360] sm:$0xff]
  %v236 = vld [vmem:[%s1 + $0x368] sm:$0xff]
  %v237 = vld [vmem:[%s1 + $0x370] sm:$0xff]
  %v238 = vld [vmem:[%s1 + $0x378] sm:$0xff]
  %v239 = vld [vmem:[%s1 + $0x380] sm:$0xff]
  %v240 = vld [vmem:[%s1 + $0x388] sm:$0xff]
  %v241 = vld [vmem:[%s1 + $0x390] sm:$0xff]
  %v242 = vld [vmem:[%s1 + $0x398] sm:$0xff]
  %v243 = vld [vmem:[%s1 + $0x3a0] sm:$0xff]
  %v244 = vld [vmem:[%s1 + $0x3a8] sm:$0xff]
  %v245 = vld [vmem:[%s1 + $0x3b0] sm:$0xff]
  %v246 = vld [vmem:[%s1 + $0x3b8] sm:$0xff]
  %v247 = vld [vmem:[%s1 + $0x3c0] sm:$0xff]
  %v248 = vld [vmem:[%s1 + $0x3c8] sm:$0xff]
  %v249 = vld [vmem:[%s1 + $0x3d0] sm:$0xff]
  %v250 = vld [vmem:[%s1 + $0x3d8] sm:$0xff]
  %v251 = vld [vmem:[%s1 + $0x3e0] sm:$0xff]
  %v252 = vld [vmem:[%s1 + $0x3e8] sm:$0xff]
  %v253 = vld [vmem:[%s1 + $0x3f0] sm:$0xff]
  %v254 = vld [vmem:[%s1 + $0x3f8] sm:$0xff]
  %v255 = vpack.c.bf16 %v128, %v127
  %v256 = vpack.c.bf16 %v130, %v129
  %v257 = vpack.c.bf16 %v132, %v131
  %v258 = vpack.c.bf16 %v134, %v133
  %v259 = vpack.c.bf16 %v136, %v135
  %v260 = vpack.c.bf16 %v138, %v137
  %v261 = vpack.c.bf16 %v140, %v139
  %v262 = vpack.c.bf16 %v142, %v141
  %v263 = vpack.c.bf16 %v144, %v143
  %v264 = vpack.c.bf16 %v146, %v145
  %v265 = vpack.c.bf16 %v148, %v147
  %v266 = vpack.c.bf16 %v150, %v149
  %v267 = vpack.c.bf16 %v152, %v151
  %v268 = vpack.c.bf16 %v154, %v153
  %v269 = vpack.c.bf16 %v156, %v155
  %v270 = vpack.c.bf16 %v158, %v157
  %v271 = vpack.c.bf16 %v160, %v159
  %v272 = vpack.c.bf16 %v162, %v161
  %v273 = vpack.c.bf16 %v164, %v163
  %v274 = vpack.c.bf16 %v166, %v165
  %v275 = vpack.c.bf16 %v168, %v167
  %v276 = vpack.c.bf16 %v170, %v169
  %v277 = vpack.c.bf16 %v172, %v171
  %v278 = vpack.c.bf16 %v174, %v173
  %v279 = vpack.c.bf16 %v176, %v175
  %v280 = vpack.c.bf16 %v178, %v177
  %v281 = vpack.c.bf16 %v180, %v179
  %v282 = vpack.c.bf16 %v182, %v181
  %v283 = vpack.c.bf16 %v184, %v183
  %v284 = vpack.c.bf16 %v186, %v185
  %v285 = vpack.c.bf16 %v188, %v187
  %v286 = vpack.c.bf16 %v190, %v189
  %v287 = vpack.c.bf16 %v192, %v191
  %v288 = vpack.c.bf16 %v194, %v193
  %v289 = vpack.c.bf16 %v196, %v195
  %v290 = vpack.c.bf16 %v198, %v197
  %v291 = vpack.c.bf16 %v200, %v199
  %v292 = vpack.c.bf16 %v202, %v201
  %v293 = vpack.c.bf16 %v204, %v203
  %v294 = vpack.c.bf16 %v206, %v205
  %v295 = vpack.c.bf16 %v208, %v207
  %v296 = vpack.c.bf16 %v210, %v209
  %v297 = vpack.c.bf16 %v212, %v211
  %v298 = vpack.c.bf16 %v214, %v213
  %v299 = vpack.c.bf16 %v216, %v215
  %v300 = vpack.c.bf16 %v218, %v217
  %v301 = vpack.c.bf16 %v220, %v219
  %v302 = vpack.c.bf16 %v222, %v221
  %v303 = vpack.c.bf16 %v224, %v223
  %v304 = vpack.c.bf16 %v226, %v225
  %v305 = vpack.c.bf16 %v228, %v227
  %v306 = vpack.c.bf16 %v230, %v229
  %v307 = vpack.c.bf16 %v232, %v231
  %v308 = vpack.c.bf16 %v234, %v233
  %v309 = vpack.c.bf16 %v236, %v235
  %v310 = vpack.c.bf16 %v238, %v237
  %v311 = vpack.c.bf16 %v240, %v239
  %v312 = vpack.c.bf16 %v242, %v241
  %v313 = vpack.c.bf16 %v244, %v243
  %v314 = vpack.c.bf16 %v246, %v245
  %v315 = vpack.c.bf16 %v248, %v247
  %v316 = vpack.c.bf16 %v250, %v249
  %v317 = vpack.c.bf16 %v252, %v251
  %v318 = vpack.c.bf16 %v254, %v253
  %v319 = vld [vmem:[%s2] sm:$0x1]
  %v321 = vlaneseq
  %v322 = vshrl.u32 %v321, 7
  %v323 = vsub.s32 0, %v322
  %v324 = vrot.slane %v319, %v323
  %326 = vmatprep.subr.bf16.mxu0 0
  %327 = vmatpush1.bf16.msra.mxu0 %v262
  %328 = vmatprep.subr.bf16.mxu0 0
  %329 = vmatpush1.bf16.msra.mxu0 %v261
  %330 = vmatprep.subr.bf16.mxu0 0
  %331 = vmatpush1.bf16.msra.mxu0 %v260
  %332 = vmatprep.subr.bf16.mxu0 0
  %333 = vmatpush1.bf16.msra.mxu0 %v259
  %334 = vmatprep.subr.bf16.mxu0 0
  %335 = vmatpush1.bf16.msra.mxu0 %v258
  %336 = vmatprep.subr.bf16.mxu0 0
  %337 = vmatpush1.bf16.msra.mxu0 %v257
  %338 = vmatprep.subr.bf16.mxu0 0
  %339 = vmatpush1.bf16.msra.mxu0 %v256
  %340 = vmatprep.subr.bf16.mxu0 0
  %341 = vmatpush1.bf16.msra.mxu0 %v255
  %342 = vmatprep.subr.bf16.mxu0 0
  %343 = vmatpush2.bf16.msra.mxu0 %v270
  %344 = vmatprep.subr.bf16.mxu0 0
  %345 = vmatpush2.bf16.msra.mxu0 %v269
  %346 = vmatprep.subr.bf16.mxu0 0
  %347 = vmatpush2.bf16.msra.mxu0 %v268
  %348 = vmatprep.subr.bf16.mxu0 0
  %349 = vmatpush2.bf16.msra.mxu0 %v267
  %350 = vmatprep.subr.bf16.mxu0 0
  %351 = vmatpush2.bf16.msra.mxu0 %v266
  %352 = vmatprep.subr.bf16.mxu0 0
  %353 = vmatpush2.bf16.msra.mxu0 %v265
  %354 = vmatprep.subr.bf16.mxu0 0
  %355 = vmatpush2.bf16.msra.mxu0 %v264
  %356 = vmatprep.subr.bf16.mxu0 0
  %357 = vmatpush2.bf16.msra.mxu0 %v263
  %358 = vmatprep.mubr.bf16.mxu0 %v88
  %359 = vmatmul.mubr.bf16.gmra.mxu0 %v87
  %v360 = vpop.f32.mrf.mxu0
  %v361 = vadd.f32 %v324, %v360
  %v362 = vpop.f32.mrf.mxu0
  %v363 = vpop.f32.mrf.mxu0
  %v364 = vadd.f32 %v324, %v363
  %v365 = vpop.f32.mrf.mxu0
  %366 = vmatprep.mubr.bf16.mxu0 %v96
  %367 = vmatmul.mubr.bf16.gmra.mxu0 %v95
  %v368 = vpop.f32.mrf.mxu0
  %v369 = vadd.f32 %v324, %v368
  %v370 = vpop.f32.mrf.mxu0
  %v371 = vpop.f32.mrf.mxu0
  %v372 = vadd.f32 %v324, %v371
  %v373 = vpop.f32.mrf.mxu0
  %374 = vmatprep.mubr.bf16.mxu0 %v104
  %375 = vmatmul.mubr.bf16.gmra.mxu0 %v103
  %v376 = vpop.f32.mrf.mxu0
  %v377 = vadd.f32 %v324, %v376
  %v378 = vpop.f32.mrf.mxu0
  %v379 = vpop.f32.mrf.mxu0
  %v380 = vadd.f32 %v324, %v379
  %v381 = vpop.f32.mrf.mxu0
  %382 = vmatprep.mubr.bf16.mxu0 %v112
  %383 = vmatmul.mubr.bf16.gmra.mxu0 %v111
  %v384 = vpop.f32.mrf.mxu0
  %v385 = vadd.f32 %v324, %v384
  %v386 = vpop.f32.mrf.mxu0
  %v387 = vpop.f32.mrf.mxu0
  %v388 = vadd.f32 %v324, %v387
  %v389 = vpop.f32.mrf.mxu0
  %390 = vmatprep.mubr.bf16.mxu0 %v120
  %391 = vmatmul.mubr.bf16.gmra.mxu0 %v119
  %v392 = vpop.f32.mrf.mxu0
  %v393 = vadd.f32 %v324, %v392
  %v394 = vpop.f32.mrf.mxu0
  %v395 = vpop.f32.mrf.mxu0
  %v396 = vpop.f32.mrf.mxu0
  %397 = vdwg.mxu0
  %398 = vmatprep.subr.bf16.mxu0 0
  %399 = vmatpush1.bf16.msra.mxu0 %v278
  %400 = vmatprep.subr.bf16.mxu0 0
  %401 = vmatpush1.bf16.msra.mxu0 %v277
  %402 = vmatprep.subr.bf16.mxu0 0
  %403 = vmatpush1.bf16.msra.mxu0 %v276
  %404 = vmatprep.subr.bf16.mxu0 0
  %405 = vmatpush1.bf16.msra.mxu0 %v275
  %406 = vmatprep.subr.bf16.mxu0 0
  %407 = vmatpush1.bf16.msra.mxu0 %v274
  %408 = vmatprep.subr.bf16.mxu0 0
  %409 = vmatpush1.bf16.msra.mxu0 %v273
  %410 = vmatprep.subr.bf16.mxu0 0
  %411 = vmatpush1.bf16.msra.mxu0 %v272
  %412 = vmatprep.subr.bf16.mxu0 0
  %413 = vmatpush1.bf16.msra.mxu0 %v271
  %414 = vmatprep.subr.bf16.mxu0 0
  %415 = vmatpush2.bf16.msra.mxu0 %v286
  %416 = vmatprep.subr.bf16.mxu0 0
  %417 = vmatpush2.bf16.msra.mxu0 %v285
  %418 = vmatprep.subr.bf16.mxu0 0
  %419 = vmatpush2.bf16.msra.mxu0 %v284
  %420 = vmatprep.subr.bf16.mxu0 0
  %421 = vmatpush2.bf16.msra.mxu0 %v283
  %422 = vmatprep.subr.bf16.mxu0 0
  %423 = vmatpush2.bf16.msra.mxu0 %v282
  %424 = vmatprep.subr.bf16.mxu0 0
  %425 = vmatpush2.bf16.msra.mxu0 %v281
  %426 = vmatprep.subr.bf16.mxu0 0
  %427 = vmatpush2.bf16.msra.mxu0 %v280
  %428 = vmatprep.subr.bf16.mxu0 0
  %429 = vmatpush2.bf16.msra.mxu0 %v279
  %430 = vmatprep.mubr.bf16.mxu0 %v90
  %431 = vmatmul.mubr.bf16.gmra.mxu0 %v89
  %v432 = vpop.f32.mrf.mxu0
  %v433 = vadd.f32 %v361, %v432
  %v434 = vpop.f32.mrf.mxu0
  %v435 = vpop.f32.mrf.mxu0
  %v436 = vadd.f32 %v364, %v435
  %v437 = vpop.f32.mrf.mxu0
  %438 = vmatprep.mubr.bf16.mxu0 %v98
  %439 = vmatmul.mubr.bf16.gmra.mxu0 %v97
  %v440 = vpop.f32.mrf.mxu0
  %v441 = vadd.f32 %v369, %v440
  %v442 = vpop.f32.mrf.mxu0
  %v443 = vpop.f32.mrf.mxu0
  %v444 = vadd.f32 %v372, %v443
  %v445 = vpop.f32.mrf.mxu0
  %446 = vmatprep.mubr.bf16.mxu0 %v106
  %447 = vmatmul.mubr.bf16.gmra.mxu0 %v105
  %v448 = vpop.f32.mrf.mxu0
  %v449 = vadd.f32 %v377, %v448
  %v450 = vpop.f32.mrf.mxu0
  %v451 = vpop.f32.mrf.mxu0
  %v452 = vadd.f32 %v380, %v451
  %v453 = vpop.f32.mrf.mxu0
  %454 = vmatprep.mubr.bf16.mxu0 %v114
  %455 = vmatmul.mubr.bf16.gmra.mxu0 %v113
  %v456 = vpop.f32.mrf.mxu0
  %v457 = vadd.f32 %v385, %v456
  %v458 = vpop.f32.mrf.mxu0
  %v459 = vpop.f32.mrf.mxu0
  %v460 = vadd.f32 %v388, %v459
  %v461 = vpop.f32.mrf.mxu0
  %462 = vmatprep.mubr.bf16.mxu0 %v122
  %463 = vmatmul.mubr.bf16.gmra.mxu0 %v121
  %v464 = vpop.f32.mrf.mxu0
  %v465 = vadd.f32 %v393, %v464
  %v466 = vpop.f32.mrf.mxu0
  %v467 = vpop.f32.mrf.mxu0
  %v468 = vpop.f32.mrf.mxu0
  %469 = vdwg.mxu0
  %470 = vmatprep.subr.bf16.mxu0 0
  %471 = vmatpush1.bf16.msra.mxu0 %v294
  %472 = vmatprep.subr.bf16.mxu0 0
  %473 = vmatpush1.bf16.msra.mxu0 %v293
  %474 = vmatprep.subr.bf16.mxu0 0
  %475 = vmatpush1.bf16.msra.mxu0 %v292
  %476 = vmatprep.subr.bf16.mxu0 0
  %477 = vmatpush1.bf16.msra.mxu0 %v291
  %478 = vmatprep.subr.bf16.mxu0 0
  %479 = vmatpush1.bf16.msra.mxu0 %v290
  %480 = vmatprep.subr.bf16.mxu0 0
  %481 = vmatpush1.bf16.msra.mxu0 %v289
  %482 = vmatprep.subr.bf16.mxu0 0
  %483 = vmatpush1.bf16.msra.mxu0 %v288
  %484 = vmatprep.subr.bf16.mxu0 0
  %485 = vmatpush1.bf16.msra.mxu0 %v287
  %486 = vmatprep.subr.bf16.mxu0 0
  %487 = vmatpush2.bf16.msra.mxu0 %v302
  %488 = vmatprep.subr.bf16.mxu0 0
  %489 = vmatpush2.bf16.msra.mxu0 %v301
  %490 = vmatprep.subr.bf16.mxu0 0
  %491 = vmatpush2.bf16.msra.mxu0 %v300
  %492 = vmatprep.subr.bf16.mxu0 0
  %493 = vmatpush2.bf16.msra.mxu0 %v299
  %494 = vmatprep.subr.bf16.mxu0 0
  %495 = vmatpush2.bf16.msra.mxu0 %v298
  %496 = vmatprep.subr.bf16.mxu0 0
  %497 = vmatpush2.bf16.msra.mxu0 %v297
  %498 = vmatprep.subr.bf16.mxu0 0
  %499 = vmatpush2.bf16.msra.mxu0 %v296
  %500 = vmatprep.subr.bf16.mxu0 0
  %501 = vmatpush2.bf16.msra.mxu0 %v295
  %502 = vmatprep.mubr.bf16.mxu0 %v92
  %503 = vmatmul.mubr.bf16.gmra.mxu0 %v91
  %v504 = vpop.f32.mrf.mxu0
  %v505 = vadd.f32 %v433, %v504
  %v506 = vpop.f32.mrf.mxu0
  %v507 = vpop.f32.mrf.mxu0
  %v508 = vadd.f32 %v436, %v507
  %v509 = vpop.f32.mrf.mxu0
  %510 = vmatprep.mubr.bf16.mxu0 %v100
  %511 = vmatmul.mubr.bf16.gmra.mxu0 %v99
  %v512 = vpop.f32.mrf.mxu0
  %v513 = vadd.f32 %v441, %v512
  %v514 = vpop.f32.mrf.mxu0
  %v515 = vpop.f32.mrf.mxu0
  %v516 = vadd.f32 %v444, %v515
  %v517 = vpop.f32.mrf.mxu0
  %518 = vmatprep.mubr.bf16.mxu0 %v108
  %519 = vmatmul.mubr.bf16.gmra.mxu0 %v107
  %v520 = vpop.f32.mrf.mxu0
  %v521 = vadd.f32 %v449, %v520
  %v522 = vpop.f32.mrf.mxu0
  %v523 = vpop.f32.mrf.mxu0
  %v524 = vadd.f32 %v452, %v523
  %v525 = vpop.f32.mrf.mxu0
  %526 = vmatprep.mubr.bf16.mxu0 %v116
  %527 = vmatmul.mubr.bf16.gmra.mxu0 %v115
  %v528 = vpop.f32.mrf.mxu0
  %v529 = vadd.f32 %v457, %v528
  %v530 = vpop.f32.mrf.mxu0
  %v531 = vpop.f32.mrf.mxu0
  %v532 = vadd.f32 %v460, %v531
  %v533 = vpop.f32.mrf.mxu0
  %534 = vmatprep.mubr.bf16.mxu0 %v124
  %535 = vmatmul.mubr.bf16.gmra.mxu0 %v123
  %v536 = vpop.f32.mrf.mxu0
  %v537 = vadd.f32 %v465, %v536
  %v538 = vpop.f32.mrf.mxu0
  %v539 = vpop.f32.mrf.mxu0
  %v540 = vpop.f32.mrf.mxu0
  %541 = vdwg.mxu0
  %542 = vmatprep.subr.bf16.mxu0 0
  %543 = vmatpush1.bf16.msra.mxu0 %v310
  %544 = vmatprep.subr.bf16.mxu0 0
  %545 = vmatpush1.bf16.msra.mxu0 %v309
  %546 = vmatprep.subr.bf16.mxu0 0
  %547 = vmatpush1.bf16.msra.mxu0 %v308
  %548 = vmatprep.subr.bf16.mxu0 0
  %549 = vmatpush1.bf16.msra.mxu0 %v307
  %550 = vmatprep.subr.bf16.mxu0 0
  %551 = vmatpush1.bf16.msra.mxu0 %v306
  %552 = vmatprep.subr.bf16.mxu0 0
  %553 = vmatpush1.bf16.msra.mxu0 %v305
  %554 = vmatprep.subr.bf16.mxu0 0
  %555 = vmatpush1.bf16.msra.mxu0 %v304
  %556 = vmatprep.subr.bf16.mxu0 0
  %557 = vmatpush1.bf16.msra.mxu0 %v303
  %558 = vmatprep.subr.bf16.mxu0 0
  %559 = vmatpush2.bf16.msra.mxu0 %v318
  %560 = vmatprep.subr.bf16.mxu0 0
  %561 = vmatpush2.bf16.msra.mxu0 %v317
  %562 = vmatprep.subr.bf16.mxu0 0
  %563 = vmatpush2.bf16.msra.mxu0 %v316
  %564 = vmatprep.subr.bf16.mxu0 0
  %565 = vmatpush2.bf16.msra.mxu0 %v315
  %566 = vmatprep.subr.bf16.mxu0 0
  %567 = vmatpush2.bf16.msra.mxu0 %v314
  %568 = vmatprep.subr.bf16.mxu0 0
  %569 = vmatpush2.bf16.msra.mxu0 %v313
  %570 = vmatprep.subr.bf16.mxu0 0
  %571 = vmatpush2.bf16.msra.mxu0 %v312
  %572 = vmatprep.subr.bf16.mxu0 0
  %573 = vmatpush2.bf16.msra.mxu0 %v311
  %574 = vmatprep.mubr.bf16.mxu0 %v94
  %575 = vmatmul.mubr.bf16.gmra.mxu0 %v93
  %v576 = vpop.f32.mrf.mxu0
  %v577 = vadd.f32 %v505, %v576
  %v578 = vpop.f32.mrf.mxu0
  %v579 = vpop.f32.mrf.mxu0
  %v580 = vadd.f32 %v508, %v579
  %v581 = vpop.f32.mrf.mxu0
  %582 = vmatprep.mubr.bf16.mxu0 %v102
  %583 = vmatmul.mubr.bf16.gmra.mxu0 %v101
  %v584 = vpop.f32.mrf.mxu0
  %v585 = vadd.f32 %v513, %v584
  %v586 = vpop.f32.mrf.mxu0
  %v587 = vpop.f32.mrf.mxu0
  %v588 = vadd.f32 %v516, %v587
  %v589 = vpop.f32.mrf.mxu0
  %590 = vmatprep.mubr.bf16.mxu0 %v110
  %591 = vmatmul.mubr.bf16.gmra.mxu0 %v109
  %v592 = vpop.f32.mrf.mxu0
  %v593 = vadd.f32 %v521, %v592
  %v594 = vpop.f32.mrf.mxu0
  %v595 = vpop.f32.mrf.mxu0
  %v596 = vadd.f32 %v524, %v595
  %v597 = vpop.f32.mrf.mxu0
  %598 = vmatprep.mubr.bf16.mxu0 %v118
  %599 = vmatmul.mubr.bf16.gmra.mxu0 %v117
  %v600 = vpop.f32.mrf.mxu0
  %v601 = vadd.f32 %v529, %v600
  %v602 = vpop.f32.mrf.mxu0
  %v603 = vpop.f32.mrf.mxu0
  %v604 = vadd.f32 %v532, %v603
  %v605 = vpop.f32.mrf.mxu0
  %606 = vmatprep.mubr.bf16.mxu0 %v126
  %607 = vmatmul.mubr.bf16.gmra.mxu0 %v125
  %v608 = vpop.f32.mrf.mxu0
  %v609 = vadd.f32 %v537, %v608
  %v610 = vpop.f32.mrf.mxu0
  %v611 = vpop.f32.mrf.mxu0
  %v612 = vpop.f32.mrf.mxu0
  %613 = vdwg.mxu0
  %v614 = vmax.f32 %v577, 0.0
  %v615 = vmax.f32 %v580, 0.0
  %v616 = vmax.f32 %v585, 0.0
  %v617 = vmax.f32 %v588, 0.0
  %v618 = vmax.f32 %v593, 0.0
  %v619 = vmax.f32 %v596, 0.0
  %v620 = vmax.f32 %v601, 0.0
  %v621 = vmax.f32 %v604, 0.0
  %v622 = vmax.f32 %v609, 0.0
  %623 = vst [vmem:[%s3] sm:$0xff] %v614
  %624 = vst [vmem:[%s3 + $0x8] sm:$0xff] %v615
  %625 = vst [vmem:[%s3 + $0x10] sm:$0xff] %v616
  %626 = vst [vmem:[%s3 + $0x18] sm:$0xff] %v617
  %627 = vst [vmem:[%s3 + $0x20] sm:$0xff] %v618
  %628 = vst [vmem:[%s3 + $0x28] sm:$0xff] %v619
  %629 = vst [vmem:[%s3 + $0x30] sm:$0xff] %v620
  %630 = vst [vmem:[%s3 + $0x38] sm:$0xff] %v621
  %631 = vst [vmem:[%s3 + $0x40] sm:$0xff] %v622
  // Predicated region
  $region14: #{visual_encoder_forward.6} parent=0 // pred_check
    _
  $region15: #{visual_encoder_forward.6} parent=0 // pred_check_branch
    %633 = sbr.rel (0) target = $region17
  $region16: #{visual_encoder_forward.6} parent=0 // pred_region
    _
  $region17: #{visual_encoder_forward.6} parent=0 // pred_fallthru
    _
  // Predicated region
  $region18: #{visual_encoder_forward.6} parent=0 // pred_check
    _
  $region19: #{visual_encoder_forward.6} parent=0 // pred_check_branch
    %635 = sbr.rel (0) target = $region21
  $region20: #{visual_encoder_forward.6} parent=0 // pred_region
    _
  $region21: #{visual_encoder_forward.6} parent=0 // pred_fallthru
    _

// kernel: visual_encoder_forward.7
$region0: #{visual_encoder_forward.7}
  #allocation0 [shape = 'u32[]', space=smem, size = 0x4, offset = 0x4, fixed_abs, tag = 'smem constant byte address 0x4 - core index']
  #allocation1 [shape = 'u32[144,128]{1,0:T(1,128)}', space=vmem, size = 0x12000, scoped, tag = 'internal scratch']
  %s0 = inlined_call_operand.vmem [shape: f32[8,2048], index: 0, kind: input, shape index: {}]
  %s1 = inlined_call_operand.vmem [shape: f32[2048,256], index: 1, kind: input, shape index: {}]
  %s2 = inlined_call_operand.vmem [shape: f32[1,256], index: 2, kind: input, shape index: {}]
  %s3 = inlined_call_operand.vmem [shape: f32[8,256], index: 3, kind: output, shape index: {}]
  %s4 = sld [smem:[#allocation0]]
  $region22: #{visual_encoder_forward.7} parent=0
    _
  %s6 = ssub.s32 1, %s4
  %s7 = scalar_select 0, %s6, %s4
  // Predicated region
  $region2: #{visual_encoder_forward.7} parent=0 // pred_check
    _
  $region3: #{visual_encoder_forward.7} parent=0 // pred_check_branch
    %9 = sbr.rel (0) target = $region5
  $region4: #{visual_encoder_forward.7} parent=0 // pred_region
    _
  $region5: #{visual_encoder_forward.7} parent=0 // pred_fallthru
    _
  // Predicated region
  $region6: #{visual_encoder_forward.7} parent=0 // pred_check
    _
  $region7: #{visual_encoder_forward.7} parent=0 // pred_check_branch
    %11 = sbr.rel (0) target = $region9
  $region8: #{visual_encoder_forward.7} parent=0 // pred_region
    _
  $region9: #{visual_encoder_forward.7} parent=0 // pred_fallthru
    _
  // Predicated region
  $region10: #{visual_encoder_forward.7} parent=0 // pred_check
    _
  $region11: #{visual_encoder_forward.7} parent=0 // pred_check_branch
    %13 = sbr.rel (0) target = $region13
  $region12: #{visual_encoder_forward.7} parent=0 // pred_region
    _
  $region13: #{visual_encoder_forward.7} parent=0 // pred_fallthru
    _
  %v14 = vld [vmem:[%s0] sm:$0xff]
  %v15 = vld [vmem:[%s0 + $0x8] sm:$0xff]
  %v16 = vld [vmem:[%s0 + $0x10] sm:$0xff]
  %v17 = vld [vmem:[%s0 + $0x18] sm:$0xff]
  %v18 = vld [vmem:[%s0 + $0x20] sm:$0xff]
  %v19 = vld [vmem:[%s0 + $0x28] sm:$0xff]
  %v20 = vld [vmem:[%s0 + $0x30] sm:$0xff]
  %v21 = vld [vmem:[%s0 + $0x38] sm:$0xff]
  %v22 = vld [vmem:[%s0 + $0x40] sm:$0xff]
  %v23 = vld [vmem:[%s0 + $0x48] sm:$0xff]
  %v24 = vld [vmem:[%s0 + $0x50] sm:$0xff]
  %v25 = vld [vmem:[%s0 + $0x58] sm:$0xff]
  %v26 = vld [vmem:[%s0 + $0x60] sm:$0xff]
  %v27 = vld [vmem:[%s0 + $0x68] sm:$0xff]
  %v28 = vld [vmem:[%s0 + $0x70] sm:$0xff]
  %v29 = vld [vmem:[%s0 + $0x78] sm:$0xff]
  %v30 = vpack.c.bf16 %v14, %v14
  %v31 = vpack.c.bf16 %v15, %v15
  %v32 = vpack.c.bf16 %v16, %v16
  %v33 = vpack.c.bf16 %v17, %v17
  %v34 = vpack.c.bf16 %v18, %v18
  %v35 = vpack.c.bf16 %v19, %v19
  %v36 = vpack.c.bf16 %v20, %v20
  %v37 = vpack.c.bf16 %v21, %v21
  %v38 = vpack.c.bf16 %v22, %v22
  %v39 = vpack.c.bf16 %v23, %v23
  %v40 = vpack.c.bf16 %v24, %v24
  %v41 = vpack.c.bf16 %v25, %v25
  %v42 = vpack.c.bf16 %v26, %v26
  %v43 = vpack.c.bf16 %v27, %v27
  %v44 = vpack.c.bf16 %v28, %v28
  %v45 = vpack.c.bf16 %v29, %v29
  %v46 = vld [vmem:[%s1] sm:$0xff]
  %v47 = vld [vmem:[%s1 + $0x8] sm:$0xff]
  %v48 = vld [vmem:[%s1 + $0x10] sm:$0xff]
  %v49 = vld [vmem:[%s1 + $0x18] sm:$0xff]
  %v50 = vld [vmem:[%s1 + $0x20] sm:$0xff]
  %v51 = vld [vmem:[%s1 + $0x28] sm:$0xff]
  %v52 = vld [vmem:[%s1 + $0x30] sm:$0xff]
  %v53 = vld [vmem:[%s1 + $0x38] sm:$0xff]
  %v54 = vld [vmem:[%s1 + $0x40] sm:$0xff]
  %v55 = vld [vmem:[%s1 + $0x48] sm:$0xff]
  %v56 = vld [vmem:[%s1 + $0x50] sm:$0xff]
  %v57 = vld [vmem:[%s1 + $0x58] sm:$0xff]
  %v58 = vld [vmem:[%s1 + $0x60] sm:$0xff]
  %v59 = vld [vmem:[%s1 + $0x68] sm:$0xff]
  %v60 = vld [vmem:[%s1 + $0x70] sm:$0xff]
  %v61 = vld [vmem:[%s1 + $0x78] sm:$0xff]
  %v62 = vld [vmem:[%s1 + $0x80] sm:$0xff]
  %v63 = vld [vmem:[%s1 + $0x88] sm:$0xff]
  %v64 = vld [vmem:[%s1 + $0x90] sm:$0xff]
  %v65 = vld [vmem:[%s1 + $0x98] sm:$0xff]
  %v66 = vld [vmem:[%s1 + $0xa0] sm:$0xff]
  %v67 = vld [vmem:[%s1 + $0xa8] sm:$0xff]
  %v68 = vld [vmem:[%s1 + $0xb0] sm:$0xff]
  %v69 = vld [vmem:[%s1 + $0xb8] sm:$0xff]
  %v70 = vld [vmem:[%s1 + $0xc0] sm:$0xff]
  %v71 = vld [vmem:[%s1 + $0xc8] sm:$0xff]
  %v72 = vld [vmem:[%s1 + $0xd0] sm:$0xff]
  %v73 = vld [vmem:[%s1 + $0xd8] sm:$0xff]
  %v74 = vld [vmem:[%s1 + $0xe0] sm:$0xff]
  %v75 = vld [vmem:[%s1 + $0xe8] sm:$0xff]
  %v76 = vld [vmem:[%s1 + $0xf0] sm:$0xff]
  %v77 = vld [vmem:[%s1 + $0xf8] sm:$0xff]
  %v78 = vld [vmem:[%s1 + $0x100] sm:$0xff]
  %v79 = vld [vmem:[%s1 + $0x108] sm:$0xff]
  %v80 = vld [vmem:[%s1 + $0x110] sm:$0xff]
  %v81 = vld [vmem:[%s1 + $0x118] sm:$0xff]
  %v82 = vld [vmem:[%s1 + $0x120] sm:$0xff]
  %v83 = vld [vmem:[%s1 + $0x128] sm:$0xff]
  %v84 = vld [vmem:[%s1 + $0x130] sm:$0xff]
  %v85 = vld [vmem:[%s1 + $0x138] sm:$0xff]
  %v86 = vld [vmem:[%s1 + $0x140] sm:$0xff]
  %v87 = vld [vmem:[%s1 + $0x148] sm:$0xff]
  %v88 = vld [vmem:[%s1 + $0x150] sm:$0xff]
  %v89 = vld [vmem:[%s1 + $0x158] sm:$0xff]
  %v90 = vld [vmem:[%s1 + $0x160] sm:$0xff]
  %v91 = vld [vmem:[%s1 + $0x168] sm:$0xff]
  %v92 = vld [vmem:[%s1 + $0x170] sm:$0xff]
  %v93 = vld [vmem:[%s1 + $0x178] sm:$0xff]
  %v94 = vld [vmem:[%s1 + $0x180] sm:$0xff]
  %v95 = vld [vmem:[%s1 + $0x188] sm:$0xff]
  %v96 = vld [vmem:[%s1 + $0x190] sm:$0xff]
  %v97 = vld [vmem:[%s1 + $0x198] sm:$0xff]
  %v98 = vld [vmem:[%s1 + $0x1a0] sm:$0xff]
  %v99 = vld [vmem:[%s1 + $0x1a8] sm:$0xff]
  %v100 = vld [vmem:[%s1 + $0x1b0] sm:$0xff]
  %v101 = vld [vmem:[%s1 + $0x1b8] sm:$0xff]
  %v102 = vld [vmem:[%s1 + $0x1c0] sm:$0xff]
  %v103 = vld [vmem:[%s1 + $0x1c8] sm:$0xff]
  %v104 = vld [vmem:[%s1 + $0x1d0] sm:$0xff]
  %v105 = vld [vmem:[%s1 + $0x1d8] sm:$0xff]
  %v106 = vld [vmem:[%s1 + $0x1e0] sm:$0xff]
  %v107 = vld [vmem:[%s1 + $0x1e8] sm:$0xff]
  %v108 = vld [vmem:[%s1 + $0x1f0] sm:$0xff]
  %v109 = vld [vmem:[%s1 + $0x1f8] sm:$0xff]
  %v110 = vld [vmem:[%s1 + $0x200] sm:$0xff]
  %v111 = vld [vmem:[%s1 + $0x208] sm:$0xff]
  %v112 = vld [vmem:[%s1 + $0x210] sm:$0xff]
  %v113 = vld [vmem:[%s1 + $0x218] sm:$0xff]
  %v114 = vld [vmem:[%s1 + $0x220] sm:$0xff]
  %v115 = vld [vmem:[%s1 + $0x228] sm:$0xff]
  %v116 = vld [vmem:[%s1 + $0x230] sm:$0xff]
  %v117 = vld [vmem:[%s1 + $0x238] sm:$0xff]
  %v118 = vld [vmem:[%s1 + $0x240] sm:$0xff]
  %v119 = vld [vmem:[%s1 + $0x248] sm:$0xff]
  %v120 = vld [vmem:[%s1 + $0x250] sm:$0xff]
  %v121 = vld [vmem:[%s1 + $0x258] sm:$0xff]
  %v122 = vld [vmem:[%s1 + $0x260] sm:$0xff]
  %v123 = vld [vmem:[%s1 + $0x268] sm:$0xff]
  %v124 = vld [vmem:[%s1 + $0x270] sm:$0xff]
  %v125 = vld [vmem:[%s1 + $0x278] sm:$0xff]
  %v126 = vld [vmem:[%s1 + $0x280] sm:$0xff]
  %v127 = vld [vmem:[%s1 + $0x288] sm:$0xff]
  %v128 = vld [vmem:[%s1 + $0x290] sm:$0xff]
  %v129 = vld [vmem:[%s1 + $0x298] sm:$0xff]
  %v130 = vld [vmem:[%s1 + $0x2a0] sm:$0xff]
  %v131 = vld [vmem:[%s1 + $0x2a8] sm:$0xff]
  %v132 = vld [vmem:[%s1 + $0x2b0] sm:$0xff]
  %v133 = vld [vmem:[%s1 + $0x2b8] sm:$0xff]
  %v134 = vld [vmem:[%s1 + $0x2c0] sm:$0xff]
  %v135 = vld [vmem:[%s1 + $0x2c8] sm:$0xff]
  %v136 = vld [vmem:[%s1 + $0x2d0] sm:$0xff]
  %v137 = vld [vmem:[%s1 + $0x2d8] sm:$0xff]
  %v138 = vld [vmem:[%s1 + $0x2e0] sm:$0xff]
  %v139 = vld [vmem:[%s1 + $0x2e8] sm:$0xff]
  %v140 = vld [vmem:[%s1 + $0x2f0] sm:$0xff]
  %v141 = vld [vmem:[%s1 + $0x2f8] sm:$0xff]
  %v142 = vld [vmem:[%s1 + $0x300] sm:$0xff]
  %v143 = vld [vmem:[%s1 + $0x308] sm:$0xff]
  %v144 = vld [vmem:[%s1 + $0x310] sm:$0xff]
  %v145 = vld [vmem:[%s1 + $0x318] sm:$0xff]
  %v146 = vld [vmem:[%s1 + $0x320] sm:$0xff]
  %v147 = vld [vmem:[%s1 + $0x328] sm:$0xff]
  %v148 = vld [vmem:[%s1 + $0x330] sm:$0xff]
  %v149 = vld [vmem:[%s1 + $0x338] sm:$0xff]
  %v150 = vld [vmem:[%s1 + $0x340] sm:$0xff]
  %v151 = vld [vmem:[%s1 + $0x348] sm:$0xff]
  %v152 = vld [vmem:[%s1 + $0x350] sm:$0xff]
  %v153 = vld [vmem:[%s1 + $0x358] sm:$0xff]
  %v154 = vld [vmem:[%s1 + $0x360] sm:$0xff]
  %v155 = vld [vmem:[%s1 + $0x368] sm:$0xff]
  %v156 = vld [vmem:[%s1 + $0x370] sm:$0xff]
  %v157 = vld [vmem:[%s1 + $0x378] sm:$0xff]
  %v158 = vld [vmem:[%s1 + $0x380] sm:$0xff]
  %v159 = vld [vmem:[%s1 + $0x388] sm:$0xff]
  %v160 = vld [vmem:[%s1 + $0x390] sm:$0xff]
  %v161 = vld [vmem:[%s1 + $0x398] sm:$0xff]
  %v162 = vld [vmem:[%s1 + $0x3a0] sm:$0xff]
  %v163 = vld [vmem:[%s1 + $0x3a8] sm:$0xff]
  %v164 = vld [vmem:[%s1 + $0x3b0] sm:$0xff]
  %v165 = vld [vmem:[%s1 + $0x3b8] sm:$0xff]
  %v166 = vld [vmem:[%s1 + $0x3c0] sm:$0xff]
  %v167 = vld [vmem:[%s1 + $0x3c8] sm:$0xff]
  %v168 = vld [vmem:[%s1 + $0x3d0] sm:$0xff]
  %v169 = vld [vmem:[%s1 + $0x3d8] sm:$0xff]
  %v170 = vld [vmem:[%s1 + $0x3e0] sm:$0xff]
  %v171 = vld [vmem:[%s1 + $0x3e8] sm:$0xff]
  %v172 = vld [vmem:[%s1 + $0x3f0] sm:$0xff]
  %v173 = vld [vmem:[%s1 + $0x3f8] sm:$0xff]
  %v174 = vld [vmem:[%s1 + $0x400] sm:$0xff]
  %v175 = vld [vmem:[%s1 + $0x408] sm:$0xff]
  %v176 = vld [vmem:[%s1 + $0x410] sm:$0xff]
  %v177 = vld [vmem:[%s1 + $0x418] sm:$0xff]
  %v178 = vld [vmem:[%s1 + $0x420] sm:$0xff]
  %v179 = vld [vmem:[%s1 + $0x428] sm:$0xff]
  %v180 = vld [vmem:[%s1 + $0x430] sm:$0xff]
  %v181 = vld [vmem:[%s1 + $0x438] sm:$0xff]
  %v182 = vld [vmem:[%s1 + $0x440] sm:$0xff]
  %v183 = vld [vmem:[%s1 + $0x448] sm:$0xff]
  %v184 = vld [vmem:[%s1 + $0x450] sm:$0xff]
  %v185 = vld [vmem:[%s1 + $0x458] sm:$0xff]
  %v186 = vld [vmem:[%s1 + $0x460] sm:$0xff]
  %v187 = vld [vmem:[%s1 + $0x468] sm:$0xff]
  %v188 = vld [vmem:[%s1 + $0x470] sm:$0xff]
  %v189 = vld [vmem:[%s1 + $0x478] sm:$0xff]
  %v190 = vld [vmem:[%s1 + $0x480] sm:$0xff]
  %v191 = vld [vmem:[%s1 + $0x488] sm:$0xff]
  %v192 = vld [vmem:[%s1 + $0x490] sm:$0xff]
  %v193 = vld [vmem:[%s1 + $0x498] sm:$0xff]
  %v194 = vld [vmem:[%s1 + $0x4a0] sm:$0xff]
  %v195 = vld [vmem:[%s1 + $0x4a8] sm:$0xff]
  %v196 = vld [vmem:[%s1 + $0x4b0] sm:$0xff]
  %v197 = vld [vmem:[%s1 + $0x4b8] sm:$0xff]
  %v198 = vld [vmem:[%s1 + $0x4c0] sm:$0xff]
  %v199 = vld [vmem:[%s1 + $0x4c8] sm:$0xff]
  %v200 = vld [vmem:[%s1 + $0x4d0] sm:$0xff]
  %v201 = vld [vmem:[%s1 + $0x4d8] sm:$0xff]
  %v202 = vld [vmem:[%s1 + $0x4e0] sm:$0xff]
  %v203 = vld [vmem:[%s1 + $0x4e8] sm:$0xff]
  %v204 = vld [vmem:[%s1 + $0x4f0] sm:$0xff]
  %v205 = vld [vmem:[%s1 + $0x4f8] sm:$0xff]
  %v206 = vld [vmem:[%s1 + $0x500] sm:$0xff]
  %v207 = vld [vmem:[%s1 + $0x508] sm:$0xff]
  %v208 = vld [vmem:[%s1 + $0x510] sm:$0xff]
  %v209 = vld [vmem:[%s1 + $0x518] sm:$0xff]
  %v210 = vld [vmem:[%s1 + $0x520] sm:$0xff]
  %v211 = vld [vmem:[%s1 + $0x528] sm:$0xff]
  %v212 = vld [vmem:[%s1 + $0x530] sm:$0xff]
  %v213 = vld [vmem:[%s1 + $0x538] sm:$0xff]
  %v214 = vld [vmem:[%s1 + $0x540] sm:$0xff]
  %v215 = vld [vmem:[%s1 + $0x548] sm:$0xff]
  %v216 = vld [vmem:[%s1 + $0x550] sm:$0xff]
  %v217 = vld [vmem:[%s1 + $0x558] sm:$0xff]
  %v218 = vld [vmem:[%s1 + $0x560] sm:$0xff]
  %v219 = vld [vmem:[%s1 + $0x568] sm:$0xff]
  %v220 = vld [vmem:[%s1 + $0x570] sm:$0xff]
  %v221 = vld [vmem:[%s1 + $0x578] sm:$0xff]
  %v222 = vld [vmem:[%s1 + $0x580] sm:$0xff]
  %v223 = vld [vmem:[%s1 + $0x588] sm:$0xff]
  %v224 = vld [vmem:[%s1 + $0x590] sm:$0xff]
  %v225 = vld [vmem:[%s1 + $0x598] sm:$0xff]
  %v226 = vld [vmem:[%s1 + $0x5a0] sm:$0xff]
  %v227 = vld [vmem:[%s1 + $0x5a8] sm:$0xff]
  %v228 = vld [vmem:[%s1 + $0x5b0] sm:$0xff]
  %v229 = vld [vmem:[%s1 + $0x5b8] sm:$0xff]
  %v230 = vld [vmem:[%s1 + $0x5c0] sm:$0xff]
  %v231 = vld [vmem:[%s1 + $0x5c8] sm:$0xff]
  %v232 = vld [vmem:[%s1 + $0x5d0] sm:$0xff]
  %v233 = vld [vmem:[%s1 + $0x5d8] sm:$0xff]
  %v234 = vld [vmem:[%s1 + $0x5e0] sm:$0xff]
  %v235 = vld [vmem:[%s1 + $0x5e8] sm:$0xff]
  %v236 = vld [vmem:[%s1 + $0x5f0] sm:$0xff]
  %v237 = vld [vmem:[%s1 + $0x5f8] sm:$0xff]
  %v238 = vld [vmem:[%s1 + $0x600] sm:$0xff]
  %v239 = vld [vmem:[%s1 + $0x608] sm:$0xff]
  %v240 = vld [vmem:[%s1 + $0x610] sm:$0xff]
  %v241 = vld [vmem:[%s1 + $0x618] sm:$0xff]
  %v242 = vld [vmem:[%s1 + $0x620] sm:$0xff]
  %v243 = vld [vmem:[%s1 + $0x628] sm:$0xff]
  %v244 = vld [vmem:[%s1 + $0x630] sm:$0xff]
  %v245 = vld [vmem:[%s1 + $0x638] sm:$0xff]
  %v246 = vld [vmem:[%s1 + $0x640] sm:$0xff]
  %v247 = vld [vmem:[%s1 + $0x648] sm:$0xff]
  %v248 = vld [vmem:[%s1 + $0x650] sm:$0xff]
  %v249 = vld [vmem:[%s1 + $0x658] sm:$0xff]
  %v250 = vld [vmem:[%s1 + $0x660] sm:$0xff]
  %v251 = vld [vmem:[%s1 + $0x668] sm:$0xff]
  %v252 = vld [vmem:[%s1 + $0x670] sm:$0xff]
  %v253 = vld [vmem:[%s1 + $0x678] sm:$0xff]
  %v254 = vld [vmem:[%s1 + $0x680] sm:$0xff]
  %v255 = vld [vmem:[%s1 + $0x688] sm:$0xff]
  %v256 = vld [vmem:[%s1 + $0x690] sm:$0xff]
  %v257 = vld [vmem:[%s1 + $0x698] sm:$0xff]
  %v258 = vld [vmem:[%s1 + $0x6a0] sm:$0xff]
  %v259 = vld [vmem:[%s1 + $0x6a8] sm:$0xff]
  %v260 = vld [vmem:[%s1 + $0x6b0] sm:$0xff]
  %v261 = vld [vmem:[%s1 + $0x6b8] sm:$0xff]
  %v262 = vld [vmem:[%s1 + $0x6c0] sm:$0xff]
  %v263 = vld [vmem:[%s1 + $0x6c8] sm:$0xff]
  %v264 = vld [vmem:[%s1 + $0x6d0] sm:$0xff]
  %v265 = vld [vmem:[%s1 + $0x6d8] sm:$0xff]
  %v266 = vld [vmem:[%s1 + $0x6e0] sm:$0xff]
  %v267 = vld [vmem:[%s1 + $0x6e8] sm:$0xff]
  %v268 = vld [vmem:[%s1 + $0x6f0] sm:$0xff]
  %v269 = vld [vmem:[%s1 + $0x6f8] sm:$0xff]
  %v270 = vld [vmem:[%s1 + $0x700] sm:$0xff]
  %v271 = vld [vmem:[%s1 + $0x708] sm:$0xff]
  %v272 = vld [vmem:[%s1 + $0x710] sm:$0xff]
  %v273 = vld [vmem:[%s1 + $0x718] sm:$0xff]
  %v274 = vld [vmem:[%s1 + $0x720] sm:$0xff]
  %v275 = vld [vmem:[%s1 + $0x728] sm:$0xff]
  %v276 = vld [vmem:[%s1 + $0x730] sm:$0xff]
  %v277 = vld [vmem:[%s1 + $0x738] sm:$0xff]
  %v278 = vld [vmem:[%s1 + $0x740] sm:$0xff]
  %v279 = vld [vmem:[%s1 + $0x748] sm:$0xff]
  %v280 = vld [vmem:[%s1 + $0x750] sm:$0xff]
  %v281 = vld [vmem:[%s1 + $0x758] sm:$0xff]
  %v282 = vld [vmem:[%s1 + $0x760] sm:$0xff]
  %v283 = vld [vmem:[%s1 + $0x768] sm:$0xff]
  %v284 = vld [vmem:[%s1 + $0x770] sm:$0xff]
  %v285 = vld [vmem:[%s1 + $0x778] sm:$0xff]
  %v286 = vld [vmem:[%s1 + $0x780] sm:$0xff]
  %v287 = vld [vmem:[%s1 + $0x788] sm:$0xff]
  %v288 = vld [vmem:[%s1 + $0x790] sm:$0xff]
  %v289 = vld [vmem:[%s1 + $0x798] sm:$0xff]
  %v290 = vld [vmem:[%s1 + $0x7a0] sm:$0xff]
  %v291 = vld [vmem:[%s1 + $0x7a8] sm:$0xff]
  %v292 = vld [vmem:[%s1 + $0x7b0] sm:$0xff]
  %v293 = vld [vmem:[%s1 + $0x7b8] sm:$0xff]
  %v294 = vld [vmem:[%s1 + $0x7c0] sm:$0xff]
  %v295 = vld [vmem:[%s1 + $0x7c8] sm:$0xff]
  %v296 = vld [vmem:[%s1 + $0x7d0] sm:$0xff]
  %v297 = vld [vmem:[%s1 + $0x7d8] sm:$0xff]
  %v298 = vld [vmem:[%s1 + $0x7e0] sm:$0xff]
  %v299 = vld [vmem:[%s1 + $0x7e8] sm:$0xff]
  %v300 = vld [vmem:[%s1 + $0x7f0] sm:$0xff]
  %v301 = vld [vmem:[%s1 + $0x7f8] sm:$0xff]
  %v302 = vld [vmem:[%s1 + $0x800] sm:$0xff]
  %v303 = vld [vmem:[%s1 + $0x808] sm:$0xff]
  %v304 = vld [vmem:[%s1 + $0x810] sm:$0xff]
  %v305 = vld [vmem:[%s1 + $0x818] sm:$0xff]
  %v306 = vld [vmem:[%s1 + $0x820] sm:$0xff]
  %v307 = vld [vmem:[%s1 + $0x828] sm:$0xff]
  %v308 = vld [vmem:[%s1 + $0x830] sm:$0xff]
  %v309 = vld [vmem:[%s1 + $0x838] sm:$0xff]
  %v310 = vld [vmem:[%s1 + $0x840] sm:$0xff]
  %v311 = vld [vmem:[%s1 + $0x848] sm:$0xff]
  %v312 = vld [vmem:[%s1 + $0x850] sm:$0xff]
  %v313 = vld [vmem:[%s1 + $0x858] sm:$0xff]
  %v314 = vld [vmem:[%s1 + $0x860] sm:$0xff]
  %v315 = vld [vmem:[%s1 + $0x868] sm:$0xff]
  %v316 = vld [vmem:[%s1 + $0x870] sm:$0xff]
  %v317 = vld [vmem:[%s1 + $0x878] sm:$0xff]
  %v318 = vld [vmem:[%s1 + $0x880] sm:$0xff]
  %v319 = vld [vmem:[%s1 + $0x888] sm:$0xff]
  %v320 = vld [vmem:[%s1 + $0x890] sm:$0xff]
  %v321 = vld [vmem:[%s1 + $0x898] sm:$0xff]
  %v322 = vld [vmem:[%s1 + $0x8a0] sm:$0xff]
  %v323 = vld [vmem:[%s1 + $0x8a8] sm:$0xff]
  %v324 = vld [vmem:[%s1 + $0x8b0] sm:$0xff]
  %v325 = vld [vmem:[%s1 + $0x8b8] sm:$0xff]
  %v326 = vld [vmem:[%s1 + $0x8c0] sm:$0xff]
  %v327 = vld [vmem:[%s1 + $0x8c8] sm:$0xff]
  %v328 = vld [vmem:[%s1 + $0x8d0] sm:$0xff]
  %v329 = vld [vmem:[%s1 + $0x8d8] sm:$0xff]
  %v330 = vld [vmem:[%s1 + $0x8e0] sm:$0xff]
  %v331 = vld [vmem:[%s1 + $0x8e8] sm:$0xff]
  %v332 = vld [vmem:[%s1 + $0x8f0] sm:$0xff]
  %v333 = vld [vmem:[%s1 + $0x8f8] sm:$0xff]
  %v334 = vld [vmem:[%s1 + $0x900] sm:$0xff]
  %v335 = vld [vmem:[%s1 + $0x908] sm:$0xff]
  %v336 = vld [vmem:[%s1 + $0x910] sm:$0xff]
  %v337 = vld [vmem:[%s1 + $0x918] sm:$0xff]
  %v338 = vld [vmem:[%s1 + $0x920] sm:$0xff]
  %v339 = vld [vmem:[%s1 + $0x928] sm:$0xff]
  %v340 = vld [vmem:[%s1 + $0x930] sm:$0xff]
  %v341 = vld [vmem:[%s1 + $0x938] sm:$0xff]
  %v342 = vld [vmem:[%s1 + $0x940] sm:$0xff]
  %v343 = vld [vmem:[%s1 + $0x948] sm:$0xff]
  %v344 = vld [vmem:[%s1 + $0x950] sm:$0xff]
  %v345 = vld [vmem:[%s1 + $0x958] sm:$0xff]
  %v346 = vld [vmem:[%s1 + $0x960] sm:$0xff]
  %v347 = vld [vmem:[%s1 + $0x968] sm:$0xff]
  %v348 = vld [vmem:[%s1 + $0x970] sm:$0xff]
  %v349 = vld [vmem:[%s1 + $0x978] sm:$0xff]
  %v350 = vld [vmem:[%s1 + $0x980] sm:$0xff]
  %v351 = vld [vmem:[%s1 + $0x988] sm:$0xff]
  %v352 = vld [vmem:[%s1 + $0x990] sm:$0xff]
  %v353 = vld [vmem:[%s1 + $0x998] sm:$0xff]
  %v354 = vld [vmem:[%s1 + $0x9a0] sm:$0xff]
  %v355 = vld [vmem:[%s1 + $0x9a8] sm:$0xff]
  %v356 = vld [vmem:[%s1 + $0x9b0] sm:$0xff]
  %v357 = vld [vmem:[%s1 + $0x9b8] sm:$0xff]
  %v358 = vld [vmem:[%s1 + $0x9c0] sm:$0xff]
  %v359 = vld [vmem:[%s1 + $0x9c8] sm:$0xff]
  %v360 = vld [vmem:[%s1 + $0x9d0] sm:$0xff]
  %v361 = vld [vmem:[%s1 + $0x9d8] sm:$0xff]
  %v362 = vld [vmem:[%s1 + $0x9e0] sm:$0xff]
  %v363 = vld [vmem:[%s1 + $0x9e8] sm:$0xff]
  %v364 = vld [vmem:[%s1 + $0x9f0] sm:$0xff]
  %v365 = vld [vmem:[%s1 + $0x9f8] sm:$0xff]
  %v366 = vld [vmem:[%s1 + $0xa00] sm:$0xff]
  %v367 = vld [vmem:[%s1 + $0xa08] sm:$0xff]
  %v368 = vld [vmem:[%s1 + $0xa10] sm:$0xff]
  %v369 = vld [vmem:[%s1 + $0xa18] sm:$0xff]
  %v370 = vld [vmem:[%s1 + $0xa20] sm:$0xff]
  %v371 = vld [vmem:[%s1 + $0xa28] sm:$0xff]
  %v372 = vld [vmem:[%s1 + $0xa30] sm:$0xff]
  %v373 = vld [vmem:[%s1 + $0xa38] sm:$0xff]
  %v374 = vld [vmem:[%s1 + $0xa40] sm:$0xff]
  %v375 = vld [vmem:[%s1 + $0xa48] sm:$0xff]
  %v376 = vld [vmem:[%s1 + $0xa50] sm:$0xff]
  %v377 = vld [vmem:[%s1 + $0xa58] sm:$0xff]
  %v378 = vld [vmem:[%s1 + $0xa60] sm:$0xff]
  %v379 = vld [vmem:[%s1 + $0xa68] sm:$0xff]
  %v380 = vld [vmem:[%s1 + $0xa70] sm:$0xff]
  %v381 = vld [vmem:[%s1 + $0xa78] sm:$0xff]
  %v382 = vld [vmem:[%s1 + $0xa80] sm:$0xff]
  %v383 = vld [vmem:[%s1 + $0xa88] sm:$0xff]
  %v384 = vld [vmem:[%s1 + $0xa90] sm:$0xff]
  %v385 = vld [vmem:[%s1 + $0xa98] sm:$0xff]
  %v386 = vld [vmem:[%s1 + $0xaa0] sm:$0xff]
  %v387 = vld [vmem:[%s1 + $0xaa8] sm:$0xff]
  %v388 = vld [vmem:[%s1 + $0xab0] sm:$0xff]
  %v389 = vld [vmem:[%s1 + $0xab8] sm:$0xff]
  %v390 = vld [vmem:[%s1 + $0xac0] sm:$0xff]
  %v391 = vld [vmem:[%s1 + $0xac8] sm:$0xff]
  %v392 = vld [vmem:[%s1 + $0xad0] sm:$0xff]
  %v393 = vld [vmem:[%s1 + $0xad8] sm:$0xff]
  %v394 = vld [vmem:[%s1 + $0xae0] sm:$0xff]
  %v395 = vld [vmem:[%s1 + $0xae8] sm:$0xff]
  %v396 = vld [vmem:[%s1 + $0xaf0] sm:$0xff]
  %v397 = vld [vmem:[%s1 + $0xaf8] sm:$0xff]
  %v398 = vld [vmem:[%s1 + $0xb00] sm:$0xff]
  %v399 = vld [vmem:[%s1 + $0xb08] sm:$0xff]
  %v400 = vld [vmem:[%s1 + $0xb10] sm:$0xff]
  %v401 = vld [vmem:[%s1 + $0xb18] sm:$0xff]
  %v402 = vld [vmem:[%s1 + $0xb20] sm:$0xff]
  %v403 = vld [vmem:[%s1 + $0xb28] sm:$0xff]
  %v404 = vld [vmem:[%s1 + $0xb30] sm:$0xff]
  %v405 = vld [vmem:[%s1 + $0xb38] sm:$0xff]
  %v406 = vld [vmem:[%s1 + $0xb40] sm:$0xff]
  %v407 = vld [vmem:[%s1 + $0xb48] sm:$0xff]
  %v408 = vld [vmem:[%s1 + $0xb50] sm:$0xff]
  %v409 = vld [vmem:[%s1 + $0xb58] sm:$0xff]
  %v410 = vld [vmem:[%s1 + $0xb60] sm:$0xff]
  %v411 = vld [vmem:[%s1 + $0xb68] sm:$0xff]
  %v412 = vld [vmem:[%s1 + $0xb70] sm:$0xff]
  %v413 = vld [vmem:[%s1 + $0xb78] sm:$0xff]
  %v414 = vld [vmem:[%s1 + $0xb80] sm:$0xff]
  %v415 = vld [vmem:[%s1 + $0xb88] sm:$0xff]
  %v416 = vld [vmem:[%s1 + $0xb90] sm:$0xff]
  %v417 = vld [vmem:[%s1 + $0xb98] sm:$0xff]
  %v418 = vld [vmem:[%s1 + $0xba0] sm:$0xff]
  %v419 = vld [vmem:[%s1 + $0xba8] sm:$0xff]
  %v420 = vld [vmem:[%s1 + $0xbb0] sm:$0xff]
  %v421 = vld [vmem:[%s1 + $0xbb8] sm:$0xff]
  %v422 = vld [vmem:[%s1 + $0xbc0] sm:$0xff]
  %v423 = vld [vmem:[%s1 + $0xbc8] sm:$0xff]
  %v424 = vld [vmem:[%s1 + $0xbd0] sm:$0xff]
  %v425 = vld [vmem:[%s1 + $0xbd8] sm:$0xff]
  %v426 = vld [vmem:[%s1 + $0xbe0] sm:$0xff]
  %v427 = vld [vmem:[%s1 + $0xbe8] sm:$0xff]
  %v428 = vld [vmem:[%s1 + $0xbf0] sm:$0xff]
  %v429 = vld [vmem:[%s1 + $0xbf8] sm:$0xff]
  %v430 = vld [vmem:[%s1 + $0xc00] sm:$0xff]
  %v431 = vld [vmem:[%s1 + $0xc08] sm:$0xff]
  %v432 = vld [vmem:[%s1 + $0xc10] sm:$0xff]
  %v433 = vld [vmem:[%s1 + $0xc18] sm:$0xff]
  %v434 = vld [vmem:[%s1 + $0xc20] sm:$0xff]
  %v435 = vld [vmem:[%s1 + $0xc28] sm:$0xff]
  %v436 = vld [vmem:[%s1 + $0xc30] sm:$0xff]
  %v437 = vld [vmem:[%s1 + $0xc38] sm:$0xff]
  %v438 = vld [vmem:[%s1 + $0xc40] sm:$0xff]
  %v439 = vld [vmem:[%s1 + $0xc48] sm:$0xff]
  %v440 = vld [vmem:[%s1 + $0xc50] sm:$0xff]
  %v441 = vld [vmem:[%s1 + $0xc58] sm:$0xff]
  %v442 = vld [vmem:[%s1 + $0xc60] sm:$0xff]
  %v443 = vld [vmem:[%s1 + $0xc68] sm:$0xff]
  %v444 = vld [vmem:[%s1 + $0xc70] sm:$0xff]
  %v445 = vld [vmem:[%s1 + $0xc78] sm:$0xff]
  %v446 = vld [vmem:[%s1 + $0xc80] sm:$0xff]
  %v447 = vld [vmem:[%s1 + $0xc88] sm:$0xff]
  %v448 = vld [vmem:[%s1 + $0xc90] sm:$0xff]
  %v449 = vld [vmem:[%s1 + $0xc98] sm:$0xff]
  %v450 = vld [vmem:[%s1 + $0xca0] sm:$0xff]
  %v451 = vld [vmem:[%s1 + $0xca8] sm:$0xff]
  %v452 = vld [vmem:[%s1 + $0xcb0] sm:$0xff]
  %v453 = vld [vmem:[%s1 + $0xcb8] sm:$0xff]
  %v454 = vld [vmem:[%s1 + $0xcc0] sm:$0xff]
  %v455 = vld [vmem:[%s1 + $0xcc8] sm:$0xff]
  %v456 = vld [vmem:[%s1 + $0xcd0] sm:$0xff]
  %v457 = vld [vmem:[%s1 + $0xcd8] sm:$0xff]
  %v458 = vld [vmem:[%s1 + $0xce0] sm:$0xff]
  %v459 = vld [vmem:[%s1 + $0xce8] sm:$0xff]
  %v460 = vld [vmem:[%s1 + $0xcf0] sm:$0xff]
  %v461 = vld [vmem:[%s1 + $0xcf8] sm:$0xff]
  %v462 = vld [vmem:[%s1 + $0xd00] sm:$0xff]
  %v463 = vld [vmem:[%s1 + $0xd08] sm:$0xff]
  %v464 = vld [vmem:[%s1 + $0xd10] sm:$0xff]
  %v465 = vld [vmem:[%s1 + $0xd18] sm:$0xff]
  %v466 = vld [vmem:[%s1 + $0xd20] sm:$0xff]
  %v467 = vld [vmem:[%s1 + $0xd28] sm:$0xff]
  %v468 = vld [vmem:[%s1 + $0xd30] sm:$0xff]
  %v469 = vld [vmem:[%s1 + $0xd38] sm:$0xff]
  %v470 = vld [vmem:[%s1 + $0xd40] sm:$0xff]
  %v471 = vld [vmem:[%s1 + $0xd48] sm:$0xff]
  %v472 = vld [vmem:[%s1 + $0xd50] sm:$0xff]
  %v473 = vld [vmem:[%s1 + $0xd58] sm:$0xff]
  %v474 = vld [vmem:[%s1 + $0xd60] sm:$0xff]
  %v475 = vld [vmem:[%s1 + $0xd68] sm:$0xff]
  %v476 = vld [vmem:[%s1 + $0xd70] sm:$0xff]
  %v477 = vld [vmem:[%s1 + $0xd78] sm:$0xff]
  %v478 = vld [vmem:[%s1 + $0xd80] sm:$0xff]
  %v479 = vld [vmem:[%s1 + $0xd88] sm:$0xff]
  %v480 = vld [vmem:[%s1 + $0xd90] sm:$0xff]
  %v481 = vld [vmem:[%s1 + $0xd98] sm:$0xff]
  %v482 = vld [vmem:[%s1 + $0xda0] sm:$0xff]
  %v483 = vld [vmem:[%s1 + $0xda8] sm:$0xff]
  %v484 = vld [vmem:[%s1 + $0xdb0] sm:$0xff]
  %v485 = vld [vmem:[%s1 + $0xdb8] sm:$0xff]
  %v486 = vld [vmem:[%s1 + $0xdc0] sm:$0xff]
  %v487 = vld [vmem:[%s1 + $0xdc8] sm:$0xff]
  %v488 = vld [vmem:[%s1 + $0xdd0] sm:$0xff]
  %v489 = vld [vmem:[%s1 + $0xdd8] sm:$0xff]
  %v490 = vld [vmem:[%s1 + $0xde0] sm:$0xff]
  %v491 = vld [vmem:[%s1 + $0xde8] sm:$0xff]
  %v492 = vld [vmem:[%s1 + $0xdf0] sm:$0xff]
  %v493 = vld [vmem:[%s1 + $0xdf8] sm:$0xff]
  %v494 = vld [vmem:[%s1 + $0xe00] sm:$0xff]
  %v495 = vld [vmem:[%s1 + $0xe08] sm:$0xff]
  %v496 = vld [vmem:[%s1 + $0xe10] sm:$0xff]
  %v497 = vld [vmem:[%s1 + $0xe18] sm:$0xff]
  %v498 = vld [vmem:[%s1 + $0xe20] sm:$0xff]
  %v499 = vld [vmem:[%s1 + $0xe28] sm:$0xff]
  %v500 = vld [vmem:[%s1 + $0xe30] sm:$0xff]
  %v501 = vld [vmem:[%s1 + $0xe38] sm:$0xff]
  %v502 = vld [vmem:[%s1 + $0xe40] sm:$0xff]
  %v503 = vld [vmem:[%s1 + $0xe48] sm:$0xff]
  %v504 = vld [vmem:[%s1 + $0xe50] sm:$0xff]
  %v505 = vld [vmem:[%s1 + $0xe58] sm:$0xff]
  %v506 = vld [vmem:[%s1 + $0xe60] sm:$0xff]
  %v507 = vld [vmem:[%s1 + $0xe68] sm:$0xff]
  %v508 = vld [vmem:[%s1 + $0xe70] sm:$0xff]
  %v509 = vld [vmem:[%s1 + $0xe78] sm:$0xff]
  %v510 = vld [vmem:[%s1 + $0xe80] sm:$0xff]
  %v511 = vld [vmem:[%s1 + $0xe88] sm:$0xff]
  %v512 = vld [vmem:[%s1 + $0xe90] sm:$0xff]
  %v513 = vld [vmem:[%s1 + $0xe98] sm:$0xff]
  %v514 = vld [vmem:[%s1 + $0xea0] sm:$0xff]
  %v515 = vld [vmem:[%s1 + $0xea8] sm:$0xff]
  %v516 = vld [vmem:[%s1 + $0xeb0] sm:$0xff]
  %v517 = vld [vmem:[%s1 + $0xeb8] sm:$0xff]
  %v518 = vld [vmem:[%s1 + $0xec0] sm:$0xff]
  %v519 = vld [vmem:[%s1 + $0xec8] sm:$0xff]
  %v520 = vld [vmem:[%s1 + $0xed0] sm:$0xff]
  %v521 = vld [vmem:[%s1 + $0xed8] sm:$0xff]
  %v522 = vld [vmem:[%s1 + $0xee0] sm:$0xff]
  %v523 = vld [vmem:[%s1 + $0xee8] sm:$0xff]
  %v524 = vld [vmem:[%s1 + $0xef0] sm:$0xff]
  %v525 = vld [vmem:[%s1 + $0xef8] sm:$0xff]
  %v526 = vld [vmem:[%s1 + $0xf00] sm:$0xff]
  %v527 = vld [vmem:[%s1 + $0xf08] sm:$0xff]
  %v528 = vld [vmem:[%s1 + $0xf10] sm:$0xff]
  %v529 = vld [vmem:[%s1 + $0xf18] sm:$0xff]
  %v530 = vld [vmem:[%s1 + $0xf20] sm:$0xff]
  %v531 = vld [vmem:[%s1 + $0xf28] sm:$0xff]
  %v532 = vld [vmem:[%s1 + $0xf30] sm:$0xff]
  %v533 = vld [vmem:[%s1 + $0xf38] sm:$0xff]
  %v534 = vld [vmem:[%s1 + $0xf40] sm:$0xff]
  %v535 = vld [vmem:[%s1 + $0xf48] sm:$0xff]
  %v536 = vld [vmem:[%s1 + $0xf50] sm:$0xff]
  %v537 = vld [vmem:[%s1 + $0xf58] sm:$0xff]
  %v538 = vld [vmem:[%s1 + $0xf60] sm:$0xff]
  %v539 = vld [vmem:[%s1 + $0xf68] sm:$0xff]
  %v540 = vld [vmem:[%s1 + $0xf70] sm:$0xff]
  %v541 = vld [vmem:[%s1 + $0xf78] sm:$0xff]
  %v542 = vld [vmem:[%s1 + $0xf80] sm:$0xff]
  %v543 = vld [vmem:[%s1 + $0xf88] sm:$0xff]
  %v544 = vld [vmem:[%s1 + $0xf90] sm:$0xff]
  %v545 = vld [vmem:[%s1 + $0xf98] sm:$0xff]
  %v546 = vld [vmem:[%s1 + $0xfa0] sm:$0xff]
  %v547 = vld [vmem:[%s1 + $0xfa8] sm:$0xff]
  %v548 = vld [vmem:[%s1 + $0xfb0] sm:$0xff]
  %v549 = vld [vmem:[%s1 + $0xfb8] sm:$0xff]
  %v550 = vld [vmem:[%s1 + $0xfc0] sm:$0xff]
  %v551 = vld [vmem:[%s1 + $0xfc8] sm:$0xff]
  %v552 = vld [vmem:[%s1 + $0xfd0] sm:$0xff]
  %v553 = vld [vmem:[%s1 + $0xfd8] sm:$0xff]
  %v554 = vld [vmem:[%s1 + $0xfe0] sm:$0xff]
  %v555 = vld [vmem:[%s1 + $0xfe8] sm:$0xff]
  %v556 = vld [vmem:[%s1 + $0xff0] sm:$0xff]
  %v557 = vld [vmem:[%s1 + $0xff8] sm:$0xff]
  %v558 = vpack.c.bf16 %v48, %v46
  %v559 = vpack.c.bf16 %v49, %v47
  %v560 = vpack.c.bf16 %v52, %v50
  %v561 = vpack.c.bf16 %v53, %v51
  %v562 = vpack.c.bf16 %v56, %v54
  %v563 = vpack.c.bf16 %v57, %v55
  %v564 = vpack.c.bf16 %v60, %v58
  %v565 = vpack.c.bf16 %v61, %v59
  %v566 = vpack.c.bf16 %v64, %v62
  %v567 = vpack.c.bf16 %v65, %v63
  %v568 = vpack.c.bf16 %v68, %v66
  %v569 = vpack.c.bf16 %v69, %v67
  %v570 = vpack.c.bf16 %v72, %v70
  %v571 = vpack.c.bf16 %v73, %v71
  %v572 = vpack.c.bf16 %v76, %v74
  %v573 = vpack.c.bf16 %v77, %v75
  %v574 = vpack.c.bf16 %v80, %v78
  %v575 = vpack.c.bf16 %v81, %v79
  %v576 = vpack.c.bf16 %v84, %v82
  %v577 = vpack.c.bf16 %v85, %v83
  %v578 = vpack.c.bf16 %v88, %v86
  %v579 = vpack.c.bf16 %v89, %v87
  %v580 = vpack.c.bf16 %v92, %v90
  %v581 = vpack.c.bf16 %v93, %v91
  %v582 = vpack.c.bf16 %v96, %v94
  %v583 = vpack.c.bf16 %v97, %v95
  %v584 = vpack.c.bf16 %v100, %v98
  %v585 = vpack.c.bf16 %v101, %v99
  %v586 = vpack.c.bf16 %v104, %v102
  %v587 = vpack.c.bf16 %v105, %v103
  %v588 = vpack.c.bf16 %v108, %v106
  %v589 = vpack.c.bf16 %v109, %v107
  %v590 = vpack.c.bf16 %v112, %v110
  %v591 = vpack.c.bf16 %v113, %v111
  %v592 = vpack.c.bf16 %v116, %v114
  %v593 = vpack.c.bf16 %v117, %v115
  %v594 = vpack.c.bf16 %v120, %v118
  %v595 = vpack.c.bf16 %v121, %v119
  %v596 = vpack.c.bf16 %v124, %v122
  %v597 = vpack.c.bf16 %v125, %v123
  %v598 = vpack.c.bf16 %v128, %v126
  %v599 = vpack.c.bf16 %v129, %v127
  %v600 = vpack.c.bf16 %v132, %v130
  %v601 = vpack.c.bf16 %v133, %v131
  %v602 = vpack.c.bf16 %v136, %v134
  %v603 = vpack.c.bf16 %v137, %v135
  %v604 = vpack.c.bf16 %v140, %v138
  %v605 = vpack.c.bf16 %v141, %v139
  %v606 = vpack.c.bf16 %v144, %v142
  %v607 = vpack.c.bf16 %v145, %v143
  %v608 = vpack.c.bf16 %v148, %v146
  %v609 = vpack.c.bf16 %v149, %v147
  %v610 = vpack.c.bf16 %v152, %v150
  %v611 = vpack.c.bf16 %v153, %v151
  %v612 = vpack.c.bf16 %v156, %v154
  %v613 = vpack.c.bf16 %v157, %v155
  %v614 = vpack.c.bf16 %v160, %v158
  %v615 = vpack.c.bf16 %v161, %v159
  %v616 = vpack.c.bf16 %v164, %v162
  %v617 = vpack.c.bf16 %v165, %v163
  %v618 = vpack.c.bf16 %v168, %v166
  %v619 = vpack.c.bf16 %v169, %v167
  %v620 = vpack.c.bf16 %v172, %v170
  %v621 = vpack.c.bf16 %v173, %v171
  %v622 = vpack.c.bf16 %v176, %v174
  %v623 = vpack.c.bf16 %v177, %v175
  %v624 = vpack.c.bf16 %v180, %v178
  %v625 = vpack.c.bf16 %v181, %v179
  %v626 = vpack.c.bf16 %v184, %v182
  %v627 = vpack.c.bf16 %v185, %v183
  %v628 = vpack.c.bf16 %v188, %v186
  %v629 = vpack.c.bf16 %v189, %v187
  %v630 = vpack.c.bf16 %v192, %v190
  %v631 = vpack.c.bf16 %v193, %v191
  %v632 = vpack.c.bf16 %v196, %v194
  %v633 = vpack.c.bf16 %v197, %v195
  %v634 = vpack.c.bf16 %v200, %v198
  %v635 = vpack.c.bf16 %v201, %v199
  %v636 = vpack.c.bf16 %v204, %v202
  %v637 = vpack.c.bf16 %v205, %v203
  %v638 = vpack.c.bf16 %v208, %v206
  %v639 = vpack.c.bf16 %v209, %v207
  %v640 = vpack.c.bf16 %v212, %v210
  %v641 = vpack.c.bf16 %v213, %v211
  %v642 = vpack.c.bf16 %v216, %v214
  %v643 = vpack.c.bf16 %v217, %v215
  %v644 = vpack.c.bf16 %v220, %v218
  %v645 = vpack.c.bf16 %v221, %v219
  %v646 = vpack.c.bf16 %v224, %v222
  %v647 = vpack.c.bf16 %v225, %v223
  %v648 = vpack.c.bf16 %v228, %v226
  %v649 = vpack.c.bf16 %v229, %v227
  %v650 = vpack.c.bf16 %v232, %v230
  %v651 = vpack.c.bf16 %v233, %v231
  %v652 = vpack.c.bf16 %v236, %v234
  %v653 = vpack.c.bf16 %v237, %v235
  %v654 = vpack.c.bf16 %v240, %v238
  %v655 = vpack.c.bf16 %v241, %v239
  %v656 = vpack.c.bf16 %v244, %v242
  %v657 = vpack.c.bf16 %v245, %v243
  %v658 = vpack.c.bf16 %v248, %v246
  %v659 = vpack.c.bf16 %v249, %v247
  %v660 = vpack.c.bf16 %v252, %v250
  %v661 = vpack.c.bf16 %v253, %v251
  %v662 = vpack.c.bf16 %v256, %v254
  %v663 = vpack.c.bf16 %v257, %v255
  %v664 = vpack.c.bf16 %v260, %v258
  %v665 = vpack.c.bf16 %v261, %v259
  %v666 = vpack.c.bf16 %v264, %v262
  %v667 = vpack.c.bf16 %v265, %v263
  %v668 = vpack.c.bf16 %v268, %v266
  %v669 = vpack.c.bf16 %v269, %v267
  %v670 = vpack.c.bf16 %v272, %v270
  %v671 = vpack.c.bf16 %v273, %v271
  %v672 = vpack.c.bf16 %v276, %v274
  %v673 = vpack.c.bf16 %v277, %v275
  %v674 = vpack.c.bf16 %v280, %v278
  %v675 = vpack.c.bf16 %v281, %v279
  %v676 = vpack.c.bf16 %v284, %v282
  %v677 = vpack.c.bf16 %v285, %v283
  %v678 = vpack.c.bf16 %v288, %v286
  %v679 = vpack.c.bf16 %v289, %v287
  %v680 = vpack.c.bf16 %v292, %v290
  %v681 = vpack.c.bf16 %v293, %v291
  %v682 = vpack.c.bf16 %v296, %v294
  %v683 = vpack.c.bf16 %v297, %v295
  %v684 = vpack.c.bf16 %v300, %v298
  %v685 = vpack.c.bf16 %v301, %v299
  %v686 = vpack.c.bf16 %v304, %v302
  %v687 = vpack.c.bf16 %v305, %v303
  %v688 = vpack.c.bf16 %v308, %v306
  %v689 = vpack.c.bf16 %v309, %v307
  %v690 = vpack.c.bf16 %v312, %v310
  %v691 = vpack.c.bf16 %v313, %v311
  %v692 = vpack.c.bf16 %v316, %v314
  %v693 = vpack.c.bf16 %v317, %v315
  %v694 = vpack.c.bf16 %v320, %v318
  %v695 = vpack.c.bf16 %v321, %v319
  %v696 = vpack.c.bf16 %v324, %v322
  %v697 = vpack.c.bf16 %v325, %v323
  %v698 = vpack.c.bf16 %v328, %v326
  %v699 = vpack.c.bf16 %v329, %v327
  %v700 = vpack.c.bf16 %v332, %v330
  %v701 = vpack.c.bf16 %v333, %v331
  %v702 = vpack.c.bf16 %v336, %v334
  %v703 = vpack.c.bf16 %v337, %v335
  %v704 = vpack.c.bf16 %v340, %v338
  %v705 = vpack.c.bf16 %v341, %v339
  %v706 = vpack.c.bf16 %v344, %v342
  %v707 = vpack.c.bf16 %v345, %v343
  %v708 = vpack.c.bf16 %v348, %v346
  %v709 = vpack.c.bf16 %v349, %v347
  %v710 = vpack.c.bf16 %v352, %v350
  %v711 = vpack.c.bf16 %v353, %v351
  %v712 = vpack.c.bf16 %v356, %v354
  %v713 = vpack.c.bf16 %v357, %v355
  %v714 = vpack.c.bf16 %v360, %v358
  %v715 = vpack.c.bf16 %v361, %v359
  %v716 = vpack.c.bf16 %v364, %v362
  %v717 = vpack.c.bf16 %v365, %v363
  %v718 = vpack.c.bf16 %v368, %v366
  %v719 = vpack.c.bf16 %v369, %v367
  %v720 = vpack.c.bf16 %v372, %v370
  %v721 = vpack.c.bf16 %v373, %v371
  %v722 = vpack.c.bf16 %v376, %v374
  %v723 = vpack.c.bf16 %v377, %v375
  %v724 = vpack.c.bf16 %v380, %v378
  %v725 = vpack.c.bf16 %v381, %v379
  %v726 = vpack.c.bf16 %v384, %v382
  %v727 = vpack.c.bf16 %v385, %v383
  %v728 = vpack.c.bf16 %v388, %v386
  %v729 = vpack.c.bf16 %v389, %v387
  %v730 = vpack.c.bf16 %v392, %v390
  %v731 = vpack.c.bf16 %v393, %v391
  %v732 = vpack.c.bf16 %v396, %v394
  %v733 = vpack.c.bf16 %v397, %v395
  %v734 = vpack.c.bf16 %v400, %v398
  %v735 = vpack.c.bf16 %v401, %v399
  %v736 = vpack.c.bf16 %v404, %v402
  %v737 = vpack.c.bf16 %v405, %v403
  %v738 = vpack.c.bf16 %v408, %v406
  %v739 = vpack.c.bf16 %v409, %v407
  %v740 = vpack.c.bf16 %v412, %v410
  %v741 = vpack.c.bf16 %v413, %v411
  %v742 = vpack.c.bf16 %v416, %v414
  %v743 = vpack.c.bf16 %v417, %v415
  %v744 = vpack.c.bf16 %v420, %v418
  %v745 = vpack.c.bf16 %v421, %v419
  %v746 = vpack.c.bf16 %v424, %v422
  %v747 = vpack.c.bf16 %v425, %v423
  %v748 = vpack.c.bf16 %v428, %v426
  %v749 = vpack.c.bf16 %v429, %v427
  %v750 = vpack.c.bf16 %v432, %v430
  %v751 = vpack.c.bf16 %v433, %v431
  %v752 = vpack.c.bf16 %v436, %v434
  %v753 = vpack.c.bf16 %v437, %v435
  %v754 = vpack.c.bf16 %v440, %v438
  %v755 = vpack.c.bf16 %v441, %v439
  %v756 = vpack.c.bf16 %v444, %v442
  %v757 = vpack.c.bf16 %v445, %v443
  %v758 = vpack.c.bf16 %v448, %v446
  %v759 = vpack.c.bf16 %v449, %v447
  %v760 = vpack.c.bf16 %v452, %v450
  %v761 = vpack.c.bf16 %v453, %v451
  %v762 = vpack.c.bf16 %v456, %v454
  %v763 = vpack.c.bf16 %v457, %v455
  %v764 = vpack.c.bf16 %v460, %v458
  %v765 = vpack.c.bf16 %v461, %v459
  %v766 = vpack.c.bf16 %v464, %v462
  %v767 = vpack.c.bf16 %v465, %v463
  %v768 = vpack.c.bf16 %v468, %v466
  %v769 = vpack.c.bf16 %v469, %v467
  %v770 = vpack.c.bf16 %v472, %v470
  %v771 = vpack.c.bf16 %v473, %v471
  %v772 = vpack.c.bf16 %v476, %v474
  %v773 = vpack.c.bf16 %v477, %v475
  %v774 = vpack.c.bf16 %v480, %v478
  %v775 = vpack.c.bf16 %v481, %v479
  %v776 = vpack.c.bf16 %v484, %v482
  %v777 = vpack.c.bf16 %v485, %v483
  %v778 = vpack.c.bf16 %v488, %v486
  %v779 = vpack.c.bf16 %v489, %v487
  %v780 = vpack.c.bf16 %v492, %v490
  %v781 = vpack.c.bf16 %v493, %v491
  %v782 = vpack.c.bf16 %v496, %v494
  %v783 = vpack.c.bf16 %v497, %v495
  %v784 = vpack.c.bf16 %v500, %v498
  %v785 = vpack.c.bf16 %v501, %v499
  %v786 = vpack.c.bf16 %v504, %v502
  %v787 = vpack.c.bf16 %v505, %v503
  %v788 = vpack.c.bf16 %v508, %v506
  %v789 = vpack.c.bf16 %v509, %v507
  %v790 = vpack.c.bf16 %v512, %v510
  %v791 = vpack.c.bf16 %v513, %v511
  %v792 = vpack.c.bf16 %v516, %v514
  %v793 = vpack.c.bf16 %v517, %v515
  %v794 = vpack.c.bf16 %v520, %v518
  %v795 = vpack.c.bf16 %v521, %v519
  %v796 = vpack.c.bf16 %v524, %v522
  %v797 = vpack.c.bf16 %v525, %v523
  %v798 = vpack.c.bf16 %v528, %v526
  %v799 = vpack.c.bf16 %v529, %v527
  %v800 = vpack.c.bf16 %v532, %v530
  %v801 = vpack.c.bf16 %v533, %v531
  %v802 = vpack.c.bf16 %v536, %v534
  %v803 = vpack.c.bf16 %v537, %v535
  %v804 = vpack.c.bf16 %v540, %v538
  %v805 = vpack.c.bf16 %v541, %v539
  %v806 = vpack.c.bf16 %v544, %v542
  %v807 = vpack.c.bf16 %v545, %v543
  %v808 = vpack.c.bf16 %v548, %v546
  %v809 = vpack.c.bf16 %v549, %v547
  %v810 = vpack.c.bf16 %v552, %v550
  %v811 = vpack.c.bf16 %v553, %v551
  %v812 = vpack.c.bf16 %v556, %v554
  %v813 = vpack.c.bf16 %v557, %v555
  %v814 = vld [vmem:[%s2] sm:$0x3]
  %v816 = vlaneseq
  %v817 = vshrl.u32 %v816, 7
  %v818 = vsub.s32 0, %v817
  %v819 = vrot.slane %v814, %v818
  %v820 = vlaneseq
  %v821 = vshrl.u32 %v820, 7
  %v822 = vsub.s32 1, %v821
  %v823 = vrot.slane %v814, %v822
  %826 = vmatprep.subr.bf16.mxu0 %v573
  %827 = vmatpush1.bf16.msra.mxu0 %v572
  %828 = vmatprep.subr.bf16.mxu0 %v571
  %829 = vmatpush1.bf16.msra.mxu0 %v570
  %830 = vmatprep.subr.bf16.mxu0 %v569
  %831 = vmatpush1.bf16.msra.mxu0 %v568
  %832 = vmatprep.subr.bf16.mxu0 %v567
  %833 = vmatpush1.bf16.msra.mxu0 %v566
  %834 = vmatprep.subr.bf16.mxu0 %v565
  %835 = vmatpush1.bf16.msra.mxu0 %v564
  %836 = vmatprep.subr.bf16.mxu0 %v563
  %837 = vmatpush1.bf16.msra.mxu0 %v562
  %838 = vmatprep.subr.bf16.mxu0 %v561
  %839 = vmatpush1.bf16.msra.mxu0 %v560
  %840 = vmatprep.subr.bf16.mxu0 %v559
  %841 = vmatpush1.bf16.msra.mxu0 %v558
  %842 = vmatprep.subr.bf16.mxu0 %v589
  %843 = vmatpush2.bf16.msra.mxu0 %v588
  %844 = vmatprep.subr.bf16.mxu0 %v587
  %845 = vmatpush2.bf16.msra.mxu0 %v586
  %846 = vmatprep.subr.bf16.mxu0 %v585
  %847 = vmatpush2.bf16.msra.mxu0 %v584
  %848 = vmatprep.subr.bf16.mxu0 %v583
  %849 = vmatpush2.bf16.msra.mxu0 %v582
  %850 = vmatprep.subr.bf16.mxu0 %v581
  %851 = vmatpush2.bf16.msra.mxu0 %v580
  %852 = vmatprep.subr.bf16.mxu0 %v579
  %853 = vmatpush2.bf16.msra.mxu0 %v578
  %854 = vmatprep.subr.bf16.mxu0 %v577
  %855 = vmatpush2.bf16.msra.mxu0 %v576
  %856 = vmatprep.subr.bf16.mxu0 %v575
  %857 = vmatpush2.bf16.msra.mxu0 %v574
  %858 = vmatprep.mubr.bf16.mxu0 %v31
  %859 = vmatmul.mubr.bf16.gmra.mxu0 %v30
  %v860 = vpop.f32.mrf.mxu0
  %v861 = vadd.f32 %v819, %v860
  %v862 = vpop.f32.mrf.mxu0
  %v863 = vadd.f32 %v823, %v862
  %v864 = vpop.f32.mrf.mxu0
  %v865 = vpop.f32.mrf.mxu0
  %866 = vdwg.mxu0
  %867 = vmatprep.subr.bf16.mxu0 %v605
  %868 = vmatpush1.bf16.msra.mxu0 %v604
  %869 = vmatprep.subr.bf16.mxu0 %v603
  %870 = vmatpush1.bf16.msra.mxu0 %v602
  %871 = vmatprep.subr.bf16.mxu0 %v601
  %872 = vmatpush1.bf16.msra.mxu0 %v600
  %873 = vmatprep.subr.bf16.mxu0 %v599
  %874 = vmatpush1.bf16.msra.mxu0 %v598
  %875 = vmatprep.subr.bf16.mxu0 %v597
  %876 = vmatpush1.bf16.msra.mxu0 %v596
  %877 = vmatprep.subr.bf16.mxu0 %v595
  %878 = vmatpush1.bf16.msra.mxu0 %v594
  %879 = vmatprep.subr.bf16.mxu0 %v593
  %880 = vmatpush1.bf16.msra.mxu0 %v592
  %881 = vmatprep.subr.bf16.mxu0 %v591
  %882 = vmatpush1.bf16.msra.mxu0 %v590
  %883 = vmatprep.subr.bf16.mxu0 %v621
  %884 = vmatpush2.bf16.msra.mxu0 %v620
  %885 = vmatprep.subr.bf16.mxu0 %v619
  %886 = vmatpush2.bf16.msra.mxu0 %v618
  %887 = vmatprep.subr.bf16.mxu0 %v617
  %888 = vmatpush2.bf16.msra.mxu0 %v616
  %889 = vmatprep.subr.bf16.mxu0 %v615
  %890 = vmatpush2.bf16.msra.mxu0 %v614
  %891 = vmatprep.subr.bf16.mxu0 %v613
  %892 = vmatpush2.bf16.msra.mxu0 %v612
  %893 = vmatprep.subr.bf16.mxu0 %v611
  %894 = vmatpush2.bf16.msra.mxu0 %v610
  %895 = vmatprep.subr.bf16.mxu0 %v609
  %896 = vmatpush2.bf16.msra.mxu0 %v608
  %897 = vmatprep.subr.bf16.mxu0 %v607
  %898 = vmatpush2.bf16.msra.mxu0 %v606
  %899 = vmatprep.mubr.bf16.mxu0 %v33
  %900 = vmatmul.mubr.bf16.gmra.mxu0 %v32
  %v901 = vpop.f32.mrf.mxu0
  %v902 = vadd.f32 %v861, %v901
  %v903 = vpop.f32.mrf.mxu0
  %v904 = vadd.f32 %v863, %v903
  %v905 = vpop.f32.mrf.mxu0
  %v906 = vpop.f32.mrf.mxu0
  %907 = vdwg.mxu0
  %908 = vmatprep.subr.bf16.mxu0 %v637
  %909 = vmatpush1.bf16.msra.mxu0 %v636
  %910 = vmatprep.subr.bf16.mxu0 %v635
  %911 = vmatpush1.bf16.msra.mxu0 %v634
  %912 = vmatprep.subr.bf16.mxu0 %v633
  %913 = vmatpush1.bf16.msra.mxu0 %v632
  %914 = vmatprep.subr.bf16.mxu0 %v631
  %915 = vmatpush1.bf16.msra.mxu0 %v630
  %916 = vmatprep.subr.bf16.mxu0 %v629
  %917 = vmatpush1.bf16.msra.mxu0 %v628
  %918 = vmatprep.subr.bf16.mxu0 %v627
  %919 = vmatpush1.bf16.msra.mxu0 %v626
  %920 = vmatprep.subr.bf16.mxu0 %v625
  %921 = vmatpush1.bf16.msra.mxu0 %v624
  %922 = vmatprep.subr.bf16.mxu0 %v623
  %923 = vmatpush1.bf16.msra.mxu0 %v622
  %924 = vmatprep.subr.bf16.mxu0 %v653
  %925 = vmatpush2.bf16.msra.mxu0 %v652
  %926 = vmatprep.subr.bf16.mxu0 %v651
  %927 = vmatpush2.bf16.msra.mxu0 %v650
  %928 = vmatprep.subr.bf16.mxu0 %v649
  %929 = vmatpush2.bf16.msra.mxu0 %v648
  %930 = vmatprep.subr.bf16.mxu0 %v647
  %931 = vmatpush2.bf16.msra.mxu0 %v646
  %932 = vmatprep.subr.bf16.mxu0 %v645
  %933 = vmatpush2.bf16.msra.mxu0 %v644
  %934 = vmatprep.subr.bf16.mxu0 %v643
  %935 = vmatpush2.bf16.msra.mxu0 %v642
  %936 = vmatprep.subr.bf16.mxu0 %v641
  %937 = vmatpush2.bf16.msra.mxu0 %v640
  %938 = vmatprep.subr.bf16.mxu0 %v639
  %939 = vmatpush2.bf16.msra.mxu0 %v638
  %940 = vmatprep.mubr.bf16.mxu0 %v35
  %941 = vmatmul.mubr.bf16.gmra.mxu0 %v34
  %v942 = vpop.f32.mrf.mxu0
  %v943 = vadd.f32 %v902, %v942
  %v944 = vpop.f32.mrf.mxu0
  %v945 = vadd.f32 %v904, %v944
  %v946 = vpop.f32.mrf.mxu0
  %v947 = vpop.f32.mrf.mxu0
  %948 = vdwg.mxu0
  %949 = vmatprep.subr.bf16.mxu0 %v669
  %950 = vmatpush1.bf16.msra.mxu0 %v668
  %951 = vmatprep.subr.bf16.mxu0 %v667
  %952 = vmatpush1.bf16.msra.mxu0 %v666
  %953 = vmatprep.subr.bf16.mxu0 %v665
  %954 = vmatpush1.bf16.msra.mxu0 %v664
  %955 = vmatprep.subr.bf16.mxu0 %v663
  %956 = vmatpush1.bf16.msra.mxu0 %v662
  %957 = vmatprep.subr.bf16.mxu0 %v661
  %958 = vmatpush1.bf16.msra.mxu0 %v660
  %959 = vmatprep.subr.bf16.mxu0 %v659
  %960 = vmatpush1.bf16.msra.mxu0 %v658
  %961 = vmatprep.subr.bf16.mxu0 %v657
  %962 = vmatpush1.bf16.msra.mxu0 %v656
  %963 = vmatprep.subr.bf16.mxu0 %v655
  %964 = vmatpush1.bf16.msra.mxu0 %v654
  %965 = vmatprep.subr.bf16.mxu0 %v685
  %966 = vmatpush2.bf16.msra.mxu0 %v684
  %967 = vmatprep.subr.bf16.mxu0 %v683
  %968 = vmatpush2.bf16.msra.mxu0 %v682
  %969 = vmatprep.subr.bf16.mxu0 %v681
  %970 = vmatpush2.bf16.msra.mxu0 %v680
  %971 = vmatprep.subr.bf16.mxu0 %v679
  %972 = vmatpush2.bf16.msra.mxu0 %v678
  %973 = vmatprep.subr.bf16.mxu0 %v677
  %974 = vmatpush2.bf16.msra.mxu0 %v676
  %975 = vmatprep.subr.bf16.mxu0 %v675
  %976 = vmatpush2.bf16.msra.mxu0 %v674
  %977 = vmatprep.subr.bf16.mxu0 %v673
  %978 = vmatpush2.bf16.msra.mxu0 %v672
  %979 = vmatprep.subr.bf16.mxu0 %v671
  %980 = vmatpush2.bf16.msra.mxu0 %v670
  %981 = vmatprep.mubr.bf16.mxu0 %v37
  %982 = vmatmul.mubr.bf16.gmra.mxu0 %v36
  %v983 = vpop.f32.mrf.mxu0
  %v984 = vadd.f32 %v943, %v983
  %v985 = vpop.f32.mrf.mxu0
  %v986 = vadd.f32 %v945, %v985
  %v987 = vpop.f32.mrf.mxu0
  %v988 = vpop.f32.mrf.mxu0
  %989 = vdwg.mxu0
  %990 = vmatprep.subr.bf16.mxu0 %v701
  %991 = vmatpush1.bf16.msra.mxu0 %v700
  %992 = vmatprep.subr.bf16.mxu0 %v699
  %993 = vmatpush1.bf16.msra.mxu0 %v698
  %994 = vmatprep.subr.bf16.mxu0 %v697
  %995 = vmatpush1.bf16.msra.mxu0 %v696
  %996 = vmatprep.subr.bf16.mxu0 %v695
  %997 = vmatpush1.bf16.msra.mxu0 %v694
  %998 = vmatprep.subr.bf16.mxu0 %v693
  %999 = vmatpush1.bf16.msra.mxu0 %v692
  %1000 = vmatprep.subr.bf16.mxu0 %v691
  %1001 = vmatpush1.bf16.msra.mxu0 %v690
  %1002 = vmatprep.subr.bf16.mxu0 %v689
  %1003 = vmatpush1.bf16.msra.mxu0 %v688
  %1004 = vmatprep.subr.bf16.mxu0 %v687
  %1005 = vmatpush1.bf16.msra.mxu0 %v686
  %1006 = vmatprep.subr.bf16.mxu0 %v717
  %1007 = vmatpush2.bf16.msra.mxu0 %v716
  %1008 = vmatprep.subr.bf16.mxu0 %v715
  %1009 = vmatpush2.bf16.msra.mxu0 %v714
  %1010 = vmatprep.subr.bf16.mxu0 %v713
  %1011 = vmatpush2.bf16.msra.mxu0 %v712
  %1012 = vmatprep.subr.bf16.mxu0 %v711
  %1013 = vmatpush2.bf16.msra.mxu0 %v710
  %1014 = vmatprep.subr.bf16.mxu0 %v709
  %1015 = vmatpush2.bf16.msra.mxu0 %v708
  %1016 = vmatprep.subr.bf16.mxu0 %v707
  %1017 = vmatpush2.bf16.msra.mxu0 %v706
  %1018 = vmatprep.subr.bf16.mxu0 %v705
  %1019 = vmatpush2.bf16.msra.mxu0 %v704
  %1020 = vmatprep.subr.bf16.mxu0 %v703
  %1021 = vmatpush2.bf16.msra.mxu0 %v702
  %1022 = vmatprep.mubr.bf16.mxu0 %v39
  %1023 = vmatmul.mubr.bf16.gmra.mxu0 %v38
  %v1024 = vpop.f32.mrf.mxu0
  %v1025 = vadd.f32 %v984, %v1024
  %v1026 = vpop.f32.mrf.mxu0
  %v1027 = vadd.f32 %v986, %v1026
  %v1028 = vpop.f32.mrf.mxu0
  %v1029 = vpop.f32.mrf.mxu0
  %1030 = vdwg.mxu0
  %1031 = vmatprep.subr.bf16.mxu0 %v733
  %1032 = vmatpush1.bf16.msra.mxu0 %v732
  %1033 = vmatprep.subr.bf16.mxu0 %v731
  %1034 = vmatpush1.bf16.msra.mxu0 %v730
  %1035 = vmatprep.subr.bf16.mxu0 %v729
  %1036 = vmatpush1.bf16.msra.mxu0 %v728
  %1037 = vmatprep.subr.bf16.mxu0 %v727
  %1038 = vmatpush1.bf16.msra.mxu0 %v726
  %1039 = vmatprep.subr.bf16.mxu0 %v725
  %1040 = vmatpush1.bf16.msra.mxu0 %v724
  %1041 = vmatprep.subr.bf16.mxu0 %v723
  %1042 = vmatpush1.bf16.msra.mxu0 %v722
  %1043 = vmatprep.subr.bf16.mxu0 %v721
  %1044 = vmatpush1.bf16.msra.mxu0 %v720
  %1045 = vmatprep.subr.bf16.mxu0 %v719
  %1046 = vmatpush1.bf16.msra.mxu0 %v718
  %1047 = vmatprep.subr.bf16.mxu0 %v749
  %1048 = vmatpush2.bf16.msra.mxu0 %v748
  %1049 = vmatprep.subr.bf16.mxu0 %v747
  %1050 = vmatpush2.bf16.msra.mxu0 %v746
  %1051 = vmatprep.subr.bf16.mxu0 %v745
  %1052 = vmatpush2.bf16.msra.mxu0 %v744
  %1053 = vmatprep.subr.bf16.mxu0 %v743
  %1054 = vmatpush2.bf16.msra.mxu0 %v742
  %1055 = vmatprep.subr.bf16.mxu0 %v741
  %1056 = vmatpush2.bf16.msra.mxu0 %v740
  %1057 = vmatprep.subr.bf16.mxu0 %v739
  %1058 = vmatpush2.bf16.msra.mxu0 %v738
  %1059 = vmatprep.subr.bf16.mxu0 %v737
  %1060 = vmatpush2.bf16.msra.mxu0 %v736
  %1061 = vmatprep.subr.bf16.mxu0 %v735
  %1062 = vmatpush2.bf16.msra.mxu0 %v734
  %1063 = vmatprep.mubr.bf16.mxu0 %v41
  %1064 = vmatmul.mubr.bf16.gmra.mxu0 %v40
  %v1065 = vpop.f32.mrf.mxu0
  %v1066 = vadd.f32 %v1025, %v1065
  %v1067 = vpop.f32.mrf.mxu0
  %v1068 = vadd.f32 %v1027, %v1067
  %v1069 = vpop.f32.mrf.mxu0
  %v1070 = vpop.f32.mrf.mxu0
  %1071 = vdwg.mxu0
  %1072 = vmatprep.subr.bf16.mxu0 %v765
  %1073 = vmatpush1.bf16.msra.mxu0 %v764
  %1074 = vmatprep.subr.bf16.mxu0 %v763
  %1075 = vmatpush1.bf16.msra.mxu0 %v762
  %1076 = vmatprep.subr.bf16.mxu0 %v761
  %1077 = vmatpush1.bf16.msra.mxu0 %v760
  %1078 = vmatprep.subr.bf16.mxu0 %v759
  %1079 = vmatpush1.bf16.msra.mxu0 %v758
  %1080 = vmatprep.subr.bf16.mxu0 %v757
  %1081 = vmatpush1.bf16.msra.mxu0 %v756
  %1082 = vmatprep.subr.bf16.mxu0 %v755
  %1083 = vmatpush1.bf16.msra.mxu0 %v754
  %1084 = vmatprep.subr.bf16.mxu0 %v753
  %1085 = vmatpush1.bf16.msra.mxu0 %v752
  %1086 = vmatprep.subr.bf16.mxu0 %v751
  %1087 = vmatpush1.bf16.msra.mxu0 %v750
  %1088 = vmatprep.subr.bf16.mxu0 %v781
  %1089 = vmatpush2.bf16.msra.mxu0 %v780
  %1090 = vmatprep.subr.bf16.mxu0 %v779
  %1091 = vmatpush2.bf16.msra.mxu0 %v778
  %1092 = vmatprep.subr.bf16.mxu0 %v777
  %1093 = vmatpush2.bf16.msra.mxu0 %v776
  %1094 = vmatprep.subr.bf16.mxu0 %v775
  %1095 = vmatpush2.bf16.msra.mxu0 %v774
  %1096 = vmatprep.subr.bf16.mxu0 %v773
  %1097 = vmatpush2.bf16.msra.mxu0 %v772
  %1098 = vmatprep.subr.bf16.mxu0 %v771
  %1099 = vmatpush2.bf16.msra.mxu0 %v770
  %1100 = vmatprep.subr.bf16.mxu0 %v769
  %1101 = vmatpush2.bf16.msra.mxu0 %v768
  %1102 = vmatprep.subr.bf16.mxu0 %v767
  %1103 = vmatpush2.bf16.msra.mxu0 %v766
  %1104 = vmatprep.mubr.bf16.mxu0 %v43
  %1105 = vmatmul.mubr.bf16.gmra.mxu0 %v42
  %v1106 = vpop.f32.mrf.mxu0
  %v1107 = vadd.f32 %v1066, %v1106
  %v1108 = vpop.f32.mrf.mxu0
  %v1109 = vadd.f32 %v1068, %v1108
  %v1110 = vpop.f32.mrf.mxu0
  %v1111 = vpop.f32.mrf.mxu0
  %1112 = vdwg.mxu0
  %1113 = vmatprep.subr.bf16.mxu0 %v797
  %1114 = vmatpush1.bf16.msra.mxu0 %v796
  %1115 = vmatprep.subr.bf16.mxu0 %v795
  %1116 = vmatpush1.bf16.msra.mxu0 %v794
  %1117 = vmatprep.subr.bf16.mxu0 %v793
  %1118 = vmatpush1.bf16.msra.mxu0 %v792
  %1119 = vmatprep.subr.bf16.mxu0 %v791
  %1120 = vmatpush1.bf16.msra.mxu0 %v790
  %1121 = vmatprep.subr.bf16.mxu0 %v789
  %1122 = vmatpush1.bf16.msra.mxu0 %v788
  %1123 = vmatprep.subr.bf16.mxu0 %v787
  %1124 = vmatpush1.bf16.msra.mxu0 %v786
  %1125 = vmatprep.subr.bf16.mxu0 %v785
  %1126 = vmatpush1.bf16.msra.mxu0 %v784
  %1127 = vmatprep.subr.bf16.mxu0 %v783
  %1128 = vmatpush1.bf16.msra.mxu0 %v782
  %1129 = vmatprep.subr.bf16.mxu0 %v813
  %1130 = vmatpush2.bf16.msra.mxu0 %v812
  %1131 = vmatprep.subr.bf16.mxu0 %v811
  %1132 = vmatpush2.bf16.msra.mxu0 %v810
  %1133 = vmatprep.subr.bf16.mxu0 %v809
  %1134 = vmatpush2.bf16.msra.mxu0 %v808
  %1135 = vmatprep.subr.bf16.mxu0 %v807
  %1136 = vmatpush2.bf16.msra.mxu0 %v806
  %1137 = vmatprep.subr.bf16.mxu0 %v805
  %1138 = vmatpush2.bf16.msra.mxu0 %v804
  %1139 = vmatprep.subr.bf16.mxu0 %v803
  %1140 = vmatpush2.bf16.msra.mxu0 %v802
  %1141 = vmatprep.subr.bf16.mxu0 %v801
  %1142 = vmatpush2.bf16.msra.mxu0 %v800
  %1143 = vmatprep.subr.bf16.mxu0 %v799
  %1144 = vmatpush2.bf16.msra.mxu0 %v798
  %1145 = vmatprep.mubr.bf16.mxu0 %v45
  %1146 = vmatmul.mubr.bf16.gmra.mxu0 %v44
  %v1147 = vpop.f32.mrf.mxu0
  %v1148 = vadd.f32 %v1107, %v1147
  %v1149 = vpop.f32.mrf.mxu0
  %v1150 = vadd.f32 %v1109, %v1149
  %v1151 = vpop.f32.mrf.mxu0
  %v1152 = vpop.f32.mrf.mxu0
  %1153 = vdwg.mxu0
  %v1154 = vmax.f32 %v1148, 0.0
  %v1155 = vmax.f32 %v1150, 0.0
  %1156 = vst [vmem:[%s3] sm:$0xff] %v1154
  %1157 = vst [vmem:[%s3 + $0x8] sm:$0xff] %v1155
  // Predicated region
  $region14: #{visual_encoder_forward.7} parent=0 // pred_check
    _
  $region15: #{visual_encoder_forward.7} parent=0 // pred_check_branch
    %1159 = sbr.rel (0) target = $region17
  $region16: #{visual_encoder_forward.7} parent=0 // pred_region
    _
  $region17: #{visual_encoder_forward.7} parent=0 // pred_fallthru
    _
  // Predicated region
  $region18: #{visual_encoder_forward.7} parent=0 // pred_check
    _
  $region19: #{visual_encoder_forward.7} parent=0 // pred_check_branch
    %1161 = sbr.rel (0) target = $region21
  $region20: #{visual_encoder_forward.7} parent=0 // pred_region
    _
  $region21: #{visual_encoder_forward.7} parent=0 // pred_fallthru
    _

</llo_original>
